<compile_context>
chip_gen: v7x
topology: tpu7x:2x2x1
jax: 0.10.0
libtpu: 0.0.40
codegen_flags: <defaults>
</compile_context>

<pallas_src>
import functools

import jax
import jax.numpy as jnp
from jax.experimental import pallas as pl
from jax.experimental.pallas import tpu as pltpu

EPS = 1e-5  # nn.BatchNorm2d default eps


# ----------------------------------------------------------------------------
# Pallas kernels
# ----------------------------------------------------------------------------
def _make_conv_kernel(th, wd, cp, pair, fuse_affine_relu):
    """3x3 reflect-pad conv on one H-tile read straight from the unpadded
    activation.

    Refs per grid step (b, i):
      top_ref  : (1, 1,  wd, cp)        halo row above the tile
      main_ref : (1, th, wd, cp)        tile body
      bot_ref  : (1, 1,  wd, cp)        halo row below the tile
      [s_ref, b_ref : (1, cp) f32       BN1 scale/shift, fused conv2 only]
      w_ref    : (5, 2*cp, cp) bf16 (paired taps)  or  (9, cp, cp) bf16
      y_ref    : (1, th, wd, cp) bf16   raw conv output (pre-BN)
      stats_ref: (1, 2, cp) f32         per-tile [sum, sum_of_squares]
    """

    def kernel(*refs):
        if fuse_affine_relu:
            top_ref, main_ref, bot_ref, s_ref, b_ref, w_ref, y_ref, stats_ref = refs
        else:
            top_ref, main_ref, bot_ref, w_ref, y_ref, stats_ref = refs

        # (th+2, wd, cp) halo tile; leading-dim concat = vreg re-ordering only.
        xt = jnp.concatenate([top_ref[0], main_ref[0], bot_ref[0]], axis=0)
        if fuse_affine_relu:
            # BN1 affine + ReLU fused in (elementwise -> commutes with the
            # reflection / halo assembly).
            xt = jnp.maximum(xt.astype(jnp.float32) * s_ref[...] + b_ref[...], 0.0)
        # One bf16 cast for the whole tile (MXU operand dtype).
        xt = xt.astype(jnp.bfloat16)

        # Horizontal reflection folded into the three dx-shifted views:
        # padded cols = [x1, x0..x_{W-1}, x_{W-2}]; dx=1 view is the tile
        # itself, so only two sublane-shifted copies materialize per step.
        x_dx = (jnp.concatenate([xt[:, 1:2, :], xt[:, :wd - 1, :]], axis=1),
                xt,
                jnp.concatenate([xt[:, 1:, :], xt[:, wd - 2:wd - 1, :]], axis=1))

        def patch(k):
            dy, dx = divmod(k, 3)
            # Leading-dim slice of a wd-wide view -> the reshape to
            # (th*wd, cp) is layout-preserving (wd is the full row width).
            return x_dx[dx][dy:dy + th].reshape(th * wd, cp)

        # 3x3 conv = shifted-slice MXU matmuls, value-accumulated in f32
        # (single output store; lets v7x accumulate in the MRB).
        if pair:
            # K=2*cp contraction: taps (0,1)(2,3)(4,5)(6,7) paired, tap 8
            # single -> fills the 256-deep MXU on v6e/v7x when cp == 128.
            acc = jnp.dot(jnp.concatenate([patch(0), patch(1)], axis=-1),
                          w_ref[0], preferred_element_type=jnp.float32)
            for p in range(1, 4):
                acc = acc + jnp.dot(
                    jnp.concatenate([patch(2 * p), patch(2 * p + 1)], axis=-1),
                    w_ref[p], preferred_element_type=jnp.float32)
            acc = acc + jnp.dot(patch(8), w_ref[4, :cp, :],
                                preferred_element_type=jnp.float32)
        else:
            acc = jnp.dot(patch(0), w_ref[0], preferred_element_type=jnp.float32)
            for k in range(1, 9):
                acc = acc + jnp.dot(patch(k), w_ref[k],
                                    preferred_element_type=jnp.float32)

        y_ref[0] = acc.reshape(th, wd, cp).astype(y_ref.dtype)
        # Per-tile BatchNorm partial statistics from the f32 accumulator.
        stats_ref[0] = jnp.concatenate(
            [jnp.sum(acc, axis=0, keepdims=True),
             jnp.sum(acc * acc, axis=0, keepdims=True)], axis=0)

    return kernel


def _residual_kernel(y2_ref, x_ref, s_ref, b_ref, o_ref):
    """out = x + (y2 * scale2 + shift2)   (BN2 affine + residual skip)."""
    o_ref[...] = (x_ref[...]
                  + y2_ref[...].astype(jnp.float32) * s_ref[...] + b_ref[...])


# ----------------------------------------------------------------------------
# pallas_call wrappers
# ----------------------------------------------------------------------------
def _conv_pallas(x, wmat, scale, shift, th, cp, pair, fused, vmem_limit):
    n, h, wd, _ = x.shape
    nt = h // th
    kern = _make_conv_kernel(th, wd, cp, pair, fused)

    # Vertical reflection (pad=1) via the halo-row index maps; with th >= 2
    # the clamps are exact:  top(i=0) -> row 1,  bottom(i=nt-1) -> row h-2.
    top_spec = pl.BlockSpec(
        (1, 1, wd, cp), lambda b, i: (b, jnp.maximum(i * th - 1, 1), 0, 0))
    main_spec = pl.BlockSpec((1, th, wd, cp), lambda b, i: (b, i, 0, 0))
    bot_spec = pl.BlockSpec(
        (1, 1, wd, cp), lambda b, i: (b, jnp.minimum((i + 1) * th, h - 2), 0, 0))
    vec = pl.BlockSpec((1, cp), lambda b, i: (0, 0))
    wspec = pl.BlockSpec(wmat.shape, lambda b, i: (0, 0, 0))   # resident weights

    if fused:
        in_specs = [top_spec, main_spec, bot_spec, vec, vec, wspec]
        args = (x, x, x, scale, shift, wmat)
    else:
        in_specs = [top_spec, main_spec, bot_spec, wspec]
        args = (x, x, x, wmat)

    out_specs = (pl.BlockSpec((1, th, wd, cp), lambda b, i: (b, i, 0, 0)),
                 pl.BlockSpec((1, 2, cp), lambda b, i: (b * nt + i, 0, 0)))
    out_shape = (jax.ShapeDtypeStruct((n, h, wd, cp), jnp.bfloat16),
                 jax.ShapeDtypeStruct((n * nt, 2, cp), jnp.float32))

    return pl.pallas_call(
        kern,
        grid=(n, nt),
        in_specs=in_specs,
        out_specs=out_specs,
        out_shape=out_shape,
        compiler_params=pltpu.CompilerParams(
            dimension_semantics=("parallel", "parallel"),
            vmem_limit_bytes=vmem_limit),
    )(*args)


def _residual_pallas(y2, xres, scale, shift, rb, cp, vmem_limit):
    rows = y2.shape[0]
    blk = pl.BlockSpec((rb, cp), lambda r: (r, 0))
    vec = pl.BlockSpec((1, cp), lambda r: (0, 0))
    return pl.pallas_call(
        _residual_kernel,
        grid=(rows // rb,),
        in_specs=[blk, blk, vec, vec],
        out_specs=blk,
        out_shape=jax.ShapeDtypeStruct((rows, cp), jnp.float32),
        input_output_aliases={1: 0},      # residual input x aliases the output
        compiler_params=pltpu.CompilerParams(
            dimension_semantics=("parallel",),
            vmem_limit_bytes=vmem_limit),
    )(y2, xres, scale, shift)


# ----------------------------------------------------------------------------
# Wrapper glue: weight re-layout, BN stats fold, tile / budget selection.
# ----------------------------------------------------------------------------
def _round_up(v, m):
    return (v + m - 1) // m * m


def _divisors(v):
    ds, d = set(), 1
    while d * d <= v:
        if v % d == 0:
            ds.add(d)
            ds.add(v // d)
        d += 1
    return sorted(ds)


def _vmem_budget():
    """Generation-aware (per-step working-set budget, vmem_limit_bytes)."""
    try:
        cap = int(pltpu.get_tpu_info().vmem_capacity_bytes)
    except Exception:              # unknown runtime -> assume 64 MiB (v7x-safe)
        cap = 64 << 20
    if cap >= (100 << 20):         # v5e / v6e: 128 MiB VMEM
        return 14 << 20, 64 << 20
    return 7 << 20, 40 << 20       # v7x: 64 MiB per TensorCore


def _pick_h_tile(n, h, w, cp, budget):
    """Largest divisor of H (>=2) whose per-step working set fits the budget,
    preferring an even total tile count (v7x: two TensorCores)."""
    def est(t):
        return 40 * t * w * cp + 40 * cp * cp
    divs = [t for t in _divisors(h) if t >= 2] or [h]
    fit = [t for t in divs if est(t) <= budget] or [min(divs)]
    best = max(fit)
    if (n * (h // best)) % 2:
        even = [t for t in fit if (n * (h // t)) % 2 == 0 and 2 * t >= best]
        if even:
            best = max(even)
    return best


def _pick_row_block(rows, cp, budget):
    """Large lane/sublane-dense row block for the flat elementwise pass."""
    cap = max(8, budget // (24 * cp))
    ok = [d for d in _divisors(rows) if d % 8 == 0]
    fit = [d for d in ok if d <= cap]
    if fit:
        return max(fit)
    return min(ok) if ok else rows


def _conv_weight(w_oihw, cp, pair):
    """torch Conv2d weight (Cout, Cin, 3, 3) -> per-tap bf16 matrices.
    pair=False: (9, cp, cp), tap k = ky*3+kx.
    pair=True : (5, 2*cp, cp); entry p stacks taps (2p, 2p+1) along K, the
                last entry holds tap 8 in its top half (bottom half zero)."""
    co, ci, kh, kw = w_oihw.shape
    wm = jnp.transpose(w_oihw, (2, 3, 1, 0)).reshape(kh * kw, ci, co)
    wm = jnp.pad(wm, ((0, 0), (0, cp - ci), (0, cp - co)))
    if pair:
        mats = [jnp.concatenate([wm[2 * p], wm[2 * p + 1]], axis=0)
                for p in range(4)]
        mats.append(jnp.concatenate([wm[8], jnp.zeros((cp, cp), wm.dtype)],
                                    axis=0))
        wm = jnp.stack(mats, axis=0)
    return wm.astype(jnp.bfloat16)


def _scale_shift(stats, gamma_p, beta_p, count):
    """Fold training-mode BN into one (scale, shift) pair (f32).
    stats: (n_tiles, 2, cp) per-tile [sum, sum_sq] partials."""
    s = jnp.sum(stats, axis=0)                       # (2, cp)
    mean = s[0] / count
    # E[y^2] - mean^2 in f32; clamp guards cancellation for large means.
    var = jnp.maximum(s[1] / count - mean * mean, 0.0)
    scale = gamma_p * jax.lax.rsqrt(var + EPS)
    shift = beta_p - mean * scale
    return (scale.reshape(1, -1).astype(jnp.float32),
            shift.reshape(1, -1).astype(jnp.float32))


@functools.partial(jax.jit, static_argnames=("h_tile",))
def resnet_block_forward(x_nchw, params, h_tile=None):
    n, c, h, w = x_nchw.shape
    assert h >= 2 and w >= 2
    cp = _round_up(c, 128)                    # lane-dense channels
    budget, vmem_limit = _vmem_budget()
    th = h_tile if h_tile is not None else _pick_h_tile(n, h, w, cp, budget)
    assert h % th == 0 and th >= 2
    count = float(n * h * w)
    pair = (cp == 128)                        # K=256 tap pairing (v6e/v7x MXU)

    # TODO(synk): when this block is chained inside the full generator, keep
    # activations in padded NHWC between blocks and drop the per-call
    # NCHW<->NHWC transposes / channel pad+slice.
    x = jnp.transpose(x_nchw, (0, 2, 3, 1)).astype(jnp.float32)
    x = jnp.pad(x, ((0, 0), (0, 0), (0, 0), (0, cp - c)))

    w1 = _conv_weight(params["w1"], cp, pair)
    w2 = _conv_weight(params["w2"], cp, pair)
    g1 = jnp.pad(params["gamma1"], (0, cp - c))
    be1 = jnp.pad(params["beta1"], (0, cp - c))
    g2 = jnp.pad(params["gamma2"], (0, cp - c))
    be2 = jnp.pad(params["beta2"], (0, cp - c))
    # params["b1"]/["b2"] (conv biases) are intentionally unused: exact
    # no-ops under training-mode BatchNorm (would matter for eval-mode stats).

    # conv1 (f32 input read straight from HBM, bf16 output) + BN1 partials.
    y1, st1 = _conv_pallas(x, w1, None, None, th, cp, pair,
                           fused=False, vmem_limit=vmem_limit)
    scale1, shift1 = _scale_shift(st1, g1, be1, count)

    # conv2 with BN1 affine + ReLU fused on the halo tile + BN2 partials.
    y2, st2 = _conv_pallas(y1, w2, scale1, shift1, th, cp, pair,
                           fused=True, vmem_limit=vmem_limit)
    scale2, shift2 = _scale_shift(st2, g2, be2, count)

    # BN2 affine + residual add as a flat lane-dense elementwise pass.
    rows = n * h * w
    rb = _pick_row_block(rows, cp, budget)
    out2d = _residual_pallas(y2.reshape(rows, cp), x.reshape(rows, cp),
                             scale2, shift2, rb, cp, vmem_limit)

    out = out2d.reshape(n, h, w, cp)[..., :c]
    return jnp.transpose(out, (0, 3, 1, 2)).astype(x_nchw.dtype)


# ----------------------------------------------------------------------------
# Pure-JAX f32 reference (faithful to the PyTorch module, incl. conv biases)
# ----------------------------------------------------------------------------
def reference_forward(x_nchw, params):
    x = jnp.transpose(x_nchw, (0, 2, 3, 1)).astype(jnp.float32)

    def conv(z, w_oihw, b):
        zp = jnp.pad(z, ((0, 0), (1, 1), (1, 1), (0, 0)), mode="reflect")
        w_hwio = jnp.transpose(w_oihw, (2, 3, 1, 0))
        y = jax.lax.conv_general_dilated(
            zp, w_hwio, (1, 1), "VALID",
            dimension_numbers=("NHWC", "HWIO", "NHWC"),
            precision=jax.lax.Precision.HIGHEST)
        return y + b

    def bn(y, g, be):
        m = jnp.mean(y, axis=(0, 1, 2), keepdims=True)
        v = jnp.mean(jnp.square(y - m), axis=(0, 1, 2), keepdims=True)
        return g * (y - m) * jax.lax.rsqrt(v + EPS) + be

    hid = jax.nn.relu(bn(conv(x, params["w1"], params["b1"]),
                         params["gamma1"], params["beta1"]))
    hid = bn(conv(hid, params["w2"], params["b2"]),
             params["gamma2"], params["beta2"])
    return jnp.transpose(x + hid, (0, 3, 1, 2))


# ----------------------------------------------------------------------------
def make_params(key, dim):
    ks = jax.random.split(key, 8)
    wscale = 1.0 / jnp.sqrt(9.0 * dim)
    return {
        "w1": jax.random.normal(ks[0], (dim, dim, 3, 3), jnp.float32) * wscale,
        "b1": jax.random.normal(ks[1], (dim,), jnp.float32) * 0.1,
        "w2": jax.random.normal(ks[2], (dim, dim, 3, 3), jnp.float32) * wscale,
        "b2": jax.random.normal(ks[3], (dim,), jnp.float32) * 0.1,
        "gamma1": 1.0 + 0.1 * jax.random.normal(ks[4], (dim,), jnp.float32),
        "beta1": 0.1 * jax.random.normal(ks[5], (dim,), jnp.float32),
        "gamma2": 1.0 + 0.1 * jax.random.normal(ks[6], (dim,), jnp.float32),
        "beta2": 0.1 * jax.random.normal(ks[7], (dim,), jnp.float32),
    }


if __name__ == "__main__":
    key = jax.random.PRNGKey(0)
    k_x, k_p = jax.random.split(key)

    N, C, H, W = 2, 4, 16, 16   # dim = 4
    x = jax.random.normal(k_x, (N, C, H, W), jnp.float32)
    params = make_params(k_p, C)

    ref = reference_forward(x, params)

    # Tiled path: h_tile=8 -> grid (2, 2), exercising the halo-row index maps.
    out_tiled = jax.block_until_ready(resnet_block_forward(x, params, h_tile=8))
    # Auto path: generation-aware tile pick (single tile per image here).
    out_auto = jax.block_until_ready(resnet_block_forward(x, params))

    assert out_tiled.shape == x.shape and out_auto.shape == x.shape
    # Loose tolerance vs. the f32/HIGHEST reference: bf16 MXU operands and
    # bf16 inter-kernel activations with f32 accumulation / statistics.
    assert jnp.allclose(out_tiled, ref, atol=5e-2, rtol=5e-2)
    assert jnp.allclose(out_auto, ref, atol=5e-2, rtol=5e-2)

    print("KERNEL_OK")
</pallas_src>

<mosaic_0001>
module attributes {stable_mosaic.version = 11 : i64} {
  func.func @kernel(%arg0: i32, %arg1: i32, %arg2: memref<1x1x16x128xf32, #tpu.memory_space<vmem>>, %arg3: memref<1x8x16x128xf32, #tpu.memory_space<vmem>>, %arg4: memref<1x1x16x128xf32, #tpu.memory_space<vmem>>, %arg5: memref<5x256x128xbf16, #tpu.memory_space<vmem>>, %arg6: memref<1x8x16x128xbf16, #tpu.memory_space<vmem>>, %arg7: memref<1x2x128xf32, #tpu.memory_space<vmem>>) attributes {dimension_semantics = [#tpu.dimension_semantics<parallel>, #tpu.dimension_semantics<parallel>], iteration_bounds = array<i64: 2, 2>, scalar_prefetch = 0 : i64, scratch_operands = 0 : i64, tpu.core_type = #tpu.core_type<tc>, window_params = [{transform_indices = @transform_0, window_bounds = array<i64: 1, 1, 16, 128>}, {transform_indices = @transform_1, window_bounds = array<i64: 1, 8, 16, 128>}, {transform_indices = @transform_2, window_bounds = array<i64: 1, 1, 16, 128>}, {pipeline_mode = #tpu.pipeline_mode<synchronous>, transform_indices = @transform_3, window_bounds = array<i64: 5, 256, 128>}, {transform_indices = @transform_4, window_bounds = array<i64: 1, 8, 16, 128>}, {transform_indices = @transform_5, window_bounds = array<i64: 1, 2, 128>}]} {
    %c0 = arith.constant 0 : index
    %c0_0 = arith.constant 0 : index
    %c0_1 = arith.constant 0 : index
    %c0_2 = arith.constant 0 : index
    %0 = vector.load %arg2[%c0, %c0_0, %c0_1, %c0_2] : memref<1x1x16x128xf32, #tpu.memory_space<vmem>>, vector<1x1x16x128xf32>
    %1 = vector.shape_cast %0 : vector<1x1x16x128xf32> to vector<1x16x128xf32>
    %c0_3 = arith.constant 0 : index
    %c0_4 = arith.constant 0 : index
    %c0_5 = arith.constant 0 : index
    %c0_6 = arith.constant 0 : index
    %2 = vector.load %arg3[%c0_3, %c0_4, %c0_5, %c0_6] : memref<1x8x16x128xf32, #tpu.memory_space<vmem>>, vector<1x8x16x128xf32>
    %3 = vector.shape_cast %2 : vector<1x8x16x128xf32> to vector<8x16x128xf32>
    %c0_7 = arith.constant 0 : index
    %c0_8 = arith.constant 0 : index
    %c0_9 = arith.constant 0 : index
    %c0_10 = arith.constant 0 : index
    %4 = vector.load %arg4[%c0_7, %c0_8, %c0_9, %c0_10] : memref<1x1x16x128xf32, #tpu.memory_space<vmem>>, vector<1x1x16x128xf32>
    %5 = vector.shape_cast %4 : vector<1x1x16x128xf32> to vector<1x16x128xf32>
    %6 = tpu.concatenate %1, %3, %5 in 0 : vector<1x16x128xf32>, vector<8x16x128xf32>, vector<1x16x128xf32> -> vector<10x16x128xf32>
    %7 = arith.truncf %6 : vector<10x16x128xf32> to vector<10x16x128xbf16>
    %8 = vector.extract_strided_slice %7 {offsets = [0, 1, 0], sizes = [10, 1, 128], strides = [1, 1, 1]} : vector<10x16x128xbf16> to vector<10x1x128xbf16>
    %9 = vector.extract_strided_slice %7 {offsets = [0, 0, 0], sizes = [10, 15, 128], strides = [1, 1, 1]} : vector<10x16x128xbf16> to vector<10x15x128xbf16>
    %10 = tpu.concatenate %8, %9 in 1 : vector<10x1x128xbf16>, vector<10x15x128xbf16> -> vector<10x16x128xbf16>
    %11 = vector.extract_strided_slice %7 {offsets = [0, 1, 0], sizes = [10, 15, 128], strides = [1, 1, 1]} : vector<10x16x128xbf16> to vector<10x15x128xbf16>
    %12 = vector.extract_strided_slice %7 {offsets = [0, 14, 0], sizes = [10, 1, 128], strides = [1, 1, 1]} : vector<10x16x128xbf16> to vector<10x1x128xbf16>
    %13 = tpu.concatenate %11, %12 in 1 : vector<10x15x128xbf16>, vector<10x1x128xbf16> -> vector<10x16x128xbf16>
    %14 = vector.extract_strided_slice %10 {offsets = [0, 0, 0], sizes = [8, 16, 128], strides = [1, 1, 1]} : vector<10x16x128xbf16> to vector<8x16x128xbf16>
    %15 = vector.shape_cast %14 : vector<8x16x128xbf16> to vector<128x128xbf16>
    %16 = vector.extract_strided_slice %7 {offsets = [0, 0, 0], sizes = [8, 16, 128], strides = [1, 1, 1]} : vector<10x16x128xbf16> to vector<8x16x128xbf16>
    %17 = vector.shape_cast %16 : vector<8x16x128xbf16> to vector<128x128xbf16>
    %18 = tpu.concatenate %15, %17 in 1 : vector<128x128xbf16>, vector<128x128xbf16> -> vector<128x256xbf16>
    %c0_11 = arith.constant 0 : index
    %c0_12 = arith.constant 0 : index
    %c0_13 = arith.constant 0 : index
    %19 = vector.load %arg5[%c0_11, %c0_12, %c0_13] : memref<5x256x128xbf16, #tpu.memory_space<vmem>>, vector<1x256x128xbf16>
    %20 = vector.shape_cast %19 : vector<1x256x128xbf16> to vector<256x128xbf16>
    %cst = arith.constant dense<0.000000e+00> : vector<128x128xf32>
    %21 = tpu.matmul %18, %20, %cst {dimension_numbers = #tpu.dot_dimension_numbers<[1], [0], [0], [1], [0, 0, 1, 1], [], []>} : vector<128x256xbf16>, vector<256x128xbf16>, vector<128x128xf32> -> vector<128x128xf32>
    %22 = vector.extract_strided_slice %13 {offsets = [0, 0, 0], sizes = [8, 16, 128], strides = [1, 1, 1]} : vector<10x16x128xbf16> to vector<8x16x128xbf16>
    %23 = vector.shape_cast %22 : vector<8x16x128xbf16> to vector<128x128xbf16>
    %24 = vector.extract_strided_slice %10 {offsets = [1, 0, 0], sizes = [8, 16, 128], strides = [1, 1, 1]} : vector<10x16x128xbf16> to vector<8x16x128xbf16>
    %25 = vector.shape_cast %24 : vector<8x16x128xbf16> to vector<128x128xbf16>
    %26 = tpu.concatenate %23, %25 in 1 : vector<128x128xbf16>, vector<128x128xbf16> -> vector<128x256xbf16>
    %c1 = arith.constant 1 : index
    %c0_14 = arith.constant 0 : index
    %c0_15 = arith.constant 0 : index
    %27 = vector.load %arg5[%c1, %c0_14, %c0_15] : memref<5x256x128xbf16, #tpu.memory_space<vmem>>, vector<1x256x128xbf16>
    %28 = vector.shape_cast %27 : vector<1x256x128xbf16> to vector<256x128xbf16>
    %cst_16 = arith.constant dense<0.000000e+00> : vector<128x128xf32>
    %29 = tpu.matmul %26, %28, %cst_16 {dimension_numbers = #tpu.dot_dimension_numbers<[1], [0], [0], [1], [0, 0, 1, 1], [], []>} : vector<128x256xbf16>, vector<256x128xbf16>, vector<128x128xf32> -> vector<128x128xf32>
    %30 = arith.addf %21, %29 : vector<128x128xf32>
    %31 = vector.extract_strided_slice %7 {offsets = [1, 0, 0], sizes = [8, 16, 128], strides = [1, 1, 1]} : vector<10x16x128xbf16> to vector<8x16x128xbf16>
    %32 = vector.shape_cast %31 : vector<8x16x128xbf16> to vector<128x128xbf16>
    %33 = vector.extract_strided_slice %13 {offsets = [1, 0, 0], sizes = [8, 16, 128], strides = [1, 1, 1]} : vector<10x16x128xbf16> to vector<8x16x128xbf16>
    %34 = vector.shape_cast %33 : vector<8x16x128xbf16> to vector<128x128xbf16>
    %35 = tpu.concatenate %32, %34 in 1 : vector<128x128xbf16>, vector<128x128xbf16> -> vector<128x256xbf16>
    %c2 = arith.constant 2 : index
    %c0_17 = arith.constant 0 : index
    %c0_18 = arith.constant 0 : index
    %36 = vector.load %arg5[%c2, %c0_17, %c0_18] : memref<5x256x128xbf16, #tpu.memory_space<vmem>>, vector<1x256x128xbf16>
    %37 = vector.shape_cast %36 : vector<1x256x128xbf16> to vector<256x128xbf16>
    %cst_19 = arith.constant dense<0.000000e+00> : vector<128x128xf32>
    %38 = tpu.matmul %35, %37, %cst_19 {dimension_numbers = #tpu.dot_dimension_numbers<[1], [0], [0], [1], [0, 0, 1, 1], [], []>} : vector<128x256xbf16>, vector<256x128xbf16>, vector<128x128xf32> -> vector<128x128xf32>
    %39 = arith.addf %30, %38 : vector<128x128xf32>
    %40 = vector.extract_strided_slice %10 {offsets = [2, 0, 0], sizes = [8, 16, 128], strides = [1, 1, 1]} : vector<10x16x128xbf16> to vector<8x16x128xbf16>
    %41 = vector.shape_cast %40 : vector<8x16x128xbf16> to vector<128x128xbf16>
    %42 = vector.extract_strided_slice %7 {offsets = [2, 0, 0], sizes = [8, 16, 128], strides = [1, 1, 1]} : vector<10x16x128xbf16> to vector<8x16x128xbf16>
    %43 = vector.shape_cast %42 : vector<8x16x128xbf16> to vector<128x128xbf16>
    %44 = tpu.concatenate %41, %43 in 1 : vector<128x128xbf16>, vector<128x128xbf16> -> vector<128x256xbf16>
    %c3 = arith.constant 3 : index
    %c0_20 = arith.constant 0 : index
    %c0_21 = arith.constant 0 : index
    %45 = vector.load %arg5[%c3, %c0_20, %c0_21] : memref<5x256x128xbf16, #tpu.memory_space<vmem>>, vector<1x256x128xbf16>
    %46 = vector.shape_cast %45 : vector<1x256x128xbf16> to vector<256x128xbf16>
    %cst_22 = arith.constant dense<0.000000e+00> : vector<128x128xf32>
    %47 = tpu.matmul %44, %46, %cst_22 {dimension_numbers = #tpu.dot_dimension_numbers<[1], [0], [0], [1], [0, 0, 1, 1], [], []>} : vector<128x256xbf16>, vector<256x128xbf16>, vector<128x128xf32> -> vector<128x128xf32>
    %48 = arith.addf %39, %47 : vector<128x128xf32>
    %49 = vector.extract_strided_slice %13 {offsets = [2, 0, 0], sizes = [8, 16, 128], strides = [1, 1, 1]} : vector<10x16x128xbf16> to vector<8x16x128xbf16>
    %50 = vector.shape_cast %49 : vector<8x16x128xbf16> to vector<128x128xbf16>
    %c4 = arith.constant 4 : index
    %c0_23 = arith.constant 0 : index
    %c0_24 = arith.constant 0 : index
    %51 = vector.load %arg5[%c4, %c0_23, %c0_24] : memref<5x256x128xbf16, #tpu.memory_space<vmem>>, vector<1x128x128xbf16>
    %52 = vector.shape_cast %51 : vector<1x128x128xbf16> to vector<128x128xbf16>
    %cst_25 = arith.constant dense<0.000000e+00> : vector<128x128xf32>
    %53 = tpu.matmul %50, %52, %cst_25 {dimension_numbers = #tpu.dot_dimension_numbers<[1], [0], [0], [1], [0, 0, 1, 1], [], []>} : vector<128x128xbf16>, vector<128x128xbf16>, vector<128x128xf32> -> vector<128x128xf32>
    %54 = arith.addf %48, %53 : vector<128x128xf32>
    %55 = vector.shape_cast %54 : vector<128x128xf32> to vector<8x16x128xf32>
    %56 = arith.truncf %55 : vector<8x16x128xf32> to vector<8x16x128xbf16>
    %c0_26 = arith.constant 0 : index
    %c0_27 = arith.constant 0 : index
    %c0_28 = arith.constant 0 : index
    %c0_29 = arith.constant 0 : index
    %57 = vector.load %arg6[%c0_26, %c0_27, %c0_28, %c0_29] : memref<1x8x16x128xbf16, #tpu.memory_space<vmem>>, vector<1x8x16x128xbf16>
    %58 = vector.shape_cast %57 : vector<1x8x16x128xbf16> to vector<8x16x128xbf16>
    %59 = vector.shape_cast %56 : vector<8x16x128xbf16> to vector<1x8x16x128xbf16>
    tpu.vector_store %arg6[%c0_26, %c0_27, %c0_28, %c0_29], %59 {strides = array<i32>} : memref<1x8x16x128xbf16, #tpu.memory_space<vmem>>, vector<1x8x16x128xbf16>,
    %cst_30 = arith.constant dense<0.000000e+00> : vector<128xf32>
    %60 = vector.multi_reduction <add>, %54, %cst_30 [0] : vector<128x128xf32> to vector<128xf32>
    %61 = vector.shape_cast %60 : vector<128xf32> to vector<1x128xf32>
    %62 = arith.mulf %54, %54 : vector<128x128xf32>
    %cst_31 = arith.constant dense<0.000000e+00> : vector<128xf32>
    %63 = vector.multi_reduction <add>, %62, %cst_31 [0] : vector<128x128xf32> to vector<128xf32>
    %64 = vector.shape_cast %63 : vector<128xf32> to vector<1x128xf32>
    %65 = tpu.concatenate %61, %64 in 0 : vector<1x128xf32>, vector<1x128xf32> -> vector<2x128xf32>
    %c0_32 = arith.constant 0 : index
    %c0_33 = arith.constant 0 : index
    %c0_34 = arith.constant 0 : index
    %66 = vector.load %arg7[%c0_32, %c0_33, %c0_34] : memref<1x2x128xf32, #tpu.memory_space<vmem>>, vector<1x2x128xf32>
    %67 = vector.shape_cast %66 : vector<1x2x128xf32> to vector<2x128xf32>
    %68 = vector.shape_cast %65 : vector<2x128xf32> to vector<1x2x128xf32>
    tpu.vector_store %arg7[%c0_32, %c0_33, %c0_34], %68 {strides = array<i32>} : memref<1x2x128xf32, #tpu.memory_space<vmem>>, vector<1x2x128xf32>,
    return
  }
  func.func @transform_0(%arg0: i32, %arg1: i32) -> (i32, i32, i32, i32) {
    %c8_i32 = arith.constant 8 : i32
    %0 = arith.muli %arg1, %c8_i32 : i32
    %c1_i32 = arith.constant 1 : i32
    %1 = arith.subi %0, %c1_i32 : i32
    %c1_i32_0 = arith.constant 1 : i32
    %2 = arith.maxsi %1, %c1_i32_0 : i32
    %c0_i32 = arith.constant 0 : i32
    %c0_i32_1 = arith.constant 0 : i32
    %c0_i32_2 = arith.constant 0 : i32
    return %arg0, %2, %c0_i32, %c0_i32_1 : i32, i32, i32, i32
  }
  func.func @transform_1(%arg0: i32, %arg1: i32) -> (i32, i32, i32, i32) {
    %c0_i32 = arith.constant 0 : i32
    %c0_i32_0 = arith.constant 0 : i32
    %c0_i32_1 = arith.constant 0 : i32
    return %arg0, %arg1, %c0_i32, %c0_i32_0 : i32, i32, i32, i32
  }
  func.func @transform_2(%arg0: i32, %arg1: i32) -> (i32, i32, i32, i32) {
    %c1_i32 = arith.constant 1 : i32
    %0 = arith.addi %arg1, %c1_i32 : i32
    %c8_i32 = arith.constant 8 : i32
    %1 = arith.muli %0, %c8_i32 : i32
    %c14_i32 = arith.constant 14 : i32
    %2 = arith.minsi %1, %c14_i32 : i32
    %c0_i32 = arith.constant 0 : i32
    %c0_i32_0 = arith.constant 0 : i32
    %c0_i32_1 = arith.constant 0 : i32
    return %arg0, %2, %c0_i32, %c0_i32_0 : i32, i32, i32, i32
  }
  func.func @transform_3(%arg0: i32, %arg1: i32) -> (i32, i32, i32) {
    %c0_i32 = arith.constant 0 : i32
    %c0_i32_0 = arith.constant 0 : i32
    %c0_i32_1 = arith.constant 0 : i32
    %c0_i32_2 = arith.constant 0 : i32
    return %c0_i32, %c0_i32_0, %c0_i32_1 : i32, i32, i32
  }
  func.func @transform_4(%arg0: i32, %arg1: i32) -> (i32, i32, i32, i32) {
    %c0_i32 = arith.constant 0 : i32
    %c0_i32_0 = arith.constant 0 : i32
    %c0_i32_1 = arith.constant 0 : i32
    return %arg0, %arg1, %c0_i32, %c0_i32_0 : i32, i32, i32, i32
  }
  func.func @transform_5(%arg0: i32, %arg1: i32) -> (i32, i32, i32) {
    %c2_i32 = arith.constant 2 : i32
    %0 = arith.muli %arg0, %c2_i32 : i32
    %1 = arith.addi %0, %arg1 : i32
    %c0_i32 = arith.constant 0 : i32
    %c0_i32_0 = arith.constant 0 : i32
    %c0_i32_1 = arith.constant 0 : i32
    return %1, %c0_i32, %c0_i32_0 : i32, i32, i32
  }
}

module attributes {stable_mosaic.version = 11 : i64} {
  func.func @_residual_kernel(%arg0: i32, %arg1: memref<512x128xbf16, #tpu.memory_space<vmem>>, %arg2: memref<512x128xf32, #tpu.memory_space<vmem>>, %arg3: memref<1x128xf32, #tpu.memory_space<vmem>>, %arg4: memref<1x128xf32, #tpu.memory_space<vmem>>, %arg5: memref<512x128xf32, #tpu.memory_space<vmem>>) attributes {dimension_semantics = [#tpu.dimension_semantics<parallel>], iteration_bounds = array<i64: 1>, scalar_prefetch = 0 : i64, scratch_operands = 0 : i64, tpu.core_type = #tpu.core_type<tc>, window_params = [{transform_indices = @transform_0, window_bounds = array<i64: 512, 128>}, {transform_indices = @transform_1, window_bounds = array<i64: 512, 128>}, {pipeline_mode = #tpu.pipeline_mode<synchronous>, transform_indices = @transform_2, window_bounds = array<i64: 1, 128>}, {pipeline_mode = #tpu.pipeline_mode<synchronous>, transform_indices = @transform_3, window_bounds = array<i64: 1, 128>}, {transform_indices = @transform_4, window_bounds = array<i64: 512, 128>}]} {
    %c0 = arith.constant 0 : index
    %c0_0 = arith.constant 0 : index
    %0 = vector.load %arg2[%c0, %c0_0] : memref<512x128xf32, #tpu.memory_space<vmem>>, vector<512x128xf32>
    %c0_1 = arith.constant 0 : index
    %c0_2 = arith.constant 0 : index
    %1 = vector.load %arg1[%c0_1, %c0_2] : memref<512x128xbf16, #tpu.memory_space<vmem>>, vector<512x128xbf16>
    %2 = arith.extf %1 : vector<512x128xbf16> to vector<512x128xf32>
    %c0_3 = arith.constant 0 : index
    %c0_4 = arith.constant 0 : index
    %3 = vector.load %arg3[%c0_3, %c0_4] : memref<1x128xf32, #tpu.memory_space<vmem>>, vector<1x128xf32>
    %4 = vector.broadcast %3 : vector<1x128xf32> to vector<512x128xf32>
    %5 = arith.mulf %2, %4 : vector<512x128xf32>
    %6 = arith.addf %0, %5 : vector<512x128xf32>
    %c0_5 = arith.constant 0 : index
    %c0_6 = arith.constant 0 : index
    %7 = vector.load %arg4[%c0_5, %c0_6] : memref<1x128xf32, #tpu.memory_space<vmem>>, vector<1x128xf32>
    %8 = vector.broadcast %7 : vector<1x128xf32> to vector<512x128xf32>
    %9 = arith.addf %6, %8 : vector<512x128xf32>
    %c0_7 = arith.constant 0 : index
    %c0_8 = arith.constant 0 : index
    %10 = vector.load %arg5[%c0_7, %c0_8] : memref<512x128xf32, #tpu.memory_space<vmem>>, vector<512x128xf32>
    tpu.vector_store %arg5[%c0_7, %c0_8], %9 {strides = array<i32>} : memref<512x128xf32, #tpu.memory_space<vmem>>, vector<512x128xf32>,
    return
  }
  func.func @transform_0(%arg0: i32) -> (i32, i32) {
    %c0_i32 = arith.constant 0 : i32
    %c0_i32_0 = arith.constant 0 : i32
    return %arg0, %c0_i32 : i32, i32
  }
  func.func @transform_1(%arg0: i32) -> (i32, i32) {
    %c0_i32 = arith.constant 0 : i32
    %c0_i32_0 = arith.constant 0 : i32
    return %arg0, %c0_i32 : i32, i32
  }
  func.func @transform_2(%arg0: i32) -> (i32, i32) {
    %c0_i32 = arith.constant 0 : i32
    %c0_i32_0 = arith.constant 0 : i32
    %c0_i32_1 = arith.constant 0 : i32
    return %c0_i32, %c0_i32_0 : i32, i32
  }
  func.func @transform_3(%arg0: i32) -> (i32, i32) {
    %c0_i32 = arith.constant 0 : i32
    %c0_i32_0 = arith.constant 0 : i32
    %c0_i32_1 = arith.constant 0 : i32
    return %c0_i32, %c0_i32_0 : i32, i32
  }
  func.func @transform_4(%arg0: i32) -> (i32, i32) {
    %c0_i32 = arith.constant 0 : i32
    %c0_i32_0 = arith.constant 0 : i32
    return %arg0, %c0_i32 : i32, i32
  }
}

module attributes {stable_mosaic.version = 11 : i64} {
  func.func @kernel(%arg0: i32, %arg1: i32, %arg2: memref<1x1x16x128xbf16, #tpu.memory_space<vmem>>, %arg3: memref<1x8x16x128xbf16, #tpu.memory_space<vmem>>, %arg4: memref<1x1x16x128xbf16, #tpu.memory_space<vmem>>, %arg5: memref<1x128xf32, #tpu.memory_space<vmem>>, %arg6: memref<1x128xf32, #tpu.memory_space<vmem>>, %arg7: memref<5x256x128xbf16, #tpu.memory_space<vmem>>, %arg8: memref<1x8x16x128xbf16, #tpu.memory_space<vmem>>, %arg9: memref<1x2x128xf32, #tpu.memory_space<vmem>>) attributes {dimension_semantics = [#tpu.dimension_semantics<parallel>, #tpu.dimension_semantics<parallel>], iteration_bounds = array<i64: 2, 2>, scalar_prefetch = 0 : i64, scratch_operands = 0 : i64, tpu.core_type = #tpu.core_type<tc>, window_params = [{transform_indices = @transform_0, window_bounds = array<i64: 1, 1, 16, 128>}, {transform_indices = @transform_1, window_bounds = array<i64: 1, 8, 16, 128>}, {transform_indices = @transform_2, window_bounds = array<i64: 1, 1, 16, 128>}, {pipeline_mode = #tpu.pipeline_mode<synchronous>, transform_indices = @transform_3, window_bounds = array<i64: 1, 128>}, {pipeline_mode = #tpu.pipeline_mode<synchronous>, transform_indices = @transform_4, window_bounds = array<i64: 1, 128>}, {pipeline_mode = #tpu.pipeline_mode<synchronous>, transform_indices = @transform_5, window_bounds = array<i64: 5, 256, 128>}, {transform_indices = @transform_6, window_bounds = array<i64: 1, 8, 16, 128>}, {transform_indices = @transform_7, window_bounds = array<i64: 1, 2, 128>}]} {
    %c0 = arith.constant 0 : index
    %c0_0 = arith.constant 0 : index
    %c0_1 = arith.constant 0 : index
    %c0_2 = arith.constant 0 : index
    %0 = vector.load %arg2[%c0, %c0_0, %c0_1, %c0_2] : memref<1x1x16x128xbf16, #tpu.memory_space<vmem>>, vector<1x1x16x128xbf16>
    %1 = vector.shape_cast %0 : vector<1x1x16x128xbf16> to vector<1x16x128xbf16>
    %c0_3 = arith.constant 0 : index
    %c0_4 = arith.constant 0 : index
    %c0_5 = arith.constant 0 : index
    %c0_6 = arith.constant 0 : index
    %2 = vector.load %arg3[%c0_3, %c0_4, %c0_5, %c0_6] : memref<1x8x16x128xbf16, #tpu.memory_space<vmem>>, vector<1x8x16x128xbf16>
    %3 = vector.shape_cast %2 : vector<1x8x16x128xbf16> to vector<8x16x128xbf16>
    %c0_7 = arith.constant 0 : index
    %c0_8 = arith.constant 0 : index
    %c0_9 = arith.constant 0 : index
    %c0_10 = arith.constant 0 : index
    %4 = vector.load %arg4[%c0_7, %c0_8, %c0_9, %c0_10] : memref<1x1x16x128xbf16, #tpu.memory_space<vmem>>, vector<1x1x16x128xbf16>
    %5 = vector.shape_cast %4 : vector<1x1x16x128xbf16> to vector<1x16x128xbf16>
    %6 = tpu.concatenate %1, %3, %5 in 0 : vector<1x16x128xbf16>, vector<8x16x128xbf16>, vector<1x16x128xbf16> -> vector<10x16x128xbf16>
    %7 = arith.extf %6 : vector<10x16x128xbf16> to vector<10x16x128xf32>
    %c0_11 = arith.constant 0 : index
    %c0_12 = arith.constant 0 : index
    %8 = vector.load %arg5[%c0_11, %c0_12] : memref<1x128xf32, #tpu.memory_space<vmem>>, vector<1x128xf32>
    %9 = vector.shape_cast %8 : vector<1x128xf32> to vector<1x1x128xf32>
    %10 = vector.broadcast %9 : vector<1x1x128xf32> to vector<10x16x128xf32>
    %11 = arith.mulf %7, %10 : vector<10x16x128xf32>
    %c0_13 = arith.constant 0 : index
    %c0_14 = arith.constant 0 : index
    %12 = vector.load %arg6[%c0_13, %c0_14] : memref<1x128xf32, #tpu.memory_space<vmem>>, vector<1x128xf32>
    %13 = vector.shape_cast %12 : vector<1x128xf32> to vector<1x1x128xf32>
    %14 = vector.broadcast %13 : vector<1x1x128xf32> to vector<10x16x128xf32>
    %15 = arith.addf %11, %14 : vector<10x16x128xf32>
    %cst = arith.constant 0.000000e+00 : f32
    %16 = vector.broadcast %cst : f32 to vector<10x16x128xf32>
    %17 = arith.maximumf %15, %16 : vector<10x16x128xf32>
    %18 = arith.truncf %17 : vector<10x16x128xf32> to vector<10x16x128xbf16>
    %19 = vector.extract_strided_slice %18 {offsets = [0, 1, 0], sizes = [10, 1, 128], strides = [1, 1, 1]} : vector<10x16x128xbf16> to vector<10x1x128xbf16>
    %20 = vector.extract_strided_slice %18 {offsets = [0, 0, 0], sizes = [10, 15, 128], strides = [1, 1, 1]} : vector<10x16x128xbf16> to vector<10x15x128xbf16>
    %21 = tpu.concatenate %19, %20 in 1 : vector<10x1x128xbf16>, vector<10x15x128xbf16> -> vector<10x16x128xbf16>
    %22 = vector.extract_strided_slice %18 {offsets = [0, 1, 0], sizes = [10, 15, 128], strides = [1, 1, 1]} : vector<10x16x128xbf16> to vector<10x15x128xbf16>
    %23 = vector.extract_strided_slice %18 {offsets = [0, 14, 0], sizes = [10, 1, 128], strides = [1, 1, 1]} : vector<10x16x128xbf16> to vector<10x1x128xbf16>
    %24 = tpu.concatenate %22, %23 in 1 : vector<10x15x128xbf16>, vector<10x1x128xbf16> -> vector<10x16x128xbf16>
    %25 = vector.extract_strided_slice %21 {offsets = [0, 0, 0], sizes = [8, 16, 128], strides = [1, 1, 1]} : vector<10x16x128xbf16> to vector<8x16x128xbf16>
    %26 = vector.shape_cast %25 : vector<8x16x128xbf16> to vector<128x128xbf16>
    %27 = vector.extract_strided_slice %18 {offsets = [0, 0, 0], sizes = [8, 16, 128], strides = [1, 1, 1]} : vector<10x16x128xbf16> to vector<8x16x128xbf16>
    %28 = vector.shape_cast %27 : vector<8x16x128xbf16> to vector<128x128xbf16>
    %29 = tpu.concatenate %26, %28 in 1 : vector<128x128xbf16>, vector<128x128xbf16> -> vector<128x256xbf16>
    %c0_15 = arith.constant 0 : index
    %c0_16 = arith.constant 0 : index
    %c0_17 = arith.constant 0 : index
    %30 = vector.load %arg7[%c0_15, %c0_16, %c0_17] : memref<5x256x128xbf16, #tpu.memory_space<vmem>>, vector<1x256x128xbf16>
    %31 = vector.shape_cast %30 : vector<1x256x128xbf16> to vector<256x128xbf16>
    %cst_18 = arith.constant dense<0.000000e+00> : vector<128x128xf32>
    %32 = tpu.matmul %29, %31, %cst_18 {dimension_numbers = #tpu.dot_dimension_numbers<[1], [0], [0], [1], [0, 0, 1, 1], [], []>} : vector<128x256xbf16>, vector<256x128xbf16>, vector<128x128xf32> -> vector<128x128xf32>
    %33 = vector.extract_strided_slice %24 {offsets = [0, 0, 0], sizes = [8, 16, 128], strides = [1, 1, 1]} : vector<10x16x128xbf16> to vector<8x16x128xbf16>
    %34 = vector.shape_cast %33 : vector<8x16x128xbf16> to vector<128x128xbf16>
    %35 = vector.extract_strided_slice %21 {offsets = [1, 0, 0], sizes = [8, 16, 128], strides = [1, 1, 1]} : vector<10x16x128xbf16> to vector<8x16x128xbf16>
    %36 = vector.shape_cast %35 : vector<8x16x128xbf16> to vector<128x128xbf16>
    %37 = tpu.concatenate %34, %36 in 1 : vector<128x128xbf16>, vector<128x128xbf16> -> vector<128x256xbf16>
    %c1 = arith.constant 1 : index
    %c0_19 = arith.constant 0 : index
    %c0_20 = arith.constant 0 : index
    %38 = vector.load %arg7[%c1, %c0_19, %c0_20] : memref<5x256x128xbf16, #tpu.memory_space<vmem>>, vector<1x256x128xbf16>
    %39 = vector.shape_cast %38 : vector<1x256x128xbf16> to vector<256x128xbf16>
    %cst_21 = arith.constant dense<0.000000e+00> : vector<128x128xf32>
    %40 = tpu.matmul %37, %39, %cst_21 {dimension_numbers = #tpu.dot_dimension_numbers<[1], [0], [0], [1], [0, 0, 1, 1], [], []>} : vector<128x256xbf16>, vector<256x128xbf16>, vector<128x128xf32> -> vector<128x128xf32>
    %41 = arith.addf %32, %40 : vector<128x128xf32>
    %42 = vector.extract_strided_slice %18 {offsets = [1, 0, 0], sizes = [8, 16, 128], strides = [1, 1, 1]} : vector<10x16x128xbf16> to vector<8x16x128xbf16>
    %43 = vector.shape_cast %42 : vector<8x16x128xbf16> to vector<128x128xbf16>
    %44 = vector.extract_strided_slice %24 {offsets = [1, 0, 0], sizes = [8, 16, 128], strides = [1, 1, 1]} : vector<10x16x128xbf16> to vector<8x16x128xbf16>
    %45 = vector.shape_cast %44 : vector<8x16x128xbf16> to vector<128x128xbf16>
    %46 = tpu.concatenate %43, %45 in 1 : vector<128x128xbf16>, vector<128x128xbf16> -> vector<128x256xbf16>
    %c2 = arith.constant 2 : index
    %c0_22 = arith.constant 0 : index
    %c0_23 = arith.constant 0 : index
    %47 = vector.load %arg7[%c2, %c0_22, %c0_23] : memref<5x256x128xbf16, #tpu.memory_space<vmem>>, vector<1x256x128xbf16>
    %48 = vector.shape_cast %47 : vector<1x256x128xbf16> to vector<256x128xbf16>
    %cst_24 = arith.constant dense<0.000000e+00> : vector<128x128xf32>
    %49 = tpu.matmul %46, %48, %cst_24 {dimension_numbers = #tpu.dot_dimension_numbers<[1], [0], [0], [1], [0, 0, 1, 1], [], []>} : vector<128x256xbf16>, vector<256x128xbf16>, vector<128x128xf32> -> vector<128x128xf32>
    %50 = arith.addf %41, %49 : vector<128x128xf32>
    %51 = vector.extract_strided_slice %21 {offsets = [2, 0, 0], sizes = [8, 16, 128], strides = [1, 1, 1]} : vector<10x16x128xbf16> to vector<8x16x128xbf16>
    %52 = vector.shape_cast %51 : vector<8x16x128xbf16> to vector<128x128xbf16>
    %53 = vector.extract_strided_slice %18 {offsets = [2, 0, 0], sizes = [8, 16, 128], strides = [1, 1, 1]} : vector<10x16x128xbf16> to vector<8x16x128xbf16>
    %54 = vector.shape_cast %53 : vector<8x16x128xbf16> to vector<128x128xbf16>
    %55 = tpu.concatenate %52, %54 in 1 : vector<128x128xbf16>, vector<128x128xbf16> -> vector<128x256xbf16>
    %c3 = arith.constant 3 : index
    %c0_25 = arith.constant 0 : index
    %c0_26 = arith.constant 0 : index
    %56 = vector.load %arg7[%c3, %c0_25, %c0_26] : memref<5x256x128xbf16, #tpu.memory_space<vmem>>, vector<1x256x128xbf16>
    %57 = vector.shape_cast %56 : vector<1x256x128xbf16> to vector<256x128xbf16>
    %cst_27 = arith.constant dense<0.000000e+00> : vector<128x128xf32>
    %58 = tpu.matmul %55, %57, %cst_27 {dimension_numbers = #tpu.dot_dimension_numbers<[1], [0], [0], [1], [0, 0, 1, 1], [], []>} : vector<128x256xbf16>, vector<256x128xbf16>, vector<128x128xf32> -> vector<128x128xf32>
    %59 = arith.addf %50, %58 : vector<128x128xf32>
    %60 = vector.extract_strided_slice %24 {offsets = [2, 0, 0], sizes = [8, 16, 128], strides = [1, 1, 1]} : vector<10x16x128xbf16> to vector<8x16x128xbf16>
    %61 = vector.shape_cast %60 : vector<8x16x128xbf16> to vector<128x128xbf16>
    %c4 = arith.constant 4 : index
    %c0_28 = arith.constant 0 : index
    %c0_29 = arith.constant 0 : index
    %62 = vector.load %arg7[%c4, %c0_28, %c0_29] : memref<5x256x128xbf16, #tpu.memory_space<vmem>>, vector<1x128x128xbf16>
    %63 = vector.shape_cast %62 : vector<1x128x128xbf16> to vector<128x128xbf16>
    %cst_30 = arith.constant dense<0.000000e+00> : vector<128x128xf32>
    %64 = tpu.matmul %61, %63, %cst_30 {dimension_numbers = #tpu.dot_dimension_numbers<[1], [0], [0], [1], [0, 0, 1, 1], [], []>} : vector<128x128xbf16>, vector<128x128xbf16>, vector<128x128xf32> -> vector<128x128xf32>
    %65 = arith.addf %59, %64 : vector<128x128xf32>
    %66 = vector.shape_cast %65 : vector<128x128xf32> to vector<8x16x128xf32>
    %67 = arith.truncf %66 : vector<8x16x128xf32> to vector<8x16x128xbf16>
    %c0_31 = arith.constant 0 : index
    %c0_32 = arith.constant 0 : index
    %c0_33 = arith.constant 0 : index
    %c0_34 = arith.constant 0 : index
    %68 = vector.load %arg8[%c0_31, %c0_32, %c0_33, %c0_34] : memref<1x8x16x128xbf16, #tpu.memory_space<vmem>>, vector<1x8x16x128xbf16>
    %69 = vector.shape_cast %68 : vector<1x8x16x128xbf16> to vector<8x16x128xbf16>
    %70 = vector.shape_cast %67 : vector<8x16x128xbf16> to vector<1x8x16x128xbf16>
    tpu.vector_store %arg8[%c0_31, %c0_32, %c0_33, %c0_34], %70 {strides = array<i32>} : memref<1x8x16x128xbf16, #tpu.memory_space<vmem>>, vector<1x8x16x128xbf16>,
    %cst_35 = arith.constant dense<0.000000e+00> : vector<128xf32>
    %71 = vector.multi_reduction <add>, %65, %cst_35 [0] : vector<128x128xf32> to vector<128xf32>
    %72 = vector.shape_cast %71 : vector<128xf32> to vector<1x128xf32>
    %73 = arith.mulf %65, %65 : vector<128x128xf32>
    %cst_36 = arith.constant dense<0.000000e+00> : vector<128xf32>
    %74 = vector.multi_reduction <add>, %73, %cst_36 [0] : vector<128x128xf32> to vector<128xf32>
    %75 = vector.shape_cast %74 : vector<128xf32> to vector<1x128xf32>
    %76 = tpu.concatenate %72, %75 in 0 : vector<1x128xf32>, vector<1x128xf32> -> vector<2x128xf32>
    %c0_37 = arith.constant 0 : index
    %c0_38 = arith.constant 0 : index
    %c0_39 = arith.constant 0 : index
    %77 = vector.load %arg9[%c0_37, %c0_38, %c0_39] : memref<1x2x128xf32, #tpu.memory_space<vmem>>, vector<1x2x128xf32>
    %78 = vector.shape_cast %77 : vector<1x2x128xf32> to vector<2x128xf32>
    %79 = vector.shape_cast %76 : vector<2x128xf32> to vector<1x2x128xf32>
    tpu.vector_store %arg9[%c0_37, %c0_38, %c0_39], %79 {strides = array<i32>} : memref<1x2x128xf32, #tpu.memory_space<vmem>>, vector<1x2x128xf32>,
    return
  }
  func.func @transform_0(%arg0: i32, %arg1: i32) -> (i32, i32, i32, i32) {
    %c8_i32 = arith.constant 8 : i32
    %0 = arith.muli %arg1, %c8_i32 : i32
    %c1_i32 = arith.constant 1 : i32
    %1 = arith.subi %0, %c1_i32 : i32
    %c1_i32_0 = arith.constant 1 : i32
    %2 = arith.maxsi %1, %c1_i32_0 : i32
    %c0_i32 = arith.constant 0 : i32
    %c0_i32_1 = arith.constant 0 : i32
    %c0_i32_2 = arith.constant 0 : i32
    return %arg0, %2, %c0_i32, %c0_i32_1 : i32, i32, i32, i32
  }
  func.func @transform_1(%arg0: i32, %arg1: i32) -> (i32, i32, i32, i32) {
    %c0_i32 = arith.constant 0 : i32
    %c0_i32_0 = arith.constant 0 : i32
    %c0_i32_1 = arith.constant 0 : i32
    return %arg0, %arg1, %c0_i32, %c0_i32_0 : i32, i32, i32, i32
  }
  func.func @transform_2(%arg0: i32, %arg1: i32) -> (i32, i32, i32, i32) {
    %c1_i32 = arith.constant 1 : i32
    %0 = arith.addi %arg1, %c1_i32 : i32
    %c8_i32 = arith.constant 8 : i32
    %1 = arith.muli %0, %c8_i32 : i32
    %c14_i32 = arith.constant 14 : i32
    %2 = arith.minsi %1, %c14_i32 : i32
    %c0_i32 = arith.constant 0 : i32
    %c0_i32_0 = arith.constant 0 : i32
    %c0_i32_1 = arith.constant 0 : i32
    return %arg0, %2, %c0_i32, %c0_i32_0 : i32, i32, i32, i32
  }
  func.func @transform_3(%arg0: i32, %arg1: i32) -> (i32, i32) {
    %c0_i32 = arith.constant 0 : i32
    %c0_i32_0 = arith.constant 0 : i32
    %c0_i32_1 = arith.constant 0 : i32
    return %c0_i32, %c0_i32_0 : i32, i32
  }
  func.func @transform_4(%arg0: i32, %arg1: i32) -> (i32, i32) {
    %c0_i32 = arith.constant 0 : i32
    %c0_i32_0 = arith.constant 0 : i32
    %c0_i32_1 = arith.constant 0 : i32
    return %c0_i32, %c0_i32_0 : i32, i32
  }
  func.func @transform_5(%arg0: i32, %arg1: i32) -> (i32, i32, i32) {
    %c0_i32 = arith.constant 0 : i32
    %c0_i32_0 = arith.constant 0 : i32
    %c0_i32_1 = arith.constant 0 : i32
    %c0_i32_2 = arith.constant 0 : i32
    return %c0_i32, %c0_i32_0, %c0_i32_1 : i32, i32, i32
  }
  func.func @transform_6(%arg0: i32, %arg1: i32) -> (i32, i32, i32, i32) {
    %c0_i32 = arith.constant 0 : i32
    %c0_i32_0 = arith.constant 0 : i32
    %c0_i32_1 = arith.constant 0 : i32
    return %arg0, %arg1, %c0_i32, %c0_i32_0 : i32, i32, i32, i32
  }
  func.func @transform_7(%arg0: i32, %arg1: i32) -> (i32, i32, i32) {
    %c2_i32 = arith.constant 2 : i32
    %0 = arith.muli %arg0, %c2_i32 : i32
    %1 = arith.addi %0, %arg1 : i32
    %c0_i32 = arith.constant 0 : i32
    %c0_i32_0 = arith.constant 0 : i32
    %c0_i32_1 = arith.constant 0 : i32
    return %1, %c0_i32, %c0_i32_0 : i32, i32, i32
  }
}

</mosaic_0001>

<llo_original>
// kernel: resnet_block_forward.5
$region0: #{resnet_block_forward.5}
  #allocation0 [shape = 'u32[]', space=smem, size = 0x4, offset = 0x4, fixed_abs, tag = 'smem constant byte address 0x4 - core index']
  #allocation1 [shape = 'u32[144,128]{1,0:T(1,128)}', space=vmem, size = 0x12000, scoped, tag = 'internal scratch']
  %s0 = inlined_call_operand.vmem [shape: bf16[512,128], index: 0, kind: input, shape index: {}]
  %s1 = inlined_call_operand.vmem [shape: f32[512,128], index: 1, kind: input, shape index: {}, may-alias: {1,4}]
  %s2 = inlined_call_operand.vmem [shape: f32[1,128], index: 2, kind: input, shape index: {}]
  %s3 = inlined_call_operand.vmem [shape: f32[1,128], index: 3, kind: input, shape index: {}]
  %s4 = inlined_call_operand.vmem [shape: f32[512,128], index: 4, kind: output, shape index: {}, may-alias: {1,4}]
  %s5 = sld [smem:[#allocation0]]
  $region26: #{resnet_block_forward.5} parent=0
    _
  %s7 = ssub.s32 1, %s5
  %s8 = scalar_select 0, %s7, %s5
  // Predicated region
  $region2: #{resnet_block_forward.5} parent=0 // pred_check
    _
  $region3: #{resnet_block_forward.5} parent=0 // pred_check_branch
    %10 = sbr.rel (0) target = $region5
  $region4: #{resnet_block_forward.5} parent=0 // pred_region
    _
  $region5: #{resnet_block_forward.5} parent=0 // pred_fallthru
    _
  // Predicated region
  $region6: #{resnet_block_forward.5} parent=0 // pred_check
    _
  $region7: #{resnet_block_forward.5} parent=0 // pred_check_branch
    %12 = sbr.rel (0) target = $region9
  $region8: #{resnet_block_forward.5} parent=0 // pred_region
    _
  $region9: #{resnet_block_forward.5} parent=0 // pred_fallthru
    _
  // Predicated region
  $region10: #{resnet_block_forward.5} parent=0 // pred_check
    _
  $region11: #{resnet_block_forward.5} parent=0 // pred_check_branch
    %14 = sbr.rel (0) target = $region13
  $region12: #{resnet_block_forward.5} parent=0 // pred_region
    _
  $region13: #{resnet_block_forward.5} parent=0 // pred_fallthru
    _
  // Predicated region
  $region14: #{resnet_block_forward.5} parent=0 // pred_check
    _
  $region15: #{resnet_block_forward.5} parent=0 // pred_check_branch
    %16 = sbr.rel (0) target = $region17
  $region16: #{resnet_block_forward.5} parent=0 // pred_region
    _
  $region17: #{resnet_block_forward.5} parent=0 // pred_fallthru
    _
  %v17 = vld [vmem:[%s1] sm:$0xff]
  %v18 = vld [vmem:[%s1 + $0x8] sm:$0xff]
  %v19 = vld [vmem:[%s1 + $0x10] sm:$0xff]
  %v20 = vld [vmem:[%s1 + $0x18] sm:$0xff]
  %v21 = vld [vmem:[%s1 + $0x20] sm:$0xff]
  %v22 = vld [vmem:[%s1 + $0x28] sm:$0xff]
  %v23 = vld [vmem:[%s1 + $0x30] sm:$0xff]
  %v24 = vld [vmem:[%s1 + $0x38] sm:$0xff]
  %v25 = vld [vmem:[%s1 + $0x40] sm:$0xff]
  %v26 = vld [vmem:[%s1 + $0x48] sm:$0xff]
  %v27 = vld [vmem:[%s1 + $0x50] sm:$0xff]
  %v28 = vld [vmem:[%s1 + $0x58] sm:$0xff]
  %v29 = vld [vmem:[%s1 + $0x60] sm:$0xff]
  %v30 = vld [vmem:[%s1 + $0x68] sm:$0xff]
  %v31 = vld [vmem:[%s1 + $0x70] sm:$0xff]
  %v32 = vld [vmem:[%s1 + $0x78] sm:$0xff]
  %v33 = vld [vmem:[%s1 + $0x80] sm:$0xff]
  %v34 = vld [vmem:[%s1 + $0x88] sm:$0xff]
  %v35 = vld [vmem:[%s1 + $0x90] sm:$0xff]
  %v36 = vld [vmem:[%s1 + $0x98] sm:$0xff]
  %v37 = vld [vmem:[%s1 + $0xa0] sm:$0xff]
  %v38 = vld [vmem:[%s1 + $0xa8] sm:$0xff]
  %v39 = vld [vmem:[%s1 + $0xb0] sm:$0xff]
  %v40 = vld [vmem:[%s1 + $0xb8] sm:$0xff]
  %v41 = vld [vmem:[%s1 + $0xc0] sm:$0xff]
  %v42 = vld [vmem:[%s1 + $0xc8] sm:$0xff]
  %v43 = vld [vmem:[%s1 + $0xd0] sm:$0xff]
  %v44 = vld [vmem:[%s1 + $0xd8] sm:$0xff]
  %v45 = vld [vmem:[%s1 + $0xe0] sm:$0xff]
  %v46 = vld [vmem:[%s1 + $0xe8] sm:$0xff]
  %v47 = vld [vmem:[%s1 + $0xf0] sm:$0xff]
  %v48 = vld [vmem:[%s1 + $0xf8] sm:$0xff]
  %v49 = vld [vmem:[%s1 + $0x100] sm:$0xff]
  %v50 = vld [vmem:[%s1 + $0x108] sm:$0xff]
  %v51 = vld [vmem:[%s1 + $0x110] sm:$0xff]
  %v52 = vld [vmem:[%s1 + $0x118] sm:$0xff]
  %v53 = vld [vmem:[%s1 + $0x120] sm:$0xff]
  %v54 = vld [vmem:[%s1 + $0x128] sm:$0xff]
  %v55 = vld [vmem:[%s1 + $0x130] sm:$0xff]
  %v56 = vld [vmem:[%s1 + $0x138] sm:$0xff]
  %v57 = vld [vmem:[%s1 + $0x140] sm:$0xff]
  %v58 = vld [vmem:[%s1 + $0x148] sm:$0xff]
  %v59 = vld [vmem:[%s1 + $0x150] sm:$0xff]
  %v60 = vld [vmem:[%s1 + $0x158] sm:$0xff]
  %v61 = vld [vmem:[%s1 + $0x160] sm:$0xff]
  %v62 = vld [vmem:[%s1 + $0x168] sm:$0xff]
  %v63 = vld [vmem:[%s1 + $0x170] sm:$0xff]
  %v64 = vld [vmem:[%s1 + $0x178] sm:$0xff]
  %v65 = vld [vmem:[%s1 + $0x180] sm:$0xff]
  %v66 = vld [vmem:[%s1 + $0x188] sm:$0xff]
  %v67 = vld [vmem:[%s1 + $0x190] sm:$0xff]
  %v68 = vld [vmem:[%s1 + $0x198] sm:$0xff]
  %v69 = vld [vmem:[%s1 + $0x1a0] sm:$0xff]
  %v70 = vld [vmem:[%s1 + $0x1a8] sm:$0xff]
  %v71 = vld [vmem:[%s1 + $0x1b0] sm:$0xff]
  %v72 = vld [vmem:[%s1 + $0x1b8] sm:$0xff]
  %v73 = vld [vmem:[%s1 + $0x1c0] sm:$0xff]
  %v74 = vld [vmem:[%s1 + $0x1c8] sm:$0xff]
  %v75 = vld [vmem:[%s1 + $0x1d0] sm:$0xff]
  %v76 = vld [vmem:[%s1 + $0x1d8] sm:$0xff]
  %v77 = vld [vmem:[%s1 + $0x1e0] sm:$0xff]
  %v78 = vld [vmem:[%s1 + $0x1e8] sm:$0xff]
  %v79 = vld [vmem:[%s1 + $0x1f0] sm:$0xff]
  %v80 = vld [vmem:[%s1 + $0x1f8] sm:$0xff]
  %v81 = vld [vmem:[%s0] sm:$0xf]
  %v82 = vld [vmem:[%s0 + $0x4] sm:$0xf]
  %v83 = vld [vmem:[%s0 + $0x8] sm:$0xf]
  %v84 = vld [vmem:[%s0 + $0xc] sm:$0xf]
  %v85 = vld [vmem:[%s0 + $0x10] sm:$0xf]
  %v86 = vld [vmem:[%s0 + $0x14] sm:$0xf]
  %v87 = vld [vmem:[%s0 + $0x18] sm:$0xf]
  %v88 = vld [vmem:[%s0 + $0x1c] sm:$0xf]
  %v89 = vld [vmem:[%s0 + $0x20] sm:$0xf]
  %v90 = vld [vmem:[%s0 + $0x24] sm:$0xf]
  %v91 = vld [vmem:[%s0 + $0x28] sm:$0xf]
  %v92 = vld [vmem:[%s0 + $0x2c] sm:$0xf]
  %v93 = vld [vmem:[%s0 + $0x30] sm:$0xf]
  %v94 = vld [vmem:[%s0 + $0x34] sm:$0xf]
  %v95 = vld [vmem:[%s0 + $0x38] sm:$0xf]
  %v96 = vld [vmem:[%s0 + $0x3c] sm:$0xf]
  %v97 = vld [vmem:[%s0 + $0x40] sm:$0xf]
  %v98 = vld [vmem:[%s0 + $0x44] sm:$0xf]
  %v99 = vld [vmem:[%s0 + $0x48] sm:$0xf]
  %v100 = vld [vmem:[%s0 + $0x4c] sm:$0xf]
  %v101 = vld [vmem:[%s0 + $0x50] sm:$0xf]
  %v102 = vld [vmem:[%s0 + $0x54] sm:$0xf]
  %v103 = vld [vmem:[%s0 + $0x58] sm:$0xf]
  %v104 = vld [vmem:[%s0 + $0x5c] sm:$0xf]
  %v105 = vld [vmem:[%s0 + $0x60] sm:$0xf]
  %v106 = vld [vmem:[%s0 + $0x64] sm:$0xf]
  %v107 = vld [vmem:[%s0 + $0x68] sm:$0xf]
  %v108 = vld [vmem:[%s0 + $0x6c] sm:$0xf]
  %v109 = vld [vmem:[%s0 + $0x70] sm:$0xf]
  %v110 = vld [vmem:[%s0 + $0x74] sm:$0xf]
  %v111 = vld [vmem:[%s0 + $0x78] sm:$0xf]
  %v112 = vld [vmem:[%s0 + $0x7c] sm:$0xf]
  %v113 = vld [vmem:[%s0 + $0x80] sm:$0xf]
  %v114 = vld [vmem:[%s0 + $0x84] sm:$0xf]
  %v115 = vld [vmem:[%s0 + $0x88] sm:$0xf]
  %v116 = vld [vmem:[%s0 + $0x8c] sm:$0xf]
  %v117 = vld [vmem:[%s0 + $0x90] sm:$0xf]
  %v118 = vld [vmem:[%s0 + $0x94] sm:$0xf]
  %v119 = vld [vmem:[%s0 + $0x98] sm:$0xf]
  %v120 = vld [vmem:[%s0 + $0x9c] sm:$0xf]
  %v121 = vld [vmem:[%s0 + $0xa0] sm:$0xf]
  %v122 = vld [vmem:[%s0 + $0xa4] sm:$0xf]
  %v123 = vld [vmem:[%s0 + $0xa8] sm:$0xf]
  %v124 = vld [vmem:[%s0 + $0xac] sm:$0xf]
  %v125 = vld [vmem:[%s0 + $0xb0] sm:$0xf]
  %v126 = vld [vmem:[%s0 + $0xb4] sm:$0xf]
  %v127 = vld [vmem:[%s0 + $0xb8] sm:$0xf]
  %v128 = vld [vmem:[%s0 + $0xbc] sm:$0xf]
  %v129 = vld [vmem:[%s0 + $0xc0] sm:$0xf]
  %v130 = vld [vmem:[%s0 + $0xc4] sm:$0xf]
  %v131 = vld [vmem:[%s0 + $0xc8] sm:$0xf]
  %v132 = vld [vmem:[%s0 + $0xcc] sm:$0xf]
  %v133 = vld [vmem:[%s0 + $0xd0] sm:$0xf]
  %v134 = vld [vmem:[%s0 + $0xd4] sm:$0xf]
  %v135 = vld [vmem:[%s0 + $0xd8] sm:$0xf]
  %v136 = vld [vmem:[%s0 + $0xdc] sm:$0xf]
  %v137 = vld [vmem:[%s0 + $0xe0] sm:$0xf]
  %v138 = vld [vmem:[%s0 + $0xe4] sm:$0xf]
  %v139 = vld [vmem:[%s0 + $0xe8] sm:$0xf]
  %v140 = vld [vmem:[%s0 + $0xec] sm:$0xf]
  %v141 = vld [vmem:[%s0 + $0xf0] sm:$0xf]
  %v142 = vld [vmem:[%s0 + $0xf4] sm:$0xf]
  %v143 = vld [vmem:[%s0 + $0xf8] sm:$0xf]
  %v144 = vld [vmem:[%s0 + $0xfc] sm:$0xf]
  %v145 = vunpack.c.l.bf16 %v81
  %v146 = vunpack.c.l.bf16 %v82
  %v147 = vunpack.c.l.bf16 %v83
  %v148 = vunpack.c.l.bf16 %v84
  %v149 = vunpack.c.l.bf16 %v85
  %v150 = vunpack.c.l.bf16 %v86
  %v151 = vunpack.c.l.bf16 %v87
  %v152 = vunpack.c.l.bf16 %v88
  %v153 = vunpack.c.l.bf16 %v89
  %v154 = vunpack.c.l.bf16 %v90
  %v155 = vunpack.c.l.bf16 %v91
  %v156 = vunpack.c.l.bf16 %v92
  %v157 = vunpack.c.l.bf16 %v93
  %v158 = vunpack.c.l.bf16 %v94
  %v159 = vunpack.c.l.bf16 %v95
  %v160 = vunpack.c.l.bf16 %v96
  %v161 = vunpack.c.l.bf16 %v97
  %v162 = vunpack.c.l.bf16 %v98
  %v163 = vunpack.c.l.bf16 %v99
  %v164 = vunpack.c.l.bf16 %v100
  %v165 = vunpack.c.l.bf16 %v101
  %v166 = vunpack.c.l.bf16 %v102
  %v167 = vunpack.c.l.bf16 %v103
  %v168 = vunpack.c.l.bf16 %v104
  %v169 = vunpack.c.l.bf16 %v105
  %v170 = vunpack.c.l.bf16 %v106
  %v171 = vunpack.c.l.bf16 %v107
  %v172 = vunpack.c.l.bf16 %v108
  %v173 = vunpack.c.l.bf16 %v109
  %v174 = vunpack.c.l.bf16 %v110
  %v175 = vunpack.c.l.bf16 %v111
  %v176 = vunpack.c.l.bf16 %v112
  %v177 = vunpack.c.l.bf16 %v113
  %v178 = vunpack.c.l.bf16 %v114
  %v179 = vunpack.c.l.bf16 %v115
  %v180 = vunpack.c.l.bf16 %v116
  %v181 = vunpack.c.l.bf16 %v117
  %v182 = vunpack.c.l.bf16 %v118
  %v183 = vunpack.c.l.bf16 %v119
  %v184 = vunpack.c.l.bf16 %v120
  %v185 = vunpack.c.l.bf16 %v121
  %v186 = vunpack.c.l.bf16 %v122
  %v187 = vunpack.c.l.bf16 %v123
  %v188 = vunpack.c.l.bf16 %v124
  %v189 = vunpack.c.l.bf16 %v125
  %v190 = vunpack.c.l.bf16 %v126
  %v191 = vunpack.c.l.bf16 %v127
  %v192 = vunpack.c.l.bf16 %v128
  %v193 = vunpack.c.l.bf16 %v129
  %v194 = vunpack.c.l.bf16 %v130
  %v195 = vunpack.c.l.bf16 %v131
  %v196 = vunpack.c.l.bf16 %v132
  %v197 = vunpack.c.l.bf16 %v133
  %v198 = vunpack.c.l.bf16 %v134
  %v199 = vunpack.c.l.bf16 %v135
  %v200 = vunpack.c.l.bf16 %v136
  %v201 = vunpack.c.l.bf16 %v137
  %v202 = vunpack.c.l.bf16 %v138
  %v203 = vunpack.c.l.bf16 %v139
  %v204 = vunpack.c.l.bf16 %v140
  %v205 = vunpack.c.l.bf16 %v141
  %v206 = vunpack.c.l.bf16 %v142
  %v207 = vunpack.c.l.bf16 %v143
  %v208 = vunpack.c.l.bf16 %v144
  %v209 = vld [vmem:[%s2] sm:$0x1]
  %v211 = vlaneseq
  %v212 = vshrl.u32 %v211, 7
  %v213 = vsub.s32 0, %v212
  %v214 = vrot.slane %v209, %v213
  %v216 = vmul.f32 %v145, %v214
  %v217 = vmul.f32 %v146, %v214
  %v218 = vmul.f32 %v147, %v214
  %v219 = vmul.f32 %v148, %v214
  %v220 = vmul.f32 %v149, %v214
  %v221 = vmul.f32 %v150, %v214
  %v222 = vmul.f32 %v151, %v214
  %v223 = vmul.f32 %v152, %v214
  %v224 = vmul.f32 %v153, %v214
  %v225 = vmul.f32 %v154, %v214
  %v226 = vmul.f32 %v155, %v214
  %v227 = vmul.f32 %v156, %v214
  %v228 = vmul.f32 %v157, %v214
  %v229 = vmul.f32 %v158, %v214
  %v230 = vmul.f32 %v159, %v214
  %v231 = vmul.f32 %v160, %v214
  %v232 = vmul.f32 %v161, %v214
  %v233 = vmul.f32 %v162, %v214
  %v234 = vmul.f32 %v163, %v214
  %v235 = vmul.f32 %v164, %v214
  %v236 = vmul.f32 %v165, %v214
  %v237 = vmul.f32 %v166, %v214
  %v238 = vmul.f32 %v167, %v214
  %v239 = vmul.f32 %v168, %v214
  %v240 = vmul.f32 %v169, %v214
  %v241 = vmul.f32 %v170, %v214
  %v242 = vmul.f32 %v171, %v214
  %v243 = vmul.f32 %v172, %v214
  %v244 = vmul.f32 %v173, %v214
  %v245 = vmul.f32 %v174, %v214
  %v246 = vmul.f32 %v175, %v214
  %v247 = vmul.f32 %v176, %v214
  %v248 = vmul.f32 %v177, %v214
  %v249 = vmul.f32 %v178, %v214
  %v250 = vmul.f32 %v179, %v214
  %v251 = vmul.f32 %v180, %v214
  %v252 = vmul.f32 %v181, %v214
  %v253 = vmul.f32 %v182, %v214
  %v254 = vmul.f32 %v183, %v214
  %v255 = vmul.f32 %v184, %v214
  %v256 = vmul.f32 %v185, %v214
  %v257 = vmul.f32 %v186, %v214
  %v258 = vmul.f32 %v187, %v214
  %v259 = vmul.f32 %v188, %v214
  %v260 = vmul.f32 %v189, %v214
  %v261 = vmul.f32 %v190, %v214
  %v262 = vmul.f32 %v191, %v214
  %v263 = vmul.f32 %v192, %v214
  %v264 = vmul.f32 %v193, %v214
  %v265 = vmul.f32 %v194, %v214
  %v266 = vmul.f32 %v195, %v214
  %v267 = vmul.f32 %v196, %v214
  %v268 = vmul.f32 %v197, %v214
  %v269 = vmul.f32 %v198, %v214
  %v270 = vmul.f32 %v199, %v214
  %v271 = vmul.f32 %v200, %v214
  %v272 = vmul.f32 %v201, %v214
  %v273 = vmul.f32 %v202, %v214
  %v274 = vmul.f32 %v203, %v214
  %v275 = vmul.f32 %v204, %v214
  %v276 = vmul.f32 %v205, %v214
  %v277 = vmul.f32 %v206, %v214
  %v278 = vmul.f32 %v207, %v214
  %v279 = vmul.f32 %v208, %v214
  %v280 = vadd.f32 %v17, %v216
  %v281 = vadd.f32 %v18, %v217
  %v282 = vadd.f32 %v19, %v218
  %v283 = vadd.f32 %v20, %v219
  %v284 = vadd.f32 %v21, %v220
  %v285 = vadd.f32 %v22, %v221
  %v286 = vadd.f32 %v23, %v222
  %v287 = vadd.f32 %v24, %v223
  %v288 = vadd.f32 %v25, %v224
  %v289 = vadd.f32 %v26, %v225
  %v290 = vadd.f32 %v27, %v226
  %v291 = vadd.f32 %v28, %v227
  %v292 = vadd.f32 %v29, %v228
  %v293 = vadd.f32 %v30, %v229
  %v294 = vadd.f32 %v31, %v230
  %v295 = vadd.f32 %v32, %v231
  %v296 = vadd.f32 %v33, %v232
  %v297 = vadd.f32 %v34, %v233
  %v298 = vadd.f32 %v35, %v234
  %v299 = vadd.f32 %v36, %v235
  %v300 = vadd.f32 %v37, %v236
  %v301 = vadd.f32 %v38, %v237
  %v302 = vadd.f32 %v39, %v238
  %v303 = vadd.f32 %v40, %v239
  %v304 = vadd.f32 %v41, %v240
  %v305 = vadd.f32 %v42, %v241
  %v306 = vadd.f32 %v43, %v242
  %v307 = vadd.f32 %v44, %v243
  %v308 = vadd.f32 %v45, %v244
  %v309 = vadd.f32 %v46, %v245
  %v310 = vadd.f32 %v47, %v246
  %v311 = vadd.f32 %v48, %v247
  %v312 = vadd.f32 %v49, %v248
  %v313 = vadd.f32 %v50, %v249
  %v314 = vadd.f32 %v51, %v250
  %v315 = vadd.f32 %v52, %v251
  %v316 = vadd.f32 %v53, %v252
  %v317 = vadd.f32 %v54, %v253
  %v318 = vadd.f32 %v55, %v254
  %v319 = vadd.f32 %v56, %v255
  %v320 = vadd.f32 %v57, %v256
  %v321 = vadd.f32 %v58, %v257
  %v322 = vadd.f32 %v59, %v258
  %v323 = vadd.f32 %v60, %v259
  %v324 = vadd.f32 %v61, %v260
  %v325 = vadd.f32 %v62, %v261
  %v326 = vadd.f32 %v63, %v262
  %v327 = vadd.f32 %v64, %v263
  %v328 = vadd.f32 %v65, %v264
  %v329 = vadd.f32 %v66, %v265
  %v330 = vadd.f32 %v67, %v266
  %v331 = vadd.f32 %v68, %v267
  %v332 = vadd.f32 %v69, %v268
  %v333 = vadd.f32 %v70, %v269
  %v334 = vadd.f32 %v71, %v270
  %v335 = vadd.f32 %v72, %v271
  %v336 = vadd.f32 %v73, %v272
  %v337 = vadd.f32 %v74, %v273
  %v338 = vadd.f32 %v75, %v274
  %v339 = vadd.f32 %v76, %v275
  %v340 = vadd.f32 %v77, %v276
  %v341 = vadd.f32 %v78, %v277
  %v342 = vadd.f32 %v79, %v278
  %v343 = vadd.f32 %v80, %v279
  %v344 = vld [vmem:[%s3] sm:$0x1]
  %v346 = vlaneseq
  %v347 = vshrl.u32 %v346, 7
  %v348 = vsub.s32 0, %v347
  %v349 = vrot.slane %v344, %v348
  %v351 = vadd.f32 %v280, %v349
  %v352 = vadd.f32 %v281, %v349
  %v353 = vadd.f32 %v282, %v349
  %v354 = vadd.f32 %v283, %v349
  %v355 = vadd.f32 %v284, %v349
  %v356 = vadd.f32 %v285, %v349
  %v357 = vadd.f32 %v286, %v349
  %v358 = vadd.f32 %v287, %v349
  %v359 = vadd.f32 %v288, %v349
  %v360 = vadd.f32 %v289, %v349
  %v361 = vadd.f32 %v290, %v349
  %v362 = vadd.f32 %v291, %v349
  %v363 = vadd.f32 %v292, %v349
  %v364 = vadd.f32 %v293, %v349
  %v365 = vadd.f32 %v294, %v349
  %v366 = vadd.f32 %v295, %v349
  %v367 = vadd.f32 %v296, %v349
  %v368 = vadd.f32 %v297, %v349
  %v369 = vadd.f32 %v298, %v349
  %v370 = vadd.f32 %v299, %v349
  %v371 = vadd.f32 %v300, %v349
  %v372 = vadd.f32 %v301, %v349
  %v373 = vadd.f32 %v302, %v349
  %v374 = vadd.f32 %v303, %v349
  %v375 = vadd.f32 %v304, %v349
  %v376 = vadd.f32 %v305, %v349
  %v377 = vadd.f32 %v306, %v349
  %v378 = vadd.f32 %v307, %v349
  %v379 = vadd.f32 %v308, %v349
  %v380 = vadd.f32 %v309, %v349
  %v381 = vadd.f32 %v310, %v349
  %v382 = vadd.f32 %v311, %v349
  %v383 = vadd.f32 %v312, %v349
  %v384 = vadd.f32 %v313, %v349
  %v385 = vadd.f32 %v314, %v349
  %v386 = vadd.f32 %v315, %v349
  %v387 = vadd.f32 %v316, %v349
  %v388 = vadd.f32 %v317, %v349
  %v389 = vadd.f32 %v318, %v349
  %v390 = vadd.f32 %v319, %v349
  %v391 = vadd.f32 %v320, %v349
  %v392 = vadd.f32 %v321, %v349
  %v393 = vadd.f32 %v322, %v349
  %v394 = vadd.f32 %v323, %v349
  %v395 = vadd.f32 %v324, %v349
  %v396 = vadd.f32 %v325, %v349
  %v397 = vadd.f32 %v326, %v349
  %v398 = vadd.f32 %v327, %v349
  %v399 = vadd.f32 %v328, %v349
  %v400 = vadd.f32 %v329, %v349
  %v401 = vadd.f32 %v330, %v349
  %v402 = vadd.f32 %v331, %v349
  %v403 = vadd.f32 %v332, %v349
  %v404 = vadd.f32 %v333, %v349
  %v405 = vadd.f32 %v334, %v349
  %v406 = vadd.f32 %v335, %v349
  %v407 = vadd.f32 %v336, %v349
  %v408 = vadd.f32 %v337, %v349
  %v409 = vadd.f32 %v338, %v349
  %v410 = vadd.f32 %v339, %v349
  %v411 = vadd.f32 %v340, %v349
  %v412 = vadd.f32 %v341, %v349
  %v413 = vadd.f32 %v342, %v349
  %v414 = vadd.f32 %v343, %v349
  %415 = vst [vmem:[%s4] sm:$0xff] %v351
  %416 = vst [vmem:[%s4 + $0x8] sm:$0xff] %v352
  %417 = vst [vmem:[%s4 + $0x10] sm:$0xff] %v353
  %418 = vst [vmem:[%s4 + $0x18] sm:$0xff] %v354
  %419 = vst [vmem:[%s4 + $0x20] sm:$0xff] %v355
  %420 = vst [vmem:[%s4 + $0x28] sm:$0xff] %v356
  %421 = vst [vmem:[%s4 + $0x30] sm:$0xff] %v357
  %422 = vst [vmem:[%s4 + $0x38] sm:$0xff] %v358
  %423 = vst [vmem:[%s4 + $0x40] sm:$0xff] %v359
  %424 = vst [vmem:[%s4 + $0x48] sm:$0xff] %v360
  %425 = vst [vmem:[%s4 + $0x50] sm:$0xff] %v361
  %426 = vst [vmem:[%s4 + $0x58] sm:$0xff] %v362
  %427 = vst [vmem:[%s4 + $0x60] sm:$0xff] %v363
  %428 = vst [vmem:[%s4 + $0x68] sm:$0xff] %v364
  %429 = vst [vmem:[%s4 + $0x70] sm:$0xff] %v365
  %430 = vst [vmem:[%s4 + $0x78] sm:$0xff] %v366
  %431 = vst [vmem:[%s4 + $0x80] sm:$0xff] %v367
  %432 = vst [vmem:[%s4 + $0x88] sm:$0xff] %v368
  %433 = vst [vmem:[%s4 + $0x90] sm:$0xff] %v369
  %434 = vst [vmem:[%s4 + $0x98] sm:$0xff] %v370
  %435 = vst [vmem:[%s4 + $0xa0] sm:$0xff] %v371
  %436 = vst [vmem:[%s4 + $0xa8] sm:$0xff] %v372
  %437 = vst [vmem:[%s4 + $0xb0] sm:$0xff] %v373
  %438 = vst [vmem:[%s4 + $0xb8] sm:$0xff] %v374
  %439 = vst [vmem:[%s4 + $0xc0] sm:$0xff] %v375
  %440 = vst [vmem:[%s4 + $0xc8] sm:$0xff] %v376
  %441 = vst [vmem:[%s4 + $0xd0] sm:$0xff] %v377
  %442 = vst [vmem:[%s4 + $0xd8] sm:$0xff] %v378
  %443 = vst [vmem:[%s4 + $0xe0] sm:$0xff] %v379
  %444 = vst [vmem:[%s4 + $0xe8] sm:$0xff] %v380
  %445 = vst [vmem:[%s4 + $0xf0] sm:$0xff] %v381
  %446 = vst [vmem:[%s4 + $0xf8] sm:$0xff] %v382
  %447 = vst [vmem:[%s4 + $0x100] sm:$0xff] %v383
  %448 = vst [vmem:[%s4 + $0x108] sm:$0xff] %v384
  %449 = vst [vmem:[%s4 + $0x110] sm:$0xff] %v385
  %450 = vst [vmem:[%s4 + $0x118] sm:$0xff] %v386
  %451 = vst [vmem:[%s4 + $0x120] sm:$0xff] %v387
  %452 = vst [vmem:[%s4 + $0x128] sm:$0xff] %v388
  %453 = vst [vmem:[%s4 + $0x130] sm:$0xff] %v389
  %454 = vst [vmem:[%s4 + $0x138] sm:$0xff] %v390
  %455 = vst [vmem:[%s4 + $0x140] sm:$0xff] %v391
  %456 = vst [vmem:[%s4 + $0x148] sm:$0xff] %v392
  %457 = vst [vmem:[%s4 + $0x150] sm:$0xff] %v393
  %458 = vst [vmem:[%s4 + $0x158] sm:$0xff] %v394
  %459 = vst [vmem:[%s4 + $0x160] sm:$0xff] %v395
  %460 = vst [vmem:[%s4 + $0x168] sm:$0xff] %v396
  %461 = vst [vmem:[%s4 + $0x170] sm:$0xff] %v397
  %462 = vst [vmem:[%s4 + $0x178] sm:$0xff] %v398
  %463 = vst [vmem:[%s4 + $0x180] sm:$0xff] %v399
  %464 = vst [vmem:[%s4 + $0x188] sm:$0xff] %v400
  %465 = vst [vmem:[%s4 + $0x190] sm:$0xff] %v401
  %466 = vst [vmem:[%s4 + $0x198] sm:$0xff] %v402
  %467 = vst [vmem:[%s4 + $0x1a0] sm:$0xff] %v403
  %468 = vst [vmem:[%s4 + $0x1a8] sm:$0xff] %v404
  %469 = vst [vmem:[%s4 + $0x1b0] sm:$0xff] %v405
  %470 = vst [vmem:[%s4 + $0x1b8] sm:$0xff] %v406
  %471 = vst [vmem:[%s4 + $0x1c0] sm:$0xff] %v407
  %472 = vst [vmem:[%s4 + $0x1c8] sm:$0xff] %v408
  %473 = vst [vmem:[%s4 + $0x1d0] sm:$0xff] %v409
  %474 = vst [vmem:[%s4 + $0x1d8] sm:$0xff] %v410
  %475 = vst [vmem:[%s4 + $0x1e0] sm:$0xff] %v411
  %476 = vst [vmem:[%s4 + $0x1e8] sm:$0xff] %v412
  %477 = vst [vmem:[%s4 + $0x1f0] sm:$0xff] %v413
  %478 = vst [vmem:[%s4 + $0x1f8] sm:$0xff] %v414
  // Predicated region
  $region18: #{resnet_block_forward.5} parent=0 // pred_check
    _
  $region19: #{resnet_block_forward.5} parent=0 // pred_check_branch
    %480 = sbr.rel (0) target = $region21
  $region20: #{resnet_block_forward.5} parent=0 // pred_region
    _
  $region21: #{resnet_block_forward.5} parent=0 // pred_fallthru
    _
  // Predicated region
  $region22: #{resnet_block_forward.5} parent=0 // pred_check
    _
  $region23: #{resnet_block_forward.5} parent=0 // pred_check_branch
    %482 = sbr.rel (0) target = $region25
  $region24: #{resnet_block_forward.5} parent=0 // pred_region
    _
  $region25: #{resnet_block_forward.5} parent=0 // pred_fallthru
    _

// kernel: resnet_block_forward.4
$region0: #{resnet_block_forward.4}
  #allocation0 [shape = 'u32[]', space=smem, size = 0x4, offset = 0x4, fixed_abs, tag = 'smem constant byte address 0x4 - core index']
  #allocation1 [shape = 'u32[144,128]{1,0:T(1,128)}', space=vmem, size = 0x12000, scoped, tag = 'internal scratch']
  %s0 = inlined_call_operand.vmem [shape: bf16[2,16,16,128], index: 0, kind: input, shape index: {}, may-alias: {0,1,2}]
  %s1 = inlined_call_operand.vmem [shape: bf16[2,16,16,128], index: 1, kind: input, shape index: {}, may-alias: {0,1,2}]
  %s2 = inlined_call_operand.vmem [shape: bf16[2,16,16,128], index: 2, kind: input, shape index: {}, may-alias: {0,1,2}]
  %s3 = inlined_call_operand.vmem [shape: f32[1,128], index: 3, kind: input, shape index: {}]
  %s4 = inlined_call_operand.vmem [shape: f32[1,128], index: 4, kind: input, shape index: {}]
  %s5 = inlined_call_operand.vmem [shape: bf16[5,256,128], index: 5, kind: input, shape index: {}]
  %s6 = inlined_call_operand.vmem [shape: bf16[2,16,16,128], index: 6, kind: output, shape index: {0}]
  %s7 = inlined_call_operand.vmem [shape: f32[4,2,128], index: 7, kind: output, shape index: {1}]
  %8 = xla_tuple %s6, %s7
  %s9 = sld [smem:[#allocation0]]
  $region65: #{resnet_block_forward.4} parent=0
    _
  %s11 = ssub.s32 1, %s9
  %s12 = scalar_select 0, %s11, %s9
  loop: start=0, step=1, limit=6
  $region2: #{resnet_block_forward.4} parent=0 // loop_pre_header
    _
  $region3: #{resnet_block_forward.4} parent=0 // loop_header
    %s14 = sphi 0, %s18
    %p15 = scmp.ge.s32.totalorder %s14, 6
    %s21 = sphi 0, %s33
    %s22 = sphi 0, %s29
    %s23 = sphi 0, %s21
    %s24 = sphi 0, %s22
    %s25 = sphi 0, %s23
    %s26 = sphi 0, %s24
    %s46 = sphi 0, %s48
    %s49 = sphi 0, %s46
    %s50 = sphi 0, %s49
    %s66 = sphi 0, %s50
    %s74 = sphi 0, %s76
    %s77 = sphi 0, %s74
    %s78 = sphi 0, %s77
    %s94 = sphi 0, %s78
    %s110 = sphi 0, %s112
    %s113 = sphi 0, %s110
    %s114 = sphi 0, %s113
    %s130 = sphi 0, %s114
    %s134 = sphi 0, %s134
    %s136 = sphi 0, %s134
    %s137 = sphi 0, %s136
    %s151 = sphi 0, %s137
    %s155 = sphi 0, %s155
    %s157 = sphi 0, %s155
    %s158 = sphi 0, %s157
    %s172 = sphi 0, %s158
    %s176 = sphi 0, %s176
    %s178 = sphi 0, %s176
    %s179 = sphi 0, %s178
    %s193 = sphi 0, %s179
    %s201 = sphi 0, %s203
    %s204 = sphi 0, %s201
    %s205 = sphi 0, %s204
    %s221 = sphi 0, %s205
    %s231 = sphi 0, %s233
    %s234 = sphi 0, %s231
    %s235 = sphi 0, %s234
    %s251 = sphi 0, %s235
  $region4: #{resnet_block_forward.4} parent=0 // loop_header_branch
    %17 = sbr.rel (%p15) target = $region8
  $region5: #{resnet_block_forward.4} parent=0 // loop_body
    %s19 = ssub.s32 %s14, 1
    %s20 = ssub.s32 %s14, 2
    %s27 = sadd.s32 1, %s22
    %p28 = scmp.ge.s32.totalorder %s27, 2
    %s29 = scalar_select %p28, 0, %s27
    %s30 = sadd.s32 1, %s21
    %s31 = scalar_select %p28, %s30, %s21
    %p32 = scmp.ge.s32.totalorder %s31, 2
    %s33 = scalar_select %p32, 0, %s31
    %s34 = smul.u32 %s22, 8
    %s35 = ssub.s32 %s34, 1
    %p36 = scmp.gt.s32.totalorder %s35, 1
    %s37 = scalar_select %p36, %s35, 1
    %s38 = smul.u32 %s29, 8
    %s39 = ssub.s32 %s38, 1
    %p40 = scmp.gt.s32.totalorder %s39, 1
    %s41 = scalar_select %p40, %s39, 1
    %s42 = ssub.s32 %s21, %s33
    %s43 = ssub.s32 %s37, %s41
    %s44 = sor.u32 %s42, %s43
    %p45 = scmp.eq.s32.totalorder %s44, 0
    %s47 = sadd.s32 %s46, 1
    %s48 = scalar_select %p45, %s46, %s47
    %p51 = pneg %p45
    %p52 = scmp.eq.s32.totalorder %s14, 3
    %p53 = por %p51, %p52
    %p54 = scmp.ne.s32.totalorder %s46, %s49
    %p55 = scmp.eq.s32.totalorder %s14, 0
    %p56 = por %p54, %p55
    %p57 = scmp.ne.s32.totalorder %s46, %s49
    %p58 = scmp.eq.s32.totalorder %s19, 3
    %p59 = por %p57, %p58
    %p60 = scmp.ne.s32.totalorder %s49, %s50
    %p61 = scmp.eq.s32.totalorder %s19, 0
    %p62 = por %p60, %p61
    %p63 = scmp.ne.s32.totalorder %s49, %s50
    %p64 = scmp.eq.s32.totalorder %s20, 3
    %p65 = por %p63, %p64
    %p67 = scmp.ne.s32.totalorder %s50, %s66
    %p68 = scmp.eq.s32.totalorder %s20, 0
    %p69 = por %p67, %p68
    %s70 = ssub.s32 %s21, %s33
    %s71 = ssub.s32 %s22, %s29
    %s72 = sor.u32 %s70, %s71
    %p73 = scmp.eq.s32.totalorder %s72, 0
    %s75 = sadd.s32 %s74, 1
    %s76 = scalar_select %p73, %s74, %s75
    %p79 = pneg %p73
    %p80 = scmp.eq.s32.totalorder %s14, 3
    %p81 = por %p79, %p80
    %p82 = scmp.ne.s32.totalorder %s74, %s77
    %p83 = scmp.eq.s32.totalorder %s14, 0
    %p84 = por %p82, %p83
    %p85 = scmp.ne.s32.totalorder %s74, %s77
    %p86 = scmp.eq.s32.totalorder %s19, 3
    %p87 = por %p85, %p86
    %p88 = scmp.ne.s32.totalorder %s77, %s78
    %p89 = scmp.eq.s32.totalorder %s19, 0
    %p90 = por %p88, %p89
    %p91 = scmp.ne.s32.totalorder %s77, %s78
    %p92 = scmp.eq.s32.totalorder %s20, 3
    %p93 = por %p91, %p92
    %p95 = scmp.ne.s32.totalorder %s78, %s94
    %p96 = scmp.eq.s32.totalorder %s20, 0
    %p97 = por %p95, %p96
    %s98 = sadd.s32 %s22, 1
    %s99 = smul.u32 %s98, 8
    %p100 = scmp.lt.s32.totalorder %s99, 14
    %s101 = scalar_select %p100, %s99, 14
    %s102 = sadd.s32 %s29, 1
    %s103 = smul.u32 %s102, 8
    %p104 = scmp.lt.s32.totalorder %s103, 14
    %s105 = scalar_select %p104, %s103, 14
    %s106 = ssub.s32 %s21, %s33
    %s107 = ssub.s32 %s101, %s105
    %s108 = sor.u32 %s106, %s107
    %p109 = scmp.eq.s32.totalorder %s108, 0
    %s111 = sadd.s32 %s110, 1
    %s112 = scalar_select %p109, %s110, %s111
    %p115 = pneg %p109
    %p116 = scmp.eq.s32.totalorder %s14, 3
    %p117 = por %p115, %p116
    %p118 = scmp.ne.s32.totalorder %s110, %s113
    %p119 = scmp.eq.s32.totalorder %s14, 0
    %p120 = por %p118, %p119
    %p121 = scmp.ne.s32.totalorder %s110, %s113
    %p122 = scmp.eq.s32.totalorder %s19, 3
    %p123 = por %p121, %p122
    %p124 = scmp.ne.s32.totalorder %s113, %s114
    %p125 = scmp.eq.s32.totalorder %s19, 0
    %p126 = por %p124, %p125
    %p127 = scmp.ne.s32.totalorder %s113, %s114
    %p128 = scmp.eq.s32.totalorder %s20, 3
    %p129 = por %p127, %p128
    %p131 = scmp.ne.s32.totalorder %s114, %s130
    %p132 = scmp.eq.s32.totalorder %s20, 0
    %p133 = por %p131, %p132
    %s135 = sadd.s32 %s134, 1
    %p138 = scmp.eq.s32.totalorder %s14, 3
    %p139 = scmp.ne.s32.totalorder %s134, %s136
    %p140 = scmp.eq.s32.totalorder %s14, 0
    %p141 = por %p139, %p140
    %p142 = scmp.ne.s32.totalorder %s134, %s136
    %p143 = scmp.eq.s32.totalorder %s19, 3
    %p144 = por %p142, %p143
    %p145 = scmp.ne.s32.totalorder %s136, %s137
    %p146 = scmp.eq.s32.totalorder %s19, 0
    %p147 = por %p145, %p146
    %p148 = scmp.ne.s32.totalorder %s136, %s137
    %p149 = scmp.eq.s32.totalorder %s20, 3
    %p150 = por %p148, %p149
    %p152 = scmp.ne.s32.totalorder %s137, %s151
    %p153 = scmp.eq.s32.totalorder %s20, 0
    %p154 = por %p152, %p153
    %s156 = sadd.s32 %s155, 1
    %p159 = scmp.eq.s32.totalorder %s14, 3
    %p160 = scmp.ne.s32.totalorder %s155, %s157
    %p161 = scmp.eq.s32.totalorder %s14, 0
    %p162 = por %p160, %p161
    %p163 = scmp.ne.s32.totalorder %s155, %s157
    %p164 = scmp.eq.s32.totalorder %s19, 3
    %p165 = por %p163, %p164
    %p166 = scmp.ne.s32.totalorder %s157, %s158
    %p167 = scmp.eq.s32.totalorder %s19, 0
    %p168 = por %p166, %p167
    %p169 = scmp.ne.s32.totalorder %s157, %s158
    %p170 = scmp.eq.s32.totalorder %s20, 3
    %p171 = por %p169, %p170
    %p173 = scmp.ne.s32.totalorder %s158, %s172
    %p174 = scmp.eq.s32.totalorder %s20, 0
    %p175 = por %p173, %p174
    %s177 = sadd.s32 %s176, 1
    %p180 = scmp.eq.s32.totalorder %s14, 3
    %p181 = scmp.ne.s32.totalorder %s176, %s178
    %p182 = scmp.eq.s32.totalorder %s14, 0
    %p183 = por %p181, %p182
    %p184 = scmp.ne.s32.totalorder %s176, %s178
    %p185 = scmp.eq.s32.totalorder %s19, 3
    %p186 = por %p184, %p185
    %p187 = scmp.ne.s32.totalorder %s178, %s179
    %p188 = scmp.eq.s32.totalorder %s19, 0
    %p189 = por %p187, %p188
    %p190 = scmp.ne.s32.totalorder %s178, %s179
    %p191 = scmp.eq.s32.totalorder %s20, 3
    %p192 = por %p190, %p191
    %p194 = scmp.ne.s32.totalorder %s179, %s193
    %p195 = scmp.eq.s32.totalorder %s20, 0
    %p196 = por %p194, %p195
    %s197 = ssub.s32 %s21, %s33
    %s198 = ssub.s32 %s22, %s29
    %s199 = sor.u32 %s197, %s198
    %p200 = scmp.eq.s32.totalorder %s199, 0
    %s202 = sadd.s32 %s201, 1
    %s203 = scalar_select %p200, %s201, %s202
    %p206 = pneg %p200
    %p207 = scmp.eq.s32.totalorder %s14, 3
    %p208 = por %p206, %p207
    %p209 = scmp.ne.s32.totalorder %s201, %s204
    %p210 = scmp.eq.s32.totalorder %s14, 0
    %p211 = por %p209, %p210
    %p212 = scmp.ne.s32.totalorder %s201, %s204
    %p213 = scmp.eq.s32.totalorder %s19, 3
    %p214 = por %p212, %p213
    %p215 = scmp.ne.s32.totalorder %s204, %s205
    %p216 = scmp.eq.s32.totalorder %s19, 0
    %p217 = por %p215, %p216
    %p218 = scmp.ne.s32.totalorder %s204, %s205
    %p219 = scmp.eq.s32.totalorder %s20, 3
    %p220 = por %p218, %p219
    %p222 = scmp.ne.s32.totalorder %s205, %s221
    %p223 = scmp.eq.s32.totalorder %s20, 0
    %p224 = por %p222, %p223
    %s225 = smul.u32 %s21, 2
    %s226 = sadd.s32 %s225, %s22
    %s227 = smul.u32 %s33, 2
    %s228 = sadd.s32 %s227, %s29
    %s229 = ssub.s32 %s226, %s228
    %p230 = scmp.eq.s32.totalorder %s229, 0
    %s232 = sadd.s32 %s231, 1
    %s233 = scalar_select %p230, %s231, %s232
    %p236 = pneg %p230
    %p237 = scmp.eq.s32.totalorder %s14, 3
    %p238 = por %p236, %p237
    %p239 = scmp.ne.s32.totalorder %s231, %s234
    %p240 = scmp.eq.s32.totalorder %s14, 0
    %p241 = por %p239, %p240
    %p242 = scmp.ne.s32.totalorder %s231, %s234
    %p243 = scmp.eq.s32.totalorder %s19, 3
    %p244 = por %p242, %p243
    %p245 = scmp.ne.s32.totalorder %s234, %s235
    %p246 = scmp.eq.s32.totalorder %s19, 0
    %p247 = por %p245, %p246
    %p248 = scmp.ne.s32.totalorder %s234, %s235
    %p249 = scmp.eq.s32.totalorder %s20, 3
    %p250 = por %p248, %p249
    %p252 = scmp.ne.s32.totalorder %s235, %s251
    %p253 = scmp.eq.s32.totalorder %s20, 0
    %p254 = por %p252, %p253
    %p255 = scmp.le.s32.totalorder 1, %s14
    %p256 = scmp.lt.s32.totalorder %s14, 5
    %p257 = pnand %p255, %p256
    %p258 = pneg %p257
    // Predicated region
    $region9: #{resnet_block_forward.4} parent=5 // pred_check
      _
    $region10: #{resnet_block_forward.4} parent=5 // pred_check_branch
      %260 = sbr.rel (%p257) target = $region12
    $region11: #{resnet_block_forward.4} parent=5 // pred_region
      %s261 = ssub.s32 %s14, 1
      // Predicated region
      $region13: #{resnet_block_forward.4} parent=11 // pred_check
        %p262 = pneg %p147
      $region14: #{resnet_block_forward.4} parent=11 // pred_check_branch
        %264 = sbr.rel (%p262) target = $region16
      $region15: #{resnet_block_forward.4} parent=11 // pred_region
        _
      $region16: #{resnet_block_forward.4} parent=11 // pred_fallthru
        _
      // Predicated region
      $region17: #{resnet_block_forward.4} parent=11 // pred_check
        %p265 = pneg %p168
      $region18: #{resnet_block_forward.4} parent=11 // pred_check_branch
        %267 = sbr.rel (%p265) target = $region20
      $region19: #{resnet_block_forward.4} parent=11 // pred_region
        _
      $region20: #{resnet_block_forward.4} parent=11 // pred_fallthru
        _
      // Predicated region
      $region21: #{resnet_block_forward.4} parent=11 // pred_check
        %p268 = pneg %p189
      $region22: #{resnet_block_forward.4} parent=11 // pred_check_branch
        %270 = sbr.rel (%p268) target = $region24
      $region23: #{resnet_block_forward.4} parent=11 // pred_region
        _
      $region24: #{resnet_block_forward.4} parent=11 // pred_fallthru
        _
    $region12: #{resnet_block_forward.4} parent=5 // pred_fallthru
      _
    %p271 = scmp.lt.s32.totalorder %s14, 4
    // Predicated region
    $region25: #{resnet_block_forward.4} parent=5 // pred_check
      %p272 = pneg %p271
    $region26: #{resnet_block_forward.4} parent=5 // pred_check_branch
      %274 = sbr.rel (%p272) target = $region28
    $region27: #{resnet_block_forward.4} parent=5 // pred_region
      // Predicated region
      $region29: #{resnet_block_forward.4} parent=27 // pred_check
        %p275 = pneg %p56
      $region30: #{resnet_block_forward.4} parent=27 // pred_check_branch
        %277 = sbr.rel (%p275) target = $region32
      $region31: #{resnet_block_forward.4} parent=27 // pred_region
        %s278 = smul.u32 %s22, 8
        %s279 = ssub.s32 %s278, 1
        %p280 = scmp.gt.s32.totalorder %s279, 1
        %s281 = scalar_select %p280, %s279, 1
        %p282 = scmp.lt.s32.totalorder %s21, 1
        %s283 = scalar_select %p282, %s21, 1
        %p284 = scmp.lt.s32.totalorder %s281, 15
        %s285 = scalar_select %p284, %s281, 15
        %s286 = smul.addr %s285, 2
        %s287 = smul.addr %s283, 32
        %s288 = sadd.s32 %s286, %s287
        %s289 = smul.addr %s288, 4
        %s290 = scalar_lea.vmem %s0, %s289
        %s291 = smul.u32 %s22, 8
        %s292 = ssub.s32 %s291, 1
        %p293 = scmp.gt.s32.totalorder %s292, 1
        %s294 = scalar_select %p293, %s292, 1
      $region32: #{resnet_block_forward.4} parent=27 // pred_fallthru
        _
      // Predicated region
      $region33: #{resnet_block_forward.4} parent=27 // pred_check
        %p295 = pneg %p84
      $region34: #{resnet_block_forward.4} parent=27 // pred_check_branch
        %297 = sbr.rel (%p295) target = $region36
      $region35: #{resnet_block_forward.4} parent=27 // pred_region
        %s298 = smul.u32 8, %s22
        %p299 = scmp.lt.s32.totalorder %s21, 1
        %s300 = scalar_select %p299, %s21, 1
        %p301 = scmp.lt.s32.totalorder %s298, 15
        %s302 = scalar_select %p301, %s298, 15
        %s303 = smul.addr %s302, 2
        %s304 = smul.addr %s300, 32
        %s305 = sadd.s32 %s303, %s304
        %s306 = smul.addr %s305, 4
        %s307 = scalar_lea.vmem %s1, %s306
        %s308 = smul.u32 8, %s22
      $region36: #{resnet_block_forward.4} parent=27 // pred_fallthru
        _
      // Predicated region
      $region37: #{resnet_block_forward.4} parent=27 // pred_check
        %p309 = pneg %p120
      $region38: #{resnet_block_forward.4} parent=27 // pred_check_branch
        %311 = sbr.rel (%p309) target = $region40
      $region39: #{resnet_block_forward.4} parent=27 // pred_region
        %s312 = sadd.s32 %s22, 1
        %s313 = smul.u32 %s312, 8
        %p314 = scmp.lt.s32.totalorder %s313, 14
        %s315 = scalar_select %p314, %s313, 14
        %p316 = scmp.lt.s32.totalorder %s21, 1
        %s317 = scalar_select %p316, %s21, 1
        %p318 = scmp.lt.s32.totalorder %s315, 15
        %s319 = scalar_select %p318, %s315, 15
        %s320 = smul.addr %s319, 2
        %s321 = smul.addr %s317, 32
        %s322 = sadd.s32 %s320, %s321
        %s323 = smul.addr %s322, 4
        %s324 = scalar_lea.vmem %s2, %s323
        %s325 = sadd.s32 %s22, 1
        %s326 = smul.u32 %s325, 8
        %p327 = scmp.lt.s32.totalorder %s326, 14
        %s328 = scalar_select %p327, %s326, 14
      $region40: #{resnet_block_forward.4} parent=27 // pred_fallthru
        _
    $region28: #{resnet_block_forward.4} parent=5 // pred_fallthru
      _
    %p329 = scmp.le.s32.totalorder 1, %s14
    %p330 = scmp.lt.s32.totalorder %s14, 5
    %p331 = pnand %p329, %p330
    %p332 = pneg %p331
    // Predicated region
    $region41: #{resnet_block_forward.4} parent=5 // pred_check
      _
    $region42: #{resnet_block_forward.4} parent=5 // pred_check_branch
      %334 = sbr.rel (%p331) target = $region44
    $region43: #{resnet_block_forward.4} parent=5 // pred_region
      %s335 = ssub.s32 %s14, 1
      %s336 = smul.u32 %s24, 8
      %s337 = ssub.s32 %s336, 1
      %p338 = scmp.gt.s32.totalorder %s337, 1
      %s339 = scalar_select %p338, %s337, 1
      %p340 = scmp.lt.s32.totalorder %s23, 1
      %s341 = scalar_select %p340, %s23, 1
      %p342 = scmp.lt.s32.totalorder %s339, 15
      %s343 = scalar_select %p342, %s339, 15
      %s344 = smul.addr %s343, 2
      %s345 = smul.addr %s341, 32
      %s346 = sadd.s32 %s344, %s345
      %s347 = smul.addr %s346, 4
      %s348 = scalar_lea.vmem %s0, %s347
      %p349 = pneg %p62
      %p350 = pneg %p59
      %s351 = smul.u32 8, %s24
      %p352 = scmp.lt.s32.totalorder %s23, 1
      %s353 = scalar_select %p352, %s23, 1
      %p354 = scmp.lt.s32.totalorder %s351, 15
      %s355 = scalar_select %p354, %s351, 15
      %s356 = smul.addr %s355, 2
      %s357 = smul.addr %s353, 32
      %s358 = sadd.s32 %s356, %s357
      %s359 = smul.addr %s358, 4
      %s360 = scalar_lea.vmem %s1, %s359
      %p361 = pneg %p90
      %p362 = pneg %p87
      %s363 = sadd.s32 %s24, 1
      %s364 = smul.u32 %s363, 8
      %p365 = scmp.lt.s32.totalorder %s364, 14
      %s366 = scalar_select %p365, %s364, 14
      %p367 = scmp.lt.s32.totalorder %s23, 1
      %s368 = scalar_select %p367, %s23, 1
      %p369 = scmp.lt.s32.totalorder %s366, 15
      %s370 = scalar_select %p369, %s366, 15
      %s371 = smul.addr %s370, 2
      %s372 = smul.addr %s368, 32
      %s373 = sadd.s32 %s371, %s372
      %s374 = smul.addr %s373, 4
      %s375 = scalar_lea.vmem %s2, %s374
      %p376 = pneg %p126
      %p377 = pneg %p123
      %p378 = pneg %p147
      %p379 = pneg %p144
      %p380 = pneg %p168
      %p381 = pneg %p165
      %p382 = pneg %p189
      %p383 = pneg %p186
      %p384 = pneg %p217
      %p385 = pneg %p214
      %s386 = smul.u32 8, %s24
      %p387 = scmp.lt.s32.totalorder %s23, 1
      %s388 = scalar_select %p387, %s23, 1
      %p389 = scmp.lt.s32.totalorder %s386, 15
      %s390 = scalar_select %p389, %s386, 15
      %s391 = smul.addr %s390, 2
      %s392 = smul.addr %s388, 32
      %s393 = sadd.s32 %s391, %s392
      %s394 = smul.addr %s393, 4
      %s395 = scalar_lea.vmem %s6, %s394
      %p396 = pneg %p247
      %p397 = pneg %p244
      %s398 = smul.u32 %s23, 2
      %s399 = sadd.s32 %s398, %s24
      %p400 = scmp.lt.s32.totalorder %s399, 3
      %s401 = scalar_select %p400, %s399, 3
      %s402 = smul.addr %s401, 2
      %s403 = scalar_lea.vmem %s7, %s402
      %s404 = smul.u32 %s24, 8
      %s405 = ssub.s32 %s404, 1
      %p406 = scmp.gt.s32.totalorder %s405, 1
      %s407 = scalar_select %p406, %s405, 1
      %p408 = scmp.lt.s32.totalorder %s23, 1
      %s409 = scalar_select %p408, %s23, 1
      %p410 = scmp.lt.s32.totalorder %s407, 15
      %s411 = scalar_select %p410, %s407, 15
      %s412 = smul.addr %s411, 2
      %s413 = smul.addr %s409, 32
      %s414 = sadd.s32 %s412, %s413
      %s415 = smul.addr %s414, 4
      %s416 = scalar_lea.vmem %s0, %s415
      %s417 = smul.u32 %s24, 8
      %s418 = ssub.s32 %s417, 1
      %p419 = scmp.gt.s32.totalorder %s418, 1
      %s420 = scalar_select %p419, %s418, 1
      %s421 = smul.u32 8, %s24
      %p422 = scmp.lt.s32.totalorder %s23, 1
      %s423 = scalar_select %p422, %s23, 1
      %p424 = scmp.lt.s32.totalorder %s421, 15
      %s425 = scalar_select %p424, %s421, 15
      %s426 = smul.addr %s425, 2
      %s427 = smul.addr %s423, 32
      %s428 = sadd.s32 %s426, %s427
      %s429 = smul.addr %s428, 4
      %s430 = scalar_lea.vmem %s1, %s429
      %s431 = smul.u32 8, %s24
      %s432 = sadd.s32 %s24, 1
      %s433 = smul.u32 %s432, 8
      %p434 = scmp.lt.s32.totalorder %s433, 14
      %s435 = scalar_select %p434, %s433, 14
      %p436 = scmp.lt.s32.totalorder %s23, 1
      %s437 = scalar_select %p436, %s23, 1
      %p438 = scmp.lt.s32.totalorder %s435, 15
      %s439 = scalar_select %p438, %s435, 15
      %s440 = smul.addr %s439, 2
      %s441 = smul.addr %s437, 32
      %s442 = sadd.s32 %s440, %s441
      %s443 = smul.addr %s442, 4
      %s444 = scalar_lea.vmem %s2, %s443
      %s445 = sadd.s32 %s24, 1
      %s446 = smul.u32 %s445, 8
      %p447 = scmp.lt.s32.totalorder %s446, 14
      %s448 = scalar_select %p447, %s446, 14
      %s449 = smul.u32 8, %s24
      %p450 = scmp.lt.s32.totalorder %s23, 1
      %s451 = scalar_select %p450, %s23, 1
      %p452 = scmp.lt.s32.totalorder %s449, 15
      %s453 = scalar_select %p452, %s449, 15
      %s454 = smul.addr %s453, 2
      %s455 = smul.addr %s451, 32
      %s456 = sadd.s32 %s454, %s455
      %s457 = smul.addr %s456, 4
      %s458 = scalar_lea.vmem %s6, %s457
      %s459 = smul.u32 8, %s24
      %s460 = smul.u32 %s23, 2
      %s461 = sadd.s32 %s460, %s24
      %p462 = scmp.lt.s32.totalorder %s461, 3
      %s463 = scalar_select %p462, %s461, 3
      %s464 = smul.addr %s463, 2
      %s465 = scalar_lea.vmem %s7, %s464
      %s466 = smul.u32 %s23, 2
      %s467 = sadd.s32 %s466, %s24
      %v469 = vld [vmem:[%s416] sm:$0xf]
      %v470 = vld [vmem:[%s416 + $0x4] sm:$0xf]
      %v471 = vld [vmem:[%s430] sm:$0xf]
      %v472 = vld [vmem:[%s430 + $0x4] sm:$0xf]
      %v473 = vld [vmem:[%s430 + $0x8] sm:$0xf]
      %v474 = vld [vmem:[%s430 + $0xc] sm:$0xf]
      %v475 = vld [vmem:[%s430 + $0x10] sm:$0xf]
      %v476 = vld [vmem:[%s430 + $0x14] sm:$0xf]
      %v477 = vld [vmem:[%s430 + $0x18] sm:$0xf]
      %v478 = vld [vmem:[%s430 + $0x1c] sm:$0xf]
      %v479 = vld [vmem:[%s430 + $0x20] sm:$0xf]
      %v480 = vld [vmem:[%s430 + $0x24] sm:$0xf]
      %v481 = vld [vmem:[%s430 + $0x28] sm:$0xf]
      %v482 = vld [vmem:[%s430 + $0x2c] sm:$0xf]
      %v483 = vld [vmem:[%s430 + $0x30] sm:$0xf]
      %v484 = vld [vmem:[%s430 + $0x34] sm:$0xf]
      %v485 = vld [vmem:[%s430 + $0x38] sm:$0xf]
      %v486 = vld [vmem:[%s430 + $0x3c] sm:$0xf]
      %v487 = vld [vmem:[%s444] sm:$0xf]
      %v488 = vld [vmem:[%s444 + $0x4] sm:$0xf]
      %v489 = vunpack.c.l.bf16 %v469
      %v490 = vunpack.c.l.bf16 %v470
      %v491 = vunpack.c.l.bf16 %v471
      %v492 = vunpack.c.l.bf16 %v472
      %v493 = vunpack.c.l.bf16 %v473
      %v494 = vunpack.c.l.bf16 %v474
      %v495 = vunpack.c.l.bf16 %v475
      %v496 = vunpack.c.l.bf16 %v476
      %v497 = vunpack.c.l.bf16 %v477
      %v498 = vunpack.c.l.bf16 %v478
      %v499 = vunpack.c.l.bf16 %v479
      %v500 = vunpack.c.l.bf16 %v480
      %v501 = vunpack.c.l.bf16 %v481
      %v502 = vunpack.c.l.bf16 %v482
      %v503 = vunpack.c.l.bf16 %v483
      %v504 = vunpack.c.l.bf16 %v484
      %v505 = vunpack.c.l.bf16 %v485
      %v506 = vunpack.c.l.bf16 %v486
      %v507 = vunpack.c.l.bf16 %v487
      %v508 = vunpack.c.l.bf16 %v488
      %v509 = vld [vmem:[%s3] sm:$0x1]
      %v511 = vlaneseq
      %v512 = vshrl.u32 %v511, 7
      %v513 = vsub.s32 0, %v512
      %v514 = vrot.slane %v509, %v513
      %v516 = vmul.f32 %v489, %v514
      %v517 = vmul.f32 %v490, %v514
      %v518 = vmul.f32 %v491, %v514
      %v519 = vmul.f32 %v492, %v514
      %v520 = vmul.f32 %v493, %v514
      %v521 = vmul.f32 %v494, %v514
      %v522 = vmul.f32 %v495, %v514
      %v523 = vmul.f32 %v496, %v514
      %v524 = vmul.f32 %v497, %v514
      %v525 = vmul.f32 %v498, %v514
      %v526 = vmul.f32 %v499, %v514
      %v527 = vmul.f32 %v500, %v514
      %v528 = vmul.f32 %v501, %v514
      %v529 = vmul.f32 %v502, %v514
      %v530 = vmul.f32 %v503, %v514
      %v531 = vmul.f32 %v504, %v514
      %v532 = vmul.f32 %v505, %v514
      %v533 = vmul.f32 %v506, %v514
      %v534 = vmul.f32 %v507, %v514
      %v535 = vmul.f32 %v508, %v514
      %v536 = vld [vmem:[%s4] sm:$0x1]
      %v538 = vlaneseq
      %v539 = vshrl.u32 %v538, 7
      %v540 = vsub.s32 0, %v539
      %v541 = vrot.slane %v536, %v540
      %v543 = vadd.f32 %v516, %v541
      %v544 = vadd.f32 %v517, %v541
      %v545 = vadd.f32 %v518, %v541
      %v546 = vadd.f32 %v519, %v541
      %v547 = vadd.f32 %v520, %v541
      %v548 = vadd.f32 %v521, %v541
      %v549 = vadd.f32 %v522, %v541
      %v550 = vadd.f32 %v523, %v541
      %v551 = vadd.f32 %v524, %v541
      %v552 = vadd.f32 %v525, %v541
      %v553 = vadd.f32 %v526, %v541
      %v554 = vadd.f32 %v527, %v541
      %v555 = vadd.f32 %v528, %v541
      %v556 = vadd.f32 %v529, %v541
      %v557 = vadd.f32 %v530, %v541
      %v558 = vadd.f32 %v531, %v541
      %v559 = vadd.f32 %v532, %v541
      %v560 = vadd.f32 %v533, %v541
      %v561 = vadd.f32 %v534, %v541
      %v562 = vadd.f32 %v535, %v541
      %v563 = vmax.f32 %v543, 0.0
      %v564 = vmax.f32 %v544, 0.0
      %v565 = vmax.f32 %v545, 0.0
      %v566 = vmax.f32 %v546, 0.0
      %v567 = vmax.f32 %v547, 0.0
      %v568 = vmax.f32 %v548, 0.0
      %v569 = vmax.f32 %v549, 0.0
      %v570 = vmax.f32 %v550, 0.0
      %v571 = vmax.f32 %v551, 0.0
      %v572 = vmax.f32 %v552, 0.0
      %v573 = vmax.f32 %v553, 0.0
      %v574 = vmax.f32 %v554, 0.0
      %v575 = vmax.f32 %v555, 0.0
      %v576 = vmax.f32 %v556, 0.0
      %v577 = vmax.f32 %v557, 0.0
      %v578 = vmax.f32 %v558, 0.0
      %v579 = vmax.f32 %v559, 0.0
      %v580 = vmax.f32 %v560, 0.0
      %v581 = vmax.f32 %v561, 0.0
      %v582 = vmax.f32 %v562, 0.0
      %v583 = vpack.c.bf16 %v564, %v563
      %v584 = vpack.c.bf16 %v566, %v565
      %v585 = vpack.c.bf16 %v568, %v567
      %v586 = vpack.c.bf16 %v570, %v569
      %v587 = vpack.c.bf16 %v572, %v571
      %v588 = vpack.c.bf16 %v574, %v573
      %v589 = vpack.c.bf16 %v576, %v575
      %v590 = vpack.c.bf16 %v578, %v577
      %v591 = vpack.c.bf16 %v580, %v579
      %v592 = vpack.c.bf16 %v582, %v581
      %v594 = vshrl.u32 %v583, 16
      %v597 = vshrl.u32 %v584, 16
      %v600 = vshrl.u32 %v585, 16
      %v603 = vshrl.u32 %v586, 16
      %v606 = vshrl.u32 %v587, 16
      %v609 = vshrl.u32 %v588, 16
      %v612 = vshrl.u32 %v589, 16
      %v615 = vshrl.u32 %v590, 16
      %v618 = vshrl.u32 %v591, 16
      %v621 = vshrl.u32 %v592, 16
      %v633 = vrot.slane %v594, 7
      %v634 = vshll.u32 %v583, 16
      %v636 = vor.u32 %v633, %v634
      %v637 = vrot.slane %v597, 7
      %v638 = vshll.u32 %v584, 16
      %v640 = vor.u32 %v637, %v638
      %v641 = vrot.slane %v600, 7
      %v642 = vshll.u32 %v585, 16
      %v644 = vor.u32 %v641, %v642
      %v645 = vrot.slane %v603, 7
      %v646 = vshll.u32 %v586, 16
      %v648 = vor.u32 %v645, %v646
      %v649 = vrot.slane %v606, 7
      %v650 = vshll.u32 %v587, 16
      %v652 = vor.u32 %v649, %v650
      %v653 = vrot.slane %v609, 7
      %v654 = vshll.u32 %v588, 16
      %v656 = vor.u32 %v653, %v654
      %v657 = vrot.slane %v612, 7
      %v658 = vshll.u32 %v589, 16
      %v660 = vor.u32 %v657, %v658
      %v661 = vrot.slane %v615, 7
      %v662 = vshll.u32 %v590, 16
      %v664 = vor.u32 %v661, %v662
      %v665 = vrot.slane %v618, 7
      %v666 = vshll.u32 %v591, 16
      %v668 = vor.u32 %v665, %v666
      %v669 = vrot.slane %v621, 7
      %v670 = vshll.u32 %v592, 16
      %v672 = vor.u32 %v669, %v670
      %vm683 = vcmask 1040384
      %vm684 = vsmask.f32 256
      %vm685 = vmand %vm683, %vm684
      %v686 = vsel %vm685, %v594, %v636
      %v687 = vsel %vm685, %v597, %v640
      %v688 = vsel %vm685, %v600, %v644
      %v689 = vsel %vm685, %v603, %v648
      %v690 = vsel %vm685, %v606, %v652
      %v691 = vsel %vm685, %v609, %v656
      %v692 = vsel %vm685, %v612, %v660
      %v693 = vsel %vm685, %v615, %v664
      %v694 = vsel %vm685, %v618, %v668
      %v695 = vsel %vm685, %v621, %v672
      %v696 = vrot.slane %v634, 1
      %v697 = vor.u32 %v594, %v696
      %v698 = vrot.slane %v638, 1
      %v699 = vor.u32 %v597, %v698
      %v700 = vrot.slane %v642, 1
      %v701 = vor.u32 %v600, %v700
      %v702 = vrot.slane %v646, 1
      %v703 = vor.u32 %v603, %v702
      %v704 = vrot.slane %v650, 1
      %v705 = vor.u32 %v606, %v704
      %v706 = vrot.slane %v654, 1
      %v707 = vor.u32 %v609, %v706
      %v708 = vrot.slane %v658, 1
      %v709 = vor.u32 %v612, %v708
      %v710 = vrot.slane %v662, 1
      %v711 = vor.u32 %v615, %v710
      %v712 = vrot.slane %v666, 1
      %v713 = vor.u32 %v618, %v712
      %v714 = vrot.slane %v670, 1
      %v715 = vor.u32 %v621, %v714
      %vm736 = vcmask 1047552
      %vm737 = vsmask.f32 7424
      %vm738 = vmand %vm736, %vm737
      %v739 = vsel %vm738, %v697, %v634
      %v740 = vsel %vm738, %v699, %v638
      %v741 = vsel %vm738, %v701, %v642
      %v742 = vsel %vm738, %v703, %v646
      %v743 = vsel %vm738, %v705, %v650
      %v744 = vsel %vm738, %v707, %v654
      %v745 = vsel %vm738, %v709, %v658
      %v746 = vsel %vm738, %v711, %v662
      %v747 = vsel %vm738, %v713, %v666
      %v748 = vsel %vm738, %v715, %v670
      %v749 = vld [vmem:[%s5] sm:$0xf]
      %v750 = vld [vmem:[%s5 + $0x4] sm:$0xf]
      %v751 = vld [vmem:[%s5 + $0x8] sm:$0xf]
      %v752 = vld [vmem:[%s5 + $0xc] sm:$0xf]
      %v753 = vld [vmem:[%s5 + $0x10] sm:$0xf]
      %v754 = vld [vmem:[%s5 + $0x14] sm:$0xf]
      %v755 = vld [vmem:[%s5 + $0x18] sm:$0xf]
      %v756 = vld [vmem:[%s5 + $0x1c] sm:$0xf]
      %v757 = vld [vmem:[%s5 + $0x20] sm:$0xf]
      %v758 = vld [vmem:[%s5 + $0x24] sm:$0xf]
      %v759 = vld [vmem:[%s5 + $0x28] sm:$0xf]
      %v760 = vld [vmem:[%s5 + $0x2c] sm:$0xf]
      %v761 = vld [vmem:[%s5 + $0x30] sm:$0xf]
      %v762 = vld [vmem:[%s5 + $0x34] sm:$0xf]
      %v763 = vld [vmem:[%s5 + $0x38] sm:$0xf]
      %v764 = vld [vmem:[%s5 + $0x3c] sm:$0xf]
      %v765 = vld [vmem:[%s5 + $0x40] sm:$0xf]
      %v766 = vld [vmem:[%s5 + $0x44] sm:$0xf]
      %v767 = vld [vmem:[%s5 + $0x48] sm:$0xf]
      %v768 = vld [vmem:[%s5 + $0x4c] sm:$0xf]
      %v769 = vld [vmem:[%s5 + $0x50] sm:$0xf]
      %v770 = vld [vmem:[%s5 + $0x54] sm:$0xf]
      %v771 = vld [vmem:[%s5 + $0x58] sm:$0xf]
      %v772 = vld [vmem:[%s5 + $0x5c] sm:$0xf]
      %v773 = vld [vmem:[%s5 + $0x60] sm:$0xf]
      %v774 = vld [vmem:[%s5 + $0x64] sm:$0xf]
      %v775 = vld [vmem:[%s5 + $0x68] sm:$0xf]
      %v776 = vld [vmem:[%s5 + $0x6c] sm:$0xf]
      %v777 = vld [vmem:[%s5 + $0x70] sm:$0xf]
      %v778 = vld [vmem:[%s5 + $0x74] sm:$0xf]
      %v779 = vld [vmem:[%s5 + $0x78] sm:$0xf]
      %v780 = vld [vmem:[%s5 + $0x7c] sm:$0xf]
      %s781 = scalar_lea.vmem %s5, 128
      %v782 = vld [vmem:[%s781] sm:$0xf]
      %v783 = vld [vmem:[%s781 + $0x4] sm:$0xf]
      %v784 = vld [vmem:[%s781 + $0x8] sm:$0xf]
      %v785 = vld [vmem:[%s781 + $0xc] sm:$0xf]
      %v786 = vld [vmem:[%s781 + $0x10] sm:$0xf]
      %v787 = vld [vmem:[%s781 + $0x14] sm:$0xf]
      %v788 = vld [vmem:[%s781 + $0x18] sm:$0xf]
      %v789 = vld [vmem:[%s781 + $0x1c] sm:$0xf]
      %v790 = vld [vmem:[%s781 + $0x20] sm:$0xf]
      %v791 = vld [vmem:[%s781 + $0x24] sm:$0xf]
      %v792 = vld [vmem:[%s781 + $0x28] sm:$0xf]
      %v793 = vld [vmem:[%s781 + $0x2c] sm:$0xf]
      %v794 = vld [vmem:[%s781 + $0x30] sm:$0xf]
      %v795 = vld [vmem:[%s781 + $0x34] sm:$0xf]
      %v796 = vld [vmem:[%s781 + $0x38] sm:$0xf]
      %v797 = vld [vmem:[%s781 + $0x3c] sm:$0xf]
      %v798 = vld [vmem:[%s781 + $0x40] sm:$0xf]
      %v799 = vld [vmem:[%s781 + $0x44] sm:$0xf]
      %v800 = vld [vmem:[%s781 + $0x48] sm:$0xf]
      %v801 = vld [vmem:[%s781 + $0x4c] sm:$0xf]
      %v802 = vld [vmem:[%s781 + $0x50] sm:$0xf]
      %v803 = vld [vmem:[%s781 + $0x54] sm:$0xf]
      %v804 = vld [vmem:[%s781 + $0x58] sm:$0xf]
      %v805 = vld [vmem:[%s781 + $0x5c] sm:$0xf]
      %v806 = vld [vmem:[%s781 + $0x60] sm:$0xf]
      %v807 = vld [vmem:[%s781 + $0x64] sm:$0xf]
      %v808 = vld [vmem:[%s781 + $0x68] sm:$0xf]
      %v809 = vld [vmem:[%s781 + $0x6c] sm:$0xf]
      %v810 = vld [vmem:[%s781 + $0x70] sm:$0xf]
      %v811 = vld [vmem:[%s781 + $0x74] sm:$0xf]
      %v812 = vld [vmem:[%s781 + $0x78] sm:$0xf]
      %v813 = vld [vmem:[%s781 + $0x7c] sm:$0xf]
      %v846 = vunpack.c.l.b16 %v782
      %v847 = vunpack.c.l.b16 %v783
      %v848 = vunpack.c.l.b16 %v784
      %v849 = vunpack.c.l.b16 %v785
      %v850 = vunpack.c.l.b16 %v786
      %v851 = vunpack.c.l.b16 %v787
      %v852 = vunpack.c.l.b16 %v788
      %v853 = vunpack.c.l.b16 %v789
      %v854 = vunpack.c.l.b16 %v790
      %v855 = vunpack.c.l.b16 %v791
      %v856 = vunpack.c.l.b16 %v792
      %v857 = vunpack.c.l.b16 %v793
      %v858 = vunpack.c.l.b16 %v794
      %v859 = vunpack.c.l.b16 %v795
      %v860 = vunpack.c.l.b16 %v796
      %v861 = vunpack.c.l.b16 %v797
      %v862 = vunpack.c.l.b16 %v798
      %v863 = vunpack.c.l.b16 %v799
      %v864 = vunpack.c.l.b16 %v800
      %v865 = vunpack.c.l.b16 %v801
      %v866 = vunpack.c.l.b16 %v802
      %v867 = vunpack.c.l.b16 %v803
      %v868 = vunpack.c.l.b16 %v804
      %v869 = vunpack.c.l.b16 %v805
      %v870 = vunpack.c.l.b16 %v806
      %v871 = vunpack.c.l.b16 %v807
      %v872 = vunpack.c.l.b16 %v808
      %v873 = vunpack.c.l.b16 %v809
      %v874 = vunpack.c.l.b16 %v810
      %v875 = vunpack.c.l.b16 %v811
      %v876 = vunpack.c.l.b16 %v812
      %v877 = vunpack.c.l.b16 %v813
      %v878 = vpack.c.b16 %v847, %v846
      %v879 = vpack.c.b16 %v849, %v848
      %v880 = vpack.c.b16 %v851, %v850
      %v881 = vpack.c.b16 %v853, %v852
      %v882 = vpack.c.b16 %v855, %v854
      %v883 = vpack.c.b16 %v857, %v856
      %v884 = vpack.c.b16 %v859, %v858
      %v885 = vpack.c.b16 %v861, %v860
      %v886 = vpack.c.b16 %v863, %v862
      %v887 = vpack.c.b16 %v865, %v864
      %v888 = vpack.c.b16 %v867, %v866
      %v889 = vpack.c.b16 %v869, %v868
      %v890 = vpack.c.b16 %v871, %v870
      %v891 = vpack.c.b16 %v873, %v872
      %v892 = vpack.c.b16 %v875, %v874
      %v893 = vpack.c.b16 %v877, %v876
      %910 = vmatprep.subr.bf16.mxu0 0
      %911 = vmatpush1.bf16.msra.mxu0 %v878
      %912 = vmatprep.subr.bf16.mxu0 0
      %913 = vmatpush1.bf16.msra.mxu0 %v879
      %914 = vmatprep.subr.bf16.mxu0 0
      %915 = vmatpush1.bf16.msra.mxu0 %v880
      %916 = vmatprep.subr.bf16.mxu0 0
      %917 = vmatpush1.bf16.msra.mxu0 %v881
      %918 = vmatprep.subr.bf16.mxu0 0
      %919 = vmatpush1.bf16.msra.mxu0 %v882
      %920 = vmatprep.subr.bf16.mxu0 0
      %921 = vmatpush1.bf16.msra.mxu0 %v883
      %922 = vmatprep.subr.bf16.mxu0 0
      %923 = vmatpush1.bf16.msra.mxu0 %v884
      %924 = vmatprep.subr.bf16.mxu0 0
      %925 = vmatpush1.bf16.msra.mxu0 %v885
      %926 = vmatprep.subr.bf16.mxu0 0
      %927 = vmatpush1.bf16.msra.mxu0 %v886
      %928 = vmatprep.subr.bf16.mxu0 0
      %929 = vmatpush1.bf16.msra.mxu0 %v887
      %930 = vmatprep.subr.bf16.mxu0 0
      %931 = vmatpush1.bf16.msra.mxu0 %v888
      %932 = vmatprep.subr.bf16.mxu0 0
      %933 = vmatpush1.bf16.msra.mxu0 %v889
      %934 = vmatprep.subr.bf16.mxu0 0
      %935 = vmatpush1.bf16.msra.mxu0 %v890
      %936 = vmatprep.subr.bf16.mxu0 0
      %937 = vmatpush1.bf16.msra.mxu0 %v891
      %938 = vmatprep.subr.bf16.mxu0 0
      %939 = vmatpush1.bf16.msra.mxu0 %v892
      %940 = vmatprep.subr.bf16.mxu0 0
      %941 = vmatpush1.bf16.msra.mxu0 %v893
      %942 = vmatprep.mubr.bf16.mxu0 %v687
      %943 = vmatmul.mubr.bf16.gmra.mrb[0].mxu0 %v739
      %v944 = vpop.f32.mrb[0].mxu0
      %v945 = vadd.f32 0.0, %v944
      %v946 = vpop.f32.mrb[0].mxu0
      %v947 = vpop.f32.mrb[0].mxu0
      %v948 = vadd.f32 0.0, %v947
      %v949 = vpop.f32.mrb[0].mxu0
      %950 = vmatprep.mubr.bf16.mxu0 %v688
      %951 = vmatmul.mubr.bf16.gmra.mrb[0].mxu0 %v740
      %v952 = vpop.f32.mrb[0].mxu0
      %v953 = vadd.f32 0.0, %v952
      %v954 = vpop.f32.mrb[0].mxu0
      %v955 = vpop.f32.mrb[0].mxu0
      %v956 = vadd.f32 0.0, %v955
      %v957 = vpop.f32.mrb[0].mxu0
      %958 = vmatprep.mubr.bf16.mxu0 %v689
      %959 = vmatmul.mubr.bf16.gmra.mrb[0].mxu0 %v741
      %v960 = vpop.f32.mrb[0].mxu0
      %v961 = vadd.f32 0.0, %v960
      %v962 = vpop.f32.mrb[0].mxu0
      %v963 = vpop.f32.mrb[0].mxu0
      %v964 = vadd.f32 0.0, %v963
      %v965 = vpop.f32.mrb[0].mxu0
      %966 = vmatprep.mubr.bf16.mxu0 %v690
      %967 = vmatmul.mubr.bf16.gmra.mrb[0].mxu0 %v742
      %v968 = vpop.f32.mrb[0].mxu0
      %v969 = vadd.f32 0.0, %v968
      %v970 = vpop.f32.mrb[0].mxu0
      %v971 = vpop.f32.mrb[0].mxu0
      %v972 = vadd.f32 0.0, %v971
      %v973 = vpop.f32.mrb[0].mxu0
      %974 = vmatprep.mubr.bf16.mxu0 %v691
      %975 = vmatmul.mubr.bf16.gmra.mrb[0].mxu0 %v743
      %v976 = vpop.f32.mrb[0].mxu0
      %v977 = vadd.f32 0.0, %v976
      %v978 = vpop.f32.mrb[0].mxu0
      %v979 = vpop.f32.mrb[0].mxu0
      %v980 = vadd.f32 0.0, %v979
      %v981 = vpop.f32.mrb[0].mxu0
      %982 = vmatprep.mubr.bf16.mxu0 %v692
      %983 = vmatmul.mubr.bf16.gmra.mrb[0].mxu0 %v744
      %v984 = vpop.f32.mrb[0].mxu0
      %v985 = vadd.f32 0.0, %v984
      %v986 = vpop.f32.mrb[0].mxu0
      %v987 = vpop.f32.mrb[0].mxu0
      %v988 = vadd.f32 0.0, %v987
      %v989 = vpop.f32.mrb[0].mxu0
      %990 = vmatprep.mubr.bf16.mxu0 %v693
      %991 = vmatmul.mubr.bf16.gmra.mrb[0].mxu0 %v745
      %v992 = vpop.f32.mrb[0].mxu0
      %v993 = vadd.f32 0.0, %v992
      %v994 = vpop.f32.mrb[0].mxu0
      %v995 = vpop.f32.mrb[0].mxu0
      %v996 = vadd.f32 0.0, %v995
      %v997 = vpop.f32.mrb[0].mxu0
      %998 = vmatprep.mubr.bf16.mxu0 %v694
      %999 = vmatmul.mubr.bf16.gmra.mrb[0].mxu0 %v746
      %v1000 = vpop.f32.mrb[0].mxu0
      %v1001 = vadd.f32 0.0, %v1000
      %v1002 = vpop.f32.mrb[0].mxu0
      %v1003 = vpop.f32.mrb[0].mxu0
      %v1004 = vadd.f32 0.0, %v1003
      %v1005 = vpop.f32.mrb[0].mxu0
      %1006 = vdwg.mxu0
      %v1039 = vunpack.c.l.b16 %v749
      %v1040 = vunpack.c.l.b16 %v750
      %v1041 = vunpack.c.l.b16 %v751
      %v1042 = vunpack.c.l.b16 %v752
      %v1043 = vunpack.c.l.b16 %v753
      %v1044 = vunpack.c.l.b16 %v754
      %v1045 = vunpack.c.l.b16 %v755
      %v1046 = vunpack.c.l.b16 %v756
      %v1047 = vunpack.c.l.b16 %v757
      %v1048 = vunpack.c.l.b16 %v758
      %v1049 = vunpack.c.l.b16 %v759
      %v1050 = vunpack.c.l.b16 %v760
      %v1051 = vunpack.c.l.b16 %v761
      %v1052 = vunpack.c.l.b16 %v762
      %v1053 = vunpack.c.l.b16 %v763
      %v1054 = vunpack.c.l.b16 %v764
      %v1055 = vunpack.c.l.b16 %v765
      %v1056 = vunpack.c.l.b16 %v766
      %v1057 = vunpack.c.l.b16 %v767
      %v1058 = vunpack.c.l.b16 %v768
      %v1059 = vunpack.c.l.b16 %v769
      %v1060 = vunpack.c.l.b16 %v770
      %v1061 = vunpack.c.l.b16 %v771
      %v1062 = vunpack.c.l.b16 %v772
      %v1063 = vunpack.c.l.b16 %v773
      %v1064 = vunpack.c.l.b16 %v774
      %v1065 = vunpack.c.l.b16 %v775
      %v1066 = vunpack.c.l.b16 %v776
      %v1067 = vunpack.c.l.b16 %v777
      %v1068 = vunpack.c.l.b16 %v778
      %v1069 = vunpack.c.l.b16 %v779
      %v1070 = vunpack.c.l.b16 %v780
      %v1071 = vpack.c.b16 %v1040, %v1039
      %v1072 = vpack.c.b16 %v1042, %v1041
      %v1073 = vpack.c.b16 %v1044, %v1043
      %v1074 = vpack.c.b16 %v1046, %v1045
      %v1075 = vpack.c.b16 %v1048, %v1047
      %v1076 = vpack.c.b16 %v1050, %v1049
      %v1077 = vpack.c.b16 %v1052, %v1051
      %v1078 = vpack.c.b16 %v1054, %v1053
      %v1079 = vpack.c.b16 %v1056, %v1055
      %v1080 = vpack.c.b16 %v1058, %v1057
      %v1081 = vpack.c.b16 %v1060, %v1059
      %v1082 = vpack.c.b16 %v1062, %v1061
      %v1083 = vpack.c.b16 %v1064, %v1063
      %v1084 = vpack.c.b16 %v1066, %v1065
      %v1085 = vpack.c.b16 %v1068, %v1067
      %v1086 = vpack.c.b16 %v1070, %v1069
      %1103 = vmatprep.subr.bf16.mxu0 0
      %1104 = vmatpush1.bf16.msra.mxu0 %v1071
      %1105 = vmatprep.subr.bf16.mxu0 0
      %1106 = vmatpush1.bf16.msra.mxu0 %v1072
      %1107 = vmatprep.subr.bf16.mxu0 0
      %1108 = vmatpush1.bf16.msra.mxu0 %v1073
      %1109 = vmatprep.subr.bf16.mxu0 0
      %1110 = vmatpush1.bf16.msra.mxu0 %v1074
      %1111 = vmatprep.subr.bf16.mxu0 0
      %1112 = vmatpush1.bf16.msra.mxu0 %v1075
      %1113 = vmatprep.subr.bf16.mxu0 0
      %1114 = vmatpush1.bf16.msra.mxu0 %v1076
      %1115 = vmatprep.subr.bf16.mxu0 0
      %1116 = vmatpush1.bf16.msra.mxu0 %v1077
      %1117 = vmatprep.subr.bf16.mxu0 0
      %1118 = vmatpush1.bf16.msra.mxu0 %v1078
      %1119 = vmatprep.subr.bf16.mxu0 0
      %1120 = vmatpush1.bf16.msra.mxu0 %v1079
      %1121 = vmatprep.subr.bf16.mxu0 0
      %1122 = vmatpush1.bf16.msra.mxu0 %v1080
      %1123 = vmatprep.subr.bf16.mxu0 0
      %1124 = vmatpush1.bf16.msra.mxu0 %v1081
      %1125 = vmatprep.subr.bf16.mxu0 0
      %1126 = vmatpush1.bf16.msra.mxu0 %v1082
      %1127 = vmatprep.subr.bf16.mxu0 0
      %1128 = vmatpush1.bf16.msra.mxu0 %v1083
      %1129 = vmatprep.subr.bf16.mxu0 0
      %1130 = vmatpush1.bf16.msra.mxu0 %v1084
      %1131 = vmatprep.subr.bf16.mxu0 0
      %1132 = vmatpush1.bf16.msra.mxu0 %v1085
      %1133 = vmatprep.subr.bf16.mxu0 0
      %1134 = vmatpush1.bf16.msra.mxu0 %v1086
      %1135 = vmatprep.mubr.bf16.mxu0 %v583
      %1136 = vmatmul.mubr.bf16.gmra.mrb[0].mxu0 %v686
      %v1137 = vpop.f32.mrb[0].mxu0
      %v1138 = vadd.f32 %v945, %v1137
      %v1139 = vpop.f32.mrb[0].mxu0
      %v1140 = vpop.f32.mrb[0].mxu0
      %v1141 = vadd.f32 %v948, %v1140
      %v1142 = vpop.f32.mrb[0].mxu0
      %1143 = vmatprep.mubr.bf16.mxu0 %v584
      %1144 = vmatmul.mubr.bf16.gmra.mrb[0].mxu0 %v687
      %v1145 = vpop.f32.mrb[0].mxu0
      %v1146 = vadd.f32 %v953, %v1145
      %v1147 = vpop.f32.mrb[0].mxu0
      %v1148 = vpop.f32.mrb[0].mxu0
      %v1149 = vadd.f32 %v956, %v1148
      %v1150 = vpop.f32.mrb[0].mxu0
      %1151 = vmatprep.mubr.bf16.mxu0 %v585
      %1152 = vmatmul.mubr.bf16.gmra.mrb[0].mxu0 %v688
      %v1153 = vpop.f32.mrb[0].mxu0
      %v1154 = vadd.f32 %v961, %v1153
      %v1155 = vpop.f32.mrb[0].mxu0
      %v1156 = vpop.f32.mrb[0].mxu0
      %v1157 = vadd.f32 %v964, %v1156
      %v1158 = vpop.f32.mrb[0].mxu0
      %1159 = vmatprep.mubr.bf16.mxu0 %v586
      %1160 = vmatmul.mubr.bf16.gmra.mrb[0].mxu0 %v689
      %v1161 = vpop.f32.mrb[0].mxu0
      %v1162 = vadd.f32 %v969, %v1161
      %v1163 = vpop.f32.mrb[0].mxu0
      %v1164 = vpop.f32.mrb[0].mxu0
      %v1165 = vadd.f32 %v972, %v1164
      %v1166 = vpop.f32.mrb[0].mxu0
      %1167 = vmatprep.mubr.bf16.mxu0 %v587
      %1168 = vmatmul.mubr.bf16.gmra.mrb[0].mxu0 %v690
      %v1169 = vpop.f32.mrb[0].mxu0
      %v1170 = vadd.f32 %v977, %v1169
      %v1171 = vpop.f32.mrb[0].mxu0
      %v1172 = vpop.f32.mrb[0].mxu0
      %v1173 = vadd.f32 %v980, %v1172
      %v1174 = vpop.f32.mrb[0].mxu0
      %1175 = vmatprep.mubr.bf16.mxu0 %v588
      %1176 = vmatmul.mubr.bf16.gmra.mrb[0].mxu0 %v691
      %v1177 = vpop.f32.mrb[0].mxu0
      %v1178 = vadd.f32 %v985, %v1177
      %v1179 = vpop.f32.mrb[0].mxu0
      %v1180 = vpop.f32.mrb[0].mxu0
      %v1181 = vadd.f32 %v988, %v1180
      %v1182 = vpop.f32.mrb[0].mxu0
      %1183 = vmatprep.mubr.bf16.mxu0 %v589
      %1184 = vmatmul.mubr.bf16.gmra.mrb[0].mxu0 %v692
      %v1185 = vpop.f32.mrb[0].mxu0
      %v1186 = vadd.f32 %v993, %v1185
      %v1187 = vpop.f32.mrb[0].mxu0
      %v1188 = vpop.f32.mrb[0].mxu0
      %v1189 = vadd.f32 %v996, %v1188
      %v1190 = vpop.f32.mrb[0].mxu0
      %1191 = vmatprep.mubr.bf16.mxu0 %v590
      %1192 = vmatmul.mubr.bf16.gmra.mrb[0].mxu0 %v693
      %v1193 = vpop.f32.mrb[0].mxu0
      %v1194 = vadd.f32 %v1001, %v1193
      %v1195 = vpop.f32.mrb[0].mxu0
      %v1196 = vpop.f32.mrb[0].mxu0
      %v1197 = vadd.f32 %v1004, %v1196
      %v1198 = vpop.f32.mrb[0].mxu0
      %1199 = vdwg.mxu0
      %s1200 = scalar_lea.vmem %s5, 256
      %v1201 = vld [vmem:[%s1200] sm:$0xf]
      %v1202 = vld [vmem:[%s1200 + $0x4] sm:$0xf]
      %v1203 = vld [vmem:[%s1200 + $0x8] sm:$0xf]
      %v1204 = vld [vmem:[%s1200 + $0xc] sm:$0xf]
      %v1205 = vld [vmem:[%s1200 + $0x10] sm:$0xf]
      %v1206 = vld [vmem:[%s1200 + $0x14] sm:$0xf]
      %v1207 = vld [vmem:[%s1200 + $0x18] sm:$0xf]
      %v1208 = vld [vmem:[%s1200 + $0x1c] sm:$0xf]
      %v1209 = vld [vmem:[%s1200 + $0x20] sm:$0xf]
      %v1210 = vld [vmem:[%s1200 + $0x24] sm:$0xf]
      %v1211 = vld [vmem:[%s1200 + $0x28] sm:$0xf]
      %v1212 = vld [vmem:[%s1200 + $0x2c] sm:$0xf]
      %v1213 = vld [vmem:[%s1200 + $0x30] sm:$0xf]
      %v1214 = vld [vmem:[%s1200 + $0x34] sm:$0xf]
      %v1215 = vld [vmem:[%s1200 + $0x38] sm:$0xf]
      %v1216 = vld [vmem:[%s1200 + $0x3c] sm:$0xf]
      %v1217 = vld [vmem:[%s1200 + $0x40] sm:$0xf]
      %v1218 = vld [vmem:[%s1200 + $0x44] sm:$0xf]
      %v1219 = vld [vmem:[%s1200 + $0x48] sm:$0xf]
      %v1220 = vld [vmem:[%s1200 + $0x4c] sm:$0xf]
      %v1221 = vld [vmem:[%s1200 + $0x50] sm:$0xf]
      %v1222 = vld [vmem:[%s1200 + $0x54] sm:$0xf]
      %v1223 = vld [vmem:[%s1200 + $0x58] sm:$0xf]
      %v1224 = vld [vmem:[%s1200 + $0x5c] sm:$0xf]
      %v1225 = vld [vmem:[%s1200 + $0x60] sm:$0xf]
      %v1226 = vld [vmem:[%s1200 + $0x64] sm:$0xf]
      %v1227 = vld [vmem:[%s1200 + $0x68] sm:$0xf]
      %v1228 = vld [vmem:[%s1200 + $0x6c] sm:$0xf]
      %v1229 = vld [vmem:[%s1200 + $0x70] sm:$0xf]
      %v1230 = vld [vmem:[%s1200 + $0x74] sm:$0xf]
      %v1231 = vld [vmem:[%s1200 + $0x78] sm:$0xf]
      %v1232 = vld [vmem:[%s1200 + $0x7c] sm:$0xf]
      %v1265 = vunpack.c.l.b16 %v1201
      %v1266 = vunpack.c.l.b16 %v1202
      %v1267 = vunpack.c.l.b16 %v1203
      %v1268 = vunpack.c.l.b16 %v1204
      %v1269 = vunpack.c.l.b16 %v1205
      %v1270 = vunpack.c.l.b16 %v1206
      %v1271 = vunpack.c.l.b16 %v1207
      %v1272 = vunpack.c.l.b16 %v1208
      %v1273 = vunpack.c.l.b16 %v1209
      %v1274 = vunpack.c.l.b16 %v1210
      %v1275 = vunpack.c.l.b16 %v1211
      %v1276 = vunpack.c.l.b16 %v1212
      %v1277 = vunpack.c.l.b16 %v1213
      %v1278 = vunpack.c.l.b16 %v1214
      %v1279 = vunpack.c.l.b16 %v1215
      %v1280 = vunpack.c.l.b16 %v1216
      %v1281 = vunpack.c.l.b16 %v1217
      %v1282 = vunpack.c.l.b16 %v1218
      %v1283 = vunpack.c.l.b16 %v1219
      %v1284 = vunpack.c.l.b16 %v1220
      %v1285 = vunpack.c.l.b16 %v1221
      %v1286 = vunpack.c.l.b16 %v1222
      %v1287 = vunpack.c.l.b16 %v1223
      %v1288 = vunpack.c.l.b16 %v1224
      %v1289 = vunpack.c.l.b16 %v1225
      %v1290 = vunpack.c.l.b16 %v1226
      %v1291 = vunpack.c.l.b16 %v1227
      %v1292 = vunpack.c.l.b16 %v1228
      %v1293 = vunpack.c.l.b16 %v1229
      %v1294 = vunpack.c.l.b16 %v1230
      %v1295 = vunpack.c.l.b16 %v1231
      %v1296 = vunpack.c.l.b16 %v1232
      %v1297 = vpack.c.b16 %v1266, %v1265
      %v1298 = vpack.c.b16 %v1268, %v1267
      %v1299 = vpack.c.b16 %v1270, %v1269
      %v1300 = vpack.c.b16 %v1272, %v1271
      %v1301 = vpack.c.b16 %v1274, %v1273
      %v1302 = vpack.c.b16 %v1276, %v1275
      %v1303 = vpack.c.b16 %v1278, %v1277
      %v1304 = vpack.c.b16 %v1280, %v1279
      %v1305 = vpack.c.b16 %v1282, %v1281
      %v1306 = vpack.c.b16 %v1284, %v1283
      %v1307 = vpack.c.b16 %v1286, %v1285
      %v1308 = vpack.c.b16 %v1288, %v1287
      %v1309 = vpack.c.b16 %v1290, %v1289
      %v1310 = vpack.c.b16 %v1292, %v1291
      %v1311 = vpack.c.b16 %v1294, %v1293
      %v1312 = vpack.c.b16 %v1296, %v1295
      %1329 = vmatprep.subr.bf16.mxu0 0
      %1330 = vmatpush1.bf16.msra.mxu0 %v1297
      %1331 = vmatprep.subr.bf16.mxu0 0
      %1332 = vmatpush1.bf16.msra.mxu0 %v1298
      %1333 = vmatprep.subr.bf16.mxu0 0
      %1334 = vmatpush1.bf16.msra.mxu0 %v1299
      %1335 = vmatprep.subr.bf16.mxu0 0
      %1336 = vmatpush1.bf16.msra.mxu0 %v1300
      %1337 = vmatprep.subr.bf16.mxu0 0
      %1338 = vmatpush1.bf16.msra.mxu0 %v1301
      %1339 = vmatprep.subr.bf16.mxu0 0
      %1340 = vmatpush1.bf16.msra.mxu0 %v1302
      %1341 = vmatprep.subr.bf16.mxu0 0
      %1342 = vmatpush1.bf16.msra.mxu0 %v1303
      %1343 = vmatprep.subr.bf16.mxu0 0
      %1344 = vmatpush1.bf16.msra.mxu0 %v1304
      %1345 = vmatprep.subr.bf16.mxu0 0
      %1346 = vmatpush1.bf16.msra.mxu0 %v1305
      %1347 = vmatprep.subr.bf16.mxu0 0
      %1348 = vmatpush1.bf16.msra.mxu0 %v1306
      %1349 = vmatprep.subr.bf16.mxu0 0
      %1350 = vmatpush1.bf16.msra.mxu0 %v1307
      %1351 = vmatprep.subr.bf16.mxu0 0
      %1352 = vmatpush1.bf16.msra.mxu0 %v1308
      %1353 = vmatprep.subr.bf16.mxu0 0
      %1354 = vmatpush1.bf16.msra.mxu0 %v1309
      %1355 = vmatprep.subr.bf16.mxu0 0
      %1356 = vmatpush1.bf16.msra.mxu0 %v1310
      %1357 = vmatprep.subr.bf16.mxu0 0
      %1358 = vmatpush1.bf16.msra.mxu0 %v1311
      %1359 = vmatprep.subr.bf16.mxu0 0
      %1360 = vmatpush1.bf16.msra.mxu0 %v1312
      %1361 = vmatprep.mubr.bf16.mxu0 %v740
      %1362 = vmatmul.mubr.bf16.gmra.mrb[0].mxu0 %v584
      %v1363 = vpop.f32.mrb[0].mxu0
      %v1364 = vadd.f32 0.0, %v1363
      %v1365 = vpop.f32.mrb[0].mxu0
      %v1366 = vpop.f32.mrb[0].mxu0
      %v1367 = vadd.f32 0.0, %v1366
      %v1368 = vpop.f32.mrb[0].mxu0
      %1369 = vmatprep.mubr.bf16.mxu0 %v741
      %1370 = vmatmul.mubr.bf16.gmra.mrb[0].mxu0 %v585
      %v1371 = vpop.f32.mrb[0].mxu0
      %v1372 = vadd.f32 0.0, %v1371
      %v1373 = vpop.f32.mrb[0].mxu0
      %v1374 = vpop.f32.mrb[0].mxu0
      %v1375 = vadd.f32 0.0, %v1374
      %v1376 = vpop.f32.mrb[0].mxu0
      %1377 = vmatprep.mubr.bf16.mxu0 %v742
      %1378 = vmatmul.mubr.bf16.gmra.mrb[0].mxu0 %v586
      %v1379 = vpop.f32.mrb[0].mxu0
      %v1380 = vadd.f32 0.0, %v1379
      %v1381 = vpop.f32.mrb[0].mxu0
      %v1382 = vpop.f32.mrb[0].mxu0
      %v1383 = vadd.f32 0.0, %v1382
      %v1384 = vpop.f32.mrb[0].mxu0
      %1385 = vmatprep.mubr.bf16.mxu0 %v743
      %1386 = vmatmul.mubr.bf16.gmra.mrb[0].mxu0 %v587
      %v1387 = vpop.f32.mrb[0].mxu0
      %v1388 = vadd.f32 0.0, %v1387
      %v1389 = vpop.f32.mrb[0].mxu0
      %v1390 = vpop.f32.mrb[0].mxu0
      %v1391 = vadd.f32 0.0, %v1390
      %v1392 = vpop.f32.mrb[0].mxu0
      %1393 = vmatprep.mubr.bf16.mxu0 %v744
      %1394 = vmatmul.mubr.bf16.gmra.mrb[0].mxu0 %v588
      %v1395 = vpop.f32.mrb[0].mxu0
      %v1396 = vadd.f32 0.0, %v1395
      %v1397 = vpop.f32.mrb[0].mxu0
      %v1398 = vpop.f32.mrb[0].mxu0
      %v1399 = vadd.f32 0.0, %v1398
      %v1400 = vpop.f32.mrb[0].mxu0
      %1401 = vmatprep.mubr.bf16.mxu0 %v745
      %1402 = vmatmul.mubr.bf16.gmra.mrb[0].mxu0 %v589
      %v1403 = vpop.f32.mrb[0].mxu0
      %v1404 = vadd.f32 0.0, %v1403
      %v1405 = vpop.f32.mrb[0].mxu0
      %v1406 = vpop.f32.mrb[0].mxu0
      %v1407 = vadd.f32 0.0, %v1406
      %v1408 = vpop.f32.mrb[0].mxu0
      %1409 = vmatprep.mubr.bf16.mxu0 %v746
      %1410 = vmatmul.mubr.bf16.gmra.mrb[0].mxu0 %v590
      %v1411 = vpop.f32.mrb[0].mxu0
      %v1412 = vadd.f32 0.0, %v1411
      %v1413 = vpop.f32.mrb[0].mxu0
      %v1414 = vpop.f32.mrb[0].mxu0
      %v1415 = vadd.f32 0.0, %v1414
      %v1416 = vpop.f32.mrb[0].mxu0
      %1417 = vmatprep.mubr.bf16.mxu0 %v747
      %1418 = vmatmul.mubr.bf16.gmra.mrb[0].mxu0 %v591
      %v1419 = vpop.f32.mrb[0].mxu0
      %v1420 = vadd.f32 0.0, %v1419
      %v1421 = vpop.f32.mrb[0].mxu0
      %v1422 = vpop.f32.mrb[0].mxu0
      %v1423 = vadd.f32 0.0, %v1422
      %v1424 = vpop.f32.mrb[0].mxu0
      %1425 = vdwg.mxu0
      %v1426 = vadd.f32 %v1138, %v1364
      %v1427 = vadd.f32 %v1141, %v1367
      %v1428 = vadd.f32 %v1146, %v1372
      %v1429 = vadd.f32 %v1149, %v1375
      %v1430 = vadd.f32 %v1154, %v1380
      %v1431 = vadd.f32 %v1157, %v1383
      %v1432 = vadd.f32 %v1162, %v1388
      %v1433 = vadd.f32 %v1165, %v1391
      %v1434 = vadd.f32 %v1170, %v1396
      %v1435 = vadd.f32 %v1173, %v1399
      %v1436 = vadd.f32 %v1178, %v1404
      %v1437 = vadd.f32 %v1181, %v1407
      %v1438 = vadd.f32 %v1186, %v1412
      %v1439 = vadd.f32 %v1189, %v1415
      %v1440 = vadd.f32 %v1194, %v1420
      %v1441 = vadd.f32 %v1197, %v1423
      %s1442 = scalar_lea.vmem %s5, 384
      %v1443 = vld [vmem:[%s1442] sm:$0xf]
      %v1444 = vld [vmem:[%s1442 + $0x4] sm:$0xf]
      %v1445 = vld [vmem:[%s1442 + $0x8] sm:$0xf]
      %v1446 = vld [vmem:[%s1442 + $0xc] sm:$0xf]
      %v1447 = vld [vmem:[%s1442 + $0x10] sm:$0xf]
      %v1448 = vld [vmem:[%s1442 + $0x14] sm:$0xf]
      %v1449 = vld [vmem:[%s1442 + $0x18] sm:$0xf]
      %v1450 = vld [vmem:[%s1442 + $0x1c] sm:$0xf]
      %v1451 = vld [vmem:[%s1442 + $0x20] sm:$0xf]
      %v1452 = vld [vmem:[%s1442 + $0x24] sm:$0xf]
      %v1453 = vld [vmem:[%s1442 + $0x28] sm:$0xf]
      %v1454 = vld [vmem:[%s1442 + $0x2c] sm:$0xf]
      %v1455 = vld [vmem:[%s1442 + $0x30] sm:$0xf]
      %v1456 = vld [vmem:[%s1442 + $0x34] sm:$0xf]
      %v1457 = vld [vmem:[%s1442 + $0x38] sm:$0xf]
      %v1458 = vld [vmem:[%s1442 + $0x3c] sm:$0xf]
      %v1459 = vld [vmem:[%s1442 + $0x40] sm:$0xf]
      %v1460 = vld [vmem:[%s1442 + $0x44] sm:$0xf]
      %v1461 = vld [vmem:[%s1442 + $0x48] sm:$0xf]
      %v1462 = vld [vmem:[%s1442 + $0x4c] sm:$0xf]
      %v1463 = vld [vmem:[%s1442 + $0x50] sm:$0xf]
      %v1464 = vld [vmem:[%s1442 + $0x54] sm:$0xf]
      %v1465 = vld [vmem:[%s1442 + $0x58] sm:$0xf]
      %v1466 = vld [vmem:[%s1442 + $0x5c] sm:$0xf]
      %v1467 = vld [vmem:[%s1442 + $0x60] sm:$0xf]
      %v1468 = vld [vmem:[%s1442 + $0x64] sm:$0xf]
      %v1469 = vld [vmem:[%s1442 + $0x68] sm:$0xf]
      %v1470 = vld [vmem:[%s1442 + $0x6c] sm:$0xf]
      %v1471 = vld [vmem:[%s1442 + $0x70] sm:$0xf]
      %v1472 = vld [vmem:[%s1442 + $0x74] sm:$0xf]
      %v1473 = vld [vmem:[%s1442 + $0x78] sm:$0xf]
      %v1474 = vld [vmem:[%s1442 + $0x7c] sm:$0xf]
      %v1507 = vunpack.c.l.b16 %v1443
      %v1508 = vunpack.c.l.b16 %v1444
      %v1509 = vunpack.c.l.b16 %v1445
      %v1510 = vunpack.c.l.b16 %v1446
      %v1511 = vunpack.c.l.b16 %v1447
      %v1512 = vunpack.c.l.b16 %v1448
      %v1513 = vunpack.c.l.b16 %v1449
      %v1514 = vunpack.c.l.b16 %v1450
      %v1515 = vunpack.c.l.b16 %v1451
      %v1516 = vunpack.c.l.b16 %v1452
      %v1517 = vunpack.c.l.b16 %v1453
      %v1518 = vunpack.c.l.b16 %v1454
      %v1519 = vunpack.c.l.b16 %v1455
      %v1520 = vunpack.c.l.b16 %v1456
      %v1521 = vunpack.c.l.b16 %v1457
      %v1522 = vunpack.c.l.b16 %v1458
      %v1523 = vunpack.c.l.b16 %v1459
      %v1524 = vunpack.c.l.b16 %v1460
      %v1525 = vunpack.c.l.b16 %v1461
      %v1526 = vunpack.c.l.b16 %v1462
      %v1527 = vunpack.c.l.b16 %v1463
      %v1528 = vunpack.c.l.b16 %v1464
      %v1529 = vunpack.c.l.b16 %v1465
      %v1530 = vunpack.c.l.b16 %v1466
      %v1531 = vunpack.c.l.b16 %v1467
      %v1532 = vunpack.c.l.b16 %v1468
      %v1533 = vunpack.c.l.b16 %v1469
      %v1534 = vunpack.c.l.b16 %v1470
      %v1535 = vunpack.c.l.b16 %v1471
      %v1536 = vunpack.c.l.b16 %v1472
      %v1537 = vunpack.c.l.b16 %v1473
      %v1538 = vunpack.c.l.b16 %v1474
      %v1539 = vpack.c.b16 %v1508, %v1507
      %v1540 = vpack.c.b16 %v1510, %v1509
      %v1541 = vpack.c.b16 %v1512, %v1511
      %v1542 = vpack.c.b16 %v1514, %v1513
      %v1543 = vpack.c.b16 %v1516, %v1515
      %v1544 = vpack.c.b16 %v1518, %v1517
      %v1545 = vpack.c.b16 %v1520, %v1519
      %v1546 = vpack.c.b16 %v1522, %v1521
      %v1547 = vpack.c.b16 %v1524, %v1523
      %v1548 = vpack.c.b16 %v1526, %v1525
      %v1549 = vpack.c.b16 %v1528, %v1527
      %v1550 = vpack.c.b16 %v1530, %v1529
      %v1551 = vpack.c.b16 %v1532, %v1531
      %v1552 = vpack.c.b16 %v1534, %v1533
      %v1553 = vpack.c.b16 %v1536, %v1535
      %v1554 = vpack.c.b16 %v1538, %v1537
      %1571 = vmatprep.subr.bf16.mxu0 0
      %1572 = vmatpush1.bf16.msra.mxu0 %v1539
      %1573 = vmatprep.subr.bf16.mxu0 0
      %1574 = vmatpush1.bf16.msra.mxu0 %v1540
      %1575 = vmatprep.subr.bf16.mxu0 0
      %1576 = vmatpush1.bf16.msra.mxu0 %v1541
      %1577 = vmatprep.subr.bf16.mxu0 0
      %1578 = vmatpush1.bf16.msra.mxu0 %v1542
      %1579 = vmatprep.subr.bf16.mxu0 0
      %1580 = vmatpush1.bf16.msra.mxu0 %v1543
      %1581 = vmatprep.subr.bf16.mxu0 0
      %1582 = vmatpush1.bf16.msra.mxu0 %v1544
      %1583 = vmatprep.subr.bf16.mxu0 0
      %1584 = vmatpush1.bf16.msra.mxu0 %v1545
      %1585 = vmatprep.subr.bf16.mxu0 0
      %1586 = vmatpush1.bf16.msra.mxu0 %v1546
      %1587 = vmatprep.subr.bf16.mxu0 0
      %1588 = vmatpush1.bf16.msra.mxu0 %v1547
      %1589 = vmatprep.subr.bf16.mxu0 0
      %1590 = vmatpush1.bf16.msra.mxu0 %v1548
      %1591 = vmatprep.subr.bf16.mxu0 0
      %1592 = vmatpush1.bf16.msra.mxu0 %v1549
      %1593 = vmatprep.subr.bf16.mxu0 0
      %1594 = vmatpush1.bf16.msra.mxu0 %v1550
      %1595 = vmatprep.subr.bf16.mxu0 0
      %1596 = vmatpush1.bf16.msra.mxu0 %v1551
      %1597 = vmatprep.subr.bf16.mxu0 0
      %1598 = vmatpush1.bf16.msra.mxu0 %v1552
      %1599 = vmatprep.subr.bf16.mxu0 0
      %1600 = vmatpush1.bf16.msra.mxu0 %v1553
      %1601 = vmatprep.subr.bf16.mxu0 0
      %1602 = vmatpush1.bf16.msra.mxu0 %v1554
      %1603 = vmatprep.mubr.bf16.mxu0 %v585
      %1604 = vmatmul.mubr.bf16.gmra.mrb[0].mxu0 %v688
      %v1605 = vpop.f32.mrb[0].mxu0
      %v1606 = vadd.f32 0.0, %v1605
      %v1607 = vpop.f32.mrb[0].mxu0
      %v1608 = vpop.f32.mrb[0].mxu0
      %v1609 = vadd.f32 0.0, %v1608
      %v1610 = vpop.f32.mrb[0].mxu0
      %1611 = vmatprep.mubr.bf16.mxu0 %v586
      %1612 = vmatmul.mubr.bf16.gmra.mrb[0].mxu0 %v689
      %v1613 = vpop.f32.mrb[0].mxu0
      %v1614 = vadd.f32 0.0, %v1613
      %v1615 = vpop.f32.mrb[0].mxu0
      %v1616 = vpop.f32.mrb[0].mxu0
      %v1617 = vadd.f32 0.0, %v1616
      %v1618 = vpop.f32.mrb[0].mxu0
      %1619 = vmatprep.mubr.bf16.mxu0 %v587
      %1620 = vmatmul.mubr.bf16.gmra.mrb[0].mxu0 %v690
      %v1621 = vpop.f32.mrb[0].mxu0
      %v1622 = vadd.f32 0.0, %v1621
      %v1623 = vpop.f32.mrb[0].mxu0
      %v1624 = vpop.f32.mrb[0].mxu0
      %v1625 = vadd.f32 0.0, %v1624
      %v1626 = vpop.f32.mrb[0].mxu0
      %1627 = vmatprep.mubr.bf16.mxu0 %v588
      %1628 = vmatmul.mubr.bf16.gmra.mrb[0].mxu0 %v691
      %v1629 = vpop.f32.mrb[0].mxu0
      %v1630 = vadd.f32 0.0, %v1629
      %v1631 = vpop.f32.mrb[0].mxu0
      %v1632 = vpop.f32.mrb[0].mxu0
      %v1633 = vadd.f32 0.0, %v1632
      %v1634 = vpop.f32.mrb[0].mxu0
      %1635 = vmatprep.mubr.bf16.mxu0 %v589
      %1636 = vmatmul.mubr.bf16.gmra.mrb[0].mxu0 %v692
      %v1637 = vpop.f32.mrb[0].mxu0
      %v1638 = vadd.f32 0.0, %v1637
      %v1639 = vpop.f32.mrb[0].mxu0
      %v1640 = vpop.f32.mrb[0].mxu0
      %v1641 = vadd.f32 0.0, %v1640
      %v1642 = vpop.f32.mrb[0].mxu0
      %1643 = vmatprep.mubr.bf16.mxu0 %v590
      %1644 = vmatmul.mubr.bf16.gmra.mrb[0].mxu0 %v693
      %v1645 = vpop.f32.mrb[0].mxu0
      %v1646 = vadd.f32 0.0, %v1645
      %v1647 = vpop.f32.mrb[0].mxu0
      %v1648 = vpop.f32.mrb[0].mxu0
      %v1649 = vadd.f32 0.0, %v1648
      %v1650 = vpop.f32.mrb[0].mxu0
      %1651 = vmatprep.mubr.bf16.mxu0 %v591
      %1652 = vmatmul.mubr.bf16.gmra.mrb[0].mxu0 %v694
      %v1653 = vpop.f32.mrb[0].mxu0
      %v1654 = vadd.f32 0.0, %v1653
      %v1655 = vpop.f32.mrb[0].mxu0
      %v1656 = vpop.f32.mrb[0].mxu0
      %v1657 = vadd.f32 0.0, %v1656
      %v1658 = vpop.f32.mrb[0].mxu0
      %1659 = vmatprep.mubr.bf16.mxu0 %v592
      %1660 = vmatmul.mubr.bf16.gmra.mrb[0].mxu0 %v695
      %v1661 = vpop.f32.mrb[0].mxu0
      %v1662 = vadd.f32 0.0, %v1661
      %v1663 = vpop.f32.mrb[0].mxu0
      %v1664 = vpop.f32.mrb[0].mxu0
      %v1665 = vadd.f32 0.0, %v1664
      %v1666 = vpop.f32.mrb[0].mxu0
      %1667 = vdwg.mxu0
      %v1668 = vadd.f32 %v1426, %v1606
      %v1669 = vadd.f32 %v1427, %v1609
      %v1670 = vadd.f32 %v1428, %v1614
      %v1671 = vadd.f32 %v1429, %v1617
      %v1672 = vadd.f32 %v1430, %v1622
      %v1673 = vadd.f32 %v1431, %v1625
      %v1674 = vadd.f32 %v1432, %v1630
      %v1675 = vadd.f32 %v1433, %v1633
      %v1676 = vadd.f32 %v1434, %v1638
      %v1677 = vadd.f32 %v1435, %v1641
      %v1678 = vadd.f32 %v1436, %v1646
      %v1679 = vadd.f32 %v1437, %v1649
      %v1680 = vadd.f32 %v1438, %v1654
      %v1681 = vadd.f32 %v1439, %v1657
      %v1682 = vadd.f32 %v1440, %v1662
      %v1683 = vadd.f32 %v1441, %v1665
      %s1684 = scalar_lea.vmem %s5, 512
      %v1685 = vld [vmem:[%s1684] sm:$0xf]
      %v1686 = vld [vmem:[%s1684 + $0x4] sm:$0xf]
      %v1687 = vld [vmem:[%s1684 + $0x8] sm:$0xf]
      %v1688 = vld [vmem:[%s1684 + $0xc] sm:$0xf]
      %v1689 = vld [vmem:[%s1684 + $0x10] sm:$0xf]
      %v1690 = vld [vmem:[%s1684 + $0x14] sm:$0xf]
      %v1691 = vld [vmem:[%s1684 + $0x18] sm:$0xf]
      %v1692 = vld [vmem:[%s1684 + $0x1c] sm:$0xf]
      %v1693 = vld [vmem:[%s1684 + $0x20] sm:$0xf]
      %v1694 = vld [vmem:[%s1684 + $0x24] sm:$0xf]
      %v1695 = vld [vmem:[%s1684 + $0x28] sm:$0xf]
      %v1696 = vld [vmem:[%s1684 + $0x2c] sm:$0xf]
      %v1697 = vld [vmem:[%s1684 + $0x30] sm:$0xf]
      %v1698 = vld [vmem:[%s1684 + $0x34] sm:$0xf]
      %v1699 = vld [vmem:[%s1684 + $0x38] sm:$0xf]
      %v1700 = vld [vmem:[%s1684 + $0x3c] sm:$0xf]
      %v1717 = vunpack.c.l.b16 %v1685
      %v1718 = vunpack.c.l.b16 %v1686
      %v1719 = vunpack.c.l.b16 %v1687
      %v1720 = vunpack.c.l.b16 %v1688
      %v1721 = vunpack.c.l.b16 %v1689
      %v1722 = vunpack.c.l.b16 %v1690
      %v1723 = vunpack.c.l.b16 %v1691
      %v1724 = vunpack.c.l.b16 %v1692
      %v1725 = vunpack.c.l.b16 %v1693
      %v1726 = vunpack.c.l.b16 %v1694
      %v1727 = vunpack.c.l.b16 %v1695
      %v1728 = vunpack.c.l.b16 %v1696
      %v1729 = vunpack.c.l.b16 %v1697
      %v1730 = vunpack.c.l.b16 %v1698
      %v1731 = vunpack.c.l.b16 %v1699
      %v1732 = vunpack.c.l.b16 %v1700
      %v1733 = vpack.c.b16 %v1718, %v1717
      %v1734 = vpack.c.b16 %v1720, %v1719
      %v1735 = vpack.c.b16 %v1722, %v1721
      %v1736 = vpack.c.b16 %v1724, %v1723
      %v1737 = vpack.c.b16 %v1726, %v1725
      %v1738 = vpack.c.b16 %v1728, %v1727
      %v1739 = vpack.c.b16 %v1730, %v1729
      %v1740 = vpack.c.b16 %v1732, %v1731
      %1749 = vmatprep.subr.bf16.mxu0 0
      %1750 = vmatpush1.bf16.msra.mxu0 %v1733
      %1751 = vmatprep.subr.bf16.mxu0 0
      %1752 = vmatpush1.bf16.msra.mxu0 %v1734
      %1753 = vmatprep.subr.bf16.mxu0 0
      %1754 = vmatpush1.bf16.msra.mxu0 %v1735
      %1755 = vmatprep.subr.bf16.mxu0 0
      %1756 = vmatpush1.bf16.msra.mxu0 %v1736
      %1757 = vmatprep.subr.bf16.mxu0 0
      %1758 = vmatpush1.bf16.msra.mxu0 %v1737
      %1759 = vmatprep.subr.bf16.mxu0 0
      %1760 = vmatpush1.bf16.msra.mxu0 %v1738
      %1761 = vmatprep.subr.bf16.mxu0 0
      %1762 = vmatpush1.bf16.msra.mxu0 %v1739
      %1763 = vmatprep.subr.bf16.mxu0 0
      %1764 = vmatpush1.bf16.msra.mxu0 %v1740
      %1765 = vmatprep.subr.bf16.mxu0 0
      %1766 = vmatpush1.bf16.msra.mxu0 0
      %1767 = vmatprep.subr.bf16.mxu0 0
      %1768 = vmatpush1.bf16.msra.mxu0 0
      %1769 = vmatprep.subr.bf16.mxu0 0
      %1770 = vmatpush1.bf16.msra.mxu0 0
      %1771 = vmatprep.subr.bf16.mxu0 0
      %1772 = vmatpush1.bf16.msra.mxu0 0
      %1773 = vmatprep.subr.bf16.mxu0 0
      %1774 = vmatpush1.bf16.msra.mxu0 0
      %1775 = vmatprep.subr.bf16.mxu0 0
      %1776 = vmatpush1.bf16.msra.mxu0 0
      %1777 = vmatprep.subr.bf16.mxu0 0
      %1778 = vmatpush1.bf16.msra.mxu0 0
      %1779 = vmatprep.subr.bf16.mxu0 0
      %1780 = vmatpush1.bf16.msra.mxu0 0
      %1781 = vmatprep.mubr.bf16.mxu0 0
      %1782 = vmatmul.mubr.bf16.gmra.mrb[0].mxu0 %v741
      %v1783 = vpop.f32.mrb[0].mxu0
      %v1784 = vadd.f32 0.0, %v1783
      %v1785 = vpop.f32.mrb[0].mxu0
      %v1786 = vpop.f32.mrb[0].mxu0
      %v1787 = vadd.f32 0.0, %v1786
      %v1788 = vpop.f32.mrb[0].mxu0
      %1789 = vmatprep.mubr.bf16.mxu0 0
      %1790 = vmatmul.mubr.bf16.gmra.mrb[0].mxu0 %v742
      %v1791 = vpop.f32.mrb[0].mxu0
      %v1792 = vadd.f32 0.0, %v1791
      %v1793 = vpop.f32.mrb[0].mxu0
      %v1794 = vpop.f32.mrb[0].mxu0
      %v1795 = vadd.f32 0.0, %v1794
      %v1796 = vpop.f32.mrb[0].mxu0
      %1797 = vmatprep.mubr.bf16.mxu0 0
      %1798 = vmatmul.mubr.bf16.gmra.mrb[0].mxu0 %v743
      %v1799 = vpop.f32.mrb[0].mxu0
      %v1800 = vadd.f32 0.0, %v1799
      %v1801 = vpop.f32.mrb[0].mxu0
      %v1802 = vpop.f32.mrb[0].mxu0
      %v1803 = vadd.f32 0.0, %v1802
      %v1804 = vpop.f32.mrb[0].mxu0
      %1805 = vmatprep.mubr.bf16.mxu0 0
      %1806 = vmatmul.mubr.bf16.gmra.mrb[0].mxu0 %v744
      %v1807 = vpop.f32.mrb[0].mxu0
      %v1808 = vadd.f32 0.0, %v1807
      %v1809 = vpop.f32.mrb[0].mxu0
      %v1810 = vpop.f32.mrb[0].mxu0
      %v1811 = vadd.f32 0.0, %v1810
      %v1812 = vpop.f32.mrb[0].mxu0
      %1813 = vmatprep.mubr.bf16.mxu0 0
      %1814 = vmatmul.mubr.bf16.gmra.mrb[0].mxu0 %v745
      %v1815 = vpop.f32.mrb[0].mxu0
      %v1816 = vadd.f32 0.0, %v1815
      %v1817 = vpop.f32.mrb[0].mxu0
      %v1818 = vpop.f32.mrb[0].mxu0
      %v1819 = vadd.f32 0.0, %v1818
      %v1820 = vpop.f32.mrb[0].mxu0
      %1821 = vmatprep.mubr.bf16.mxu0 0
      %1822 = vmatmul.mubr.bf16.gmra.mrb[0].mxu0 %v746
      %v1823 = vpop.f32.mrb[0].mxu0
      %v1824 = vadd.f32 0.0, %v1823
      %v1825 = vpop.f32.mrb[0].mxu0
      %v1826 = vpop.f32.mrb[0].mxu0
      %v1827 = vadd.f32 0.0, %v1826
      %v1828 = vpop.f32.mrb[0].mxu0
      %1829 = vmatprep.mubr.bf16.mxu0 0
      %1830 = vmatmul.mubr.bf16.gmra.mrb[0].mxu0 %v747
      %v1831 = vpop.f32.mrb[0].mxu0
      %v1832 = vadd.f32 0.0, %v1831
      %v1833 = vpop.f32.mrb[0].mxu0
      %v1834 = vpop.f32.mrb[0].mxu0
      %v1835 = vadd.f32 0.0, %v1834
      %v1836 = vpop.f32.mrb[0].mxu0
      %1837 = vmatprep.mubr.bf16.mxu0 0
      %1838 = vmatmul.mubr.bf16.gmra.mrb[0].mxu0 %v748
      %v1839 = vpop.f32.mrb[0].mxu0
      %v1840 = vadd.f32 0.0, %v1839
      %v1841 = vpop.f32.mrb[0].mxu0
      %v1842 = vpop.f32.mrb[0].mxu0
      %v1843 = vadd.f32 0.0, %v1842
      %v1844 = vpop.f32.mrb[0].mxu0
      %1845 = vdwg.mxu0
      %v1846 = vadd.f32 %v1668, %v1784
      %v1847 = vadd.f32 %v1669, %v1787
      %v1848 = vadd.f32 %v1670, %v1792
      %v1849 = vadd.f32 %v1671, %v1795
      %v1850 = vadd.f32 %v1672, %v1800
      %v1851 = vadd.f32 %v1673, %v1803
      %v1852 = vadd.f32 %v1674, %v1808
      %v1853 = vadd.f32 %v1675, %v1811
      %v1854 = vadd.f32 %v1676, %v1816
      %v1855 = vadd.f32 %v1677, %v1819
      %v1856 = vadd.f32 %v1678, %v1824
      %v1857 = vadd.f32 %v1679, %v1827
      %v1858 = vadd.f32 %v1680, %v1832
      %v1859 = vadd.f32 %v1681, %v1835
      %v1860 = vadd.f32 %v1682, %v1840
      %v1861 = vadd.f32 %v1683, %v1843
      %v1862 = vpack.c.bf16 %v1847, %v1846
      %v1863 = vpack.c.bf16 %v1849, %v1848
      %v1864 = vpack.c.bf16 %v1851, %v1850
      %v1865 = vpack.c.bf16 %v1853, %v1852
      %v1866 = vpack.c.bf16 %v1855, %v1854
      %v1867 = vpack.c.bf16 %v1857, %v1856
      %v1868 = vpack.c.bf16 %v1859, %v1858
      %v1869 = vpack.c.bf16 %v1861, %v1860
      %v1878 = vunpack.c.l.b16 %v1862
      %v1879 = vunpack.c.h.b16 %v1862
      %v1880 = vunpack.c.l.b16 %v1863
      %v1881 = vunpack.c.h.b16 %v1863
      %v1882 = vunpack.c.l.b16 %v1864
      %v1883 = vunpack.c.h.b16 %v1864
      %v1884 = vunpack.c.l.b16 %v1865
      %v1885 = vunpack.c.h.b16 %v1865
      %v1886 = vunpack.c.l.b16 %v1866
      %v1887 = vunpack.c.h.b16 %v1866
      %v1888 = vunpack.c.l.b16 %v1867
      %v1889 = vunpack.c.h.b16 %v1867
      %v1890 = vunpack.c.l.b16 %v1868
      %v1891 = vunpack.c.h.b16 %v1868
      %v1892 = vunpack.c.l.b16 %v1869
      %v1893 = vunpack.c.h.b16 %v1869
      %v1894 = vpack.c.b16 %v1878, %v1878
      %v1895 = vpack.c.b16 %v1879, %v1879
      %v1896 = vpack.c.b16 %v1880, %v1880
      %v1897 = vpack.c.b16 %v1881, %v1881
      %v1898 = vpack.c.b16 %v1882, %v1882
      %v1899 = vpack.c.b16 %v1883, %v1883
      %v1900 = vpack.c.b16 %v1884, %v1884
      %v1901 = vpack.c.b16 %v1885, %v1885
      %v1902 = vpack.c.b16 %v1886, %v1886
      %v1903 = vpack.c.b16 %v1887, %v1887
      %v1904 = vpack.c.b16 %v1888, %v1888
      %v1905 = vpack.c.b16 %v1889, %v1889
      %v1906 = vpack.c.b16 %v1890, %v1890
      %v1907 = vpack.c.b16 %v1891, %v1891
      %v1908 = vpack.c.b16 %v1892, %v1892
      %v1909 = vpack.c.b16 %v1893, %v1893
      %1926 = vst [vmem:[%s458] sm:$0xf] %v1894
      %1927 = vst [vmem:[%s458 + $0x4] sm:$0xf] %v1895
      %1928 = vst [vmem:[%s458 + $0x8] sm:$0xf] %v1896
      %1929 = vst [vmem:[%s458 + $0xc] sm:$0xf] %v1897
      %1930 = vst [vmem:[%s458 + $0x10] sm:$0xf] %v1898
      %1931 = vst [vmem:[%s458 + $0x14] sm:$0xf] %v1899
      %1932 = vst [vmem:[%s458 + $0x18] sm:$0xf] %v1900
      %1933 = vst [vmem:[%s458 + $0x1c] sm:$0xf] %v1901
      %1934 = vst [vmem:[%s458 + $0x20] sm:$0xf] %v1902
      %1935 = vst [vmem:[%s458 + $0x24] sm:$0xf] %v1903
      %1936 = vst [vmem:[%s458 + $0x28] sm:$0xf] %v1904
      %1937 = vst [vmem:[%s458 + $0x2c] sm:$0xf] %v1905
      %1938 = vst [vmem:[%s458 + $0x30] sm:$0xf] %v1906
      %1939 = vst [vmem:[%s458 + $0x34] sm:$0xf] %v1907
      %1940 = vst [vmem:[%s458 + $0x38] sm:$0xf] %v1908
      %1941 = vst [vmem:[%s458 + $0x3c] sm:$0xf] %v1909
      %v1942 = vadd.f32 %v1846, %v1847
      %v1943 = vadd.f32 %v1942, %v1848
      %v1944 = vadd.f32 %v1943, %v1849
      %v1945 = vadd.f32 %v1944, %v1850
      %v1946 = vadd.f32 %v1945, %v1851
      %v1947 = vadd.f32 %v1946, %v1852
      %v1948 = vadd.f32 %v1947, %v1853
      %v1949 = vadd.f32 %v1948, %v1854
      %v1950 = vadd.f32 %v1949, %v1855
      %v1951 = vadd.f32 %v1950, %v1856
      %v1952 = vadd.f32 %v1951, %v1857
      %v1953 = vadd.f32 %v1952, %v1858
      %v1954 = vadd.f32 %v1953, %v1859
      %v1955 = vadd.f32 %v1954, %v1860
      %v1956 = vadd.f32 %v1955, %v1861
      %v1957 = vrot.slane %v1956, 4
      %v1958 = vadd.f32 %v1956, %v1957
      %v1959 = vrot.slane %v1958, 2
      %v1960 = vadd.f32 %v1958, %v1959
      %v1961 = vrot.slane %v1960, 1
      %v1962 = vadd.f32 %v1960, %v1961
      %v1963 = vmul.f32 %v1846, %v1846
      %v1964 = vmul.f32 %v1847, %v1847
      %v1965 = vmul.f32 %v1848, %v1848
      %v1966 = vmul.f32 %v1849, %v1849
      %v1967 = vmul.f32 %v1850, %v1850
      %v1968 = vmul.f32 %v1851, %v1851
      %v1969 = vmul.f32 %v1852, %v1852
      %v1970 = vmul.f32 %v1853, %v1853
      %v1971 = vmul.f32 %v1854, %v1854
      %v1972 = vmul.f32 %v1855, %v1855
      %v1973 = vmul.f32 %v1856, %v1856
      %v1974 = vmul.f32 %v1857, %v1857
      %v1975 = vmul.f32 %v1858, %v1858
      %v1976 = vmul.f32 %v1859, %v1859
      %v1977 = vmul.f32 %v1860, %v1860
      %v1978 = vmul.f32 %v1861, %v1861
      %v1979 = vadd.f32 %v1963, %v1964
      %v1980 = vadd.f32 %v1979, %v1965
      %v1981 = vadd.f32 %v1980, %v1966
      %v1982 = vadd.f32 %v1981, %v1967
      %v1983 = vadd.f32 %v1982, %v1968
      %v1984 = vadd.f32 %v1983, %v1969
      %v1985 = vadd.f32 %v1984, %v1970
      %v1986 = vadd.f32 %v1985, %v1971
      %v1987 = vadd.f32 %v1986, %v1972
      %v1988 = vadd.f32 %v1987, %v1973
      %v1989 = vadd.f32 %v1988, %v1974
      %v1990 = vadd.f32 %v1989, %v1975
      %v1991 = vadd.f32 %v1990, %v1976
      %v1992 = vadd.f32 %v1991, %v1977
      %v1993 = vadd.f32 %v1992, %v1978
      %v1994 = vrot.slane %v1993, 4
      %v1995 = vadd.f32 %v1993, %v1994
      %v1996 = vrot.slane %v1995, 2
      %v1997 = vadd.f32 %v1995, %v1996
      %v1998 = vrot.slane %v1997, 1
      %v1999 = vadd.f32 %v1997, %v1998
      %vm2000 = vcmask 1040384
      %v2001 = vsel %vm2000, %v1962, %v1999
      %2002 = vst [vmem:[%s465] sm:$0x3] %v2001
      %s2003 = smul.u32 8, %s24
      %p2004 = scmp.lt.s32.totalorder %s23, 1
      %s2005 = scalar_select %p2004, %s23, 1
      %p2006 = scmp.lt.s32.totalorder %s2003, 15
      %s2007 = scalar_select %p2006, %s2003, 15
      %s2008 = smul.addr %s2007, 2
      %s2009 = smul.addr %s2005, 32
      %s2010 = sadd.s32 %s2008, %s2009
      %s2011 = smul.addr %s2010, 4
      %s2012 = scalar_lea.vmem %s6, %s2011
      %s2013 = smul.u32 %s23, 2
      %s2014 = sadd.s32 %s2013, %s24
      %p2015 = scmp.lt.s32.totalorder %s2014, 3
      %s2016 = scalar_select %p2015, %s2014, 3
      %s2017 = smul.addr %s2016, 2
      %s2018 = scalar_lea.vmem %s7, %s2017
      // Predicated region
      $region45: #{resnet_block_forward.4} parent=43 // pred_check
        %p2019 = pneg %p214
      $region46: #{resnet_block_forward.4} parent=43 // pred_check_branch
        %2021 = sbr.rel (%p2019) target = $region48
      $region47: #{resnet_block_forward.4} parent=43 // pred_region
        %s2022 = smul.u32 8, %s24
      $region48: #{resnet_block_forward.4} parent=43 // pred_fallthru
        _
      // Predicated region
      $region49: #{resnet_block_forward.4} parent=43 // pred_check
        %p2023 = pneg %p244
      $region50: #{resnet_block_forward.4} parent=43 // pred_check_branch
        %2025 = sbr.rel (%p2023) target = $region52
      $region51: #{resnet_block_forward.4} parent=43 // pred_region
        %s2026 = smul.u32 %s23, 2
        %s2027 = sadd.s32 %s2026, %s24
      $region52: #{resnet_block_forward.4} parent=43 // pred_fallthru
        _
    $region44: #{resnet_block_forward.4} parent=5 // pred_fallthru
      _
    %p2028 = scmp.le.s32.totalorder 2, %s14
    // Predicated region
    $region53: #{resnet_block_forward.4} parent=5 // pred_check
      %p2029 = pneg %p2028
    $region54: #{resnet_block_forward.4} parent=5 // pred_check_branch
      %2031 = sbr.rel (%p2029) target = $region56
    $region55: #{resnet_block_forward.4} parent=5 // pred_region
      %s2032 = ssub.s32 %s14, 2
      // Predicated region
      $region57: #{resnet_block_forward.4} parent=55 // pred_check
        %p2033 = pneg %p220
      $region58: #{resnet_block_forward.4} parent=55 // pred_check_branch
        %2035 = sbr.rel (%p2033) target = $region60
      $region59: #{resnet_block_forward.4} parent=55 // pred_region
        %s2036 = smul.u32 8, %s26
        %p2037 = scmp.lt.s32.totalorder %s25, 1
        %s2038 = scalar_select %p2037, %s25, 1
        %p2039 = scmp.lt.s32.totalorder %s2036, 15
        %s2040 = scalar_select %p2039, %s2036, 15
        %s2041 = smul.addr %s2040, 2
        %s2042 = smul.addr %s2038, 32
        %s2043 = sadd.s32 %s2041, %s2042
        %s2044 = smul.addr %s2043, 4
        %s2045 = scalar_lea.vmem %s6, %s2044
      $region60: #{resnet_block_forward.4} parent=55 // pred_fallthru
        _
      // Predicated region
      $region61: #{resnet_block_forward.4} parent=55 // pred_check
        %p2046 = pneg %p250
      $region62: #{resnet_block_forward.4} parent=55 // pred_check_branch
        %2048 = sbr.rel (%p2046) target = $region64
      $region63: #{resnet_block_forward.4} parent=55 // pred_region
        %s2049 = smul.u32 %s25, 2
        %s2050 = sadd.s32 %s2049, %s26
        %p2051 = scmp.lt.s32.totalorder %s2050, 3
        %s2052 = scalar_select %p2051, %s2050, 3
        %s2053 = smul.addr %s2052, 2
        %s2054 = scalar_lea.vmem %s7, %s2053
      $region64: #{resnet_block_forward.4} parent=55 // pred_fallthru
        _
    $region56: #{resnet_block_forward.4} parent=5 // pred_fallthru
      _
  $region6: #{resnet_block_forward.4} parent=0 // loop_footer
    %s18 = sadd.s32 1, %s14
  $region7: #{resnet_block_forward.4} parent=0 // loop_footer_branch
    %13 = sbr.rel target = $region3
  $region8: #{resnet_block_forward.4} parent=0 // loop_exit
    _

// kernel: resnet_block_forward.3
$region0: #{resnet_block_forward.3}
  #allocation0 [shape = 'u32[]', space=smem, size = 0x4, offset = 0x4, fixed_abs, tag = 'smem constant byte address 0x4 - core index']
  #allocation1 [shape = 'u32[144,128]{1,0:T(1,128)}', space=vmem, size = 0x12000, scoped, tag = 'internal scratch']
  %s0 = inlined_call_operand.vmem [shape: f32[2,16,16,128], index: 0, kind: input, shape index: {}, may-alias: {0,1,2}]
  %s1 = inlined_call_operand.vmem [shape: f32[2,16,16,128], index: 1, kind: input, shape index: {}, may-alias: {0,1,2}]
  %s2 = inlined_call_operand.vmem [shape: f32[2,16,16,128], index: 2, kind: input, shape index: {}, may-alias: {0,1,2}]
  %s3 = inlined_call_operand.vmem [shape: bf16[5,256,128], index: 3, kind: input, shape index: {}]
  %s4 = inlined_call_operand.vmem [shape: bf16[2,16,16,128], index: 4, kind: output, shape index: {0}]
  %s5 = inlined_call_operand.vmem [shape: f32[4,2,128], index: 5, kind: output, shape index: {1}]
  %6 = xla_tuple %s4, %s5
  %s7 = sld [smem:[#allocation0]]
  $region57: #{resnet_block_forward.3} parent=0
    _
  %s9 = ssub.s32 1, %s7
  %s10 = scalar_select 0, %s9, %s7
  loop: start=0, step=1, limit=6
  $region2: #{resnet_block_forward.3} parent=0 // loop_pre_header
    _
  $region3: #{resnet_block_forward.3} parent=0 // loop_header
    %s12 = sphi 0, %s16
    %p13 = scmp.ge.s32.totalorder %s12, 6
    %s19 = sphi 0, %s31
    %s20 = sphi 0, %s27
    %s21 = sphi 0, %s19
    %s22 = sphi 0, %s20
    %s23 = sphi 0, %s21
    %s24 = sphi 0, %s22
    %s44 = sphi 0, %s46
    %s47 = sphi 0, %s44
    %s48 = sphi 0, %s47
    %s64 = sphi 0, %s48
    %s72 = sphi 0, %s74
    %s75 = sphi 0, %s72
    %s76 = sphi 0, %s75
    %s92 = sphi 0, %s76
    %s108 = sphi 0, %s110
    %s111 = sphi 0, %s108
    %s112 = sphi 0, %s111
    %s128 = sphi 0, %s112
    %s132 = sphi 0, %s132
    %s134 = sphi 0, %s132
    %s135 = sphi 0, %s134
    %s149 = sphi 0, %s135
    %s157 = sphi 0, %s159
    %s160 = sphi 0, %s157
    %s161 = sphi 0, %s160
    %s177 = sphi 0, %s161
    %s187 = sphi 0, %s189
    %s190 = sphi 0, %s187
    %s191 = sphi 0, %s190
    %s207 = sphi 0, %s191
  $region4: #{resnet_block_forward.3} parent=0 // loop_header_branch
    %15 = sbr.rel (%p13) target = $region8
  $region5: #{resnet_block_forward.3} parent=0 // loop_body
    %s17 = ssub.s32 %s12, 1
    %s18 = ssub.s32 %s12, 2
    %s25 = sadd.s32 1, %s20
    %p26 = scmp.ge.s32.totalorder %s25, 2
    %s27 = scalar_select %p26, 0, %s25
    %s28 = sadd.s32 1, %s19
    %s29 = scalar_select %p26, %s28, %s19
    %p30 = scmp.ge.s32.totalorder %s29, 2
    %s31 = scalar_select %p30, 0, %s29
    %s32 = smul.u32 %s20, 8
    %s33 = ssub.s32 %s32, 1
    %p34 = scmp.gt.s32.totalorder %s33, 1
    %s35 = scalar_select %p34, %s33, 1
    %s36 = smul.u32 %s27, 8
    %s37 = ssub.s32 %s36, 1
    %p38 = scmp.gt.s32.totalorder %s37, 1
    %s39 = scalar_select %p38, %s37, 1
    %s40 = ssub.s32 %s19, %s31
    %s41 = ssub.s32 %s35, %s39
    %s42 = sor.u32 %s40, %s41
    %p43 = scmp.eq.s32.totalorder %s42, 0
    %s45 = sadd.s32 %s44, 1
    %s46 = scalar_select %p43, %s44, %s45
    %p49 = pneg %p43
    %p50 = scmp.eq.s32.totalorder %s12, 3
    %p51 = por %p49, %p50
    %p52 = scmp.ne.s32.totalorder %s44, %s47
    %p53 = scmp.eq.s32.totalorder %s12, 0
    %p54 = por %p52, %p53
    %p55 = scmp.ne.s32.totalorder %s44, %s47
    %p56 = scmp.eq.s32.totalorder %s17, 3
    %p57 = por %p55, %p56
    %p58 = scmp.ne.s32.totalorder %s47, %s48
    %p59 = scmp.eq.s32.totalorder %s17, 0
    %p60 = por %p58, %p59
    %p61 = scmp.ne.s32.totalorder %s47, %s48
    %p62 = scmp.eq.s32.totalorder %s18, 3
    %p63 = por %p61, %p62
    %p65 = scmp.ne.s32.totalorder %s48, %s64
    %p66 = scmp.eq.s32.totalorder %s18, 0
    %p67 = por %p65, %p66
    %s68 = ssub.s32 %s19, %s31
    %s69 = ssub.s32 %s20, %s27
    %s70 = sor.u32 %s68, %s69
    %p71 = scmp.eq.s32.totalorder %s70, 0
    %s73 = sadd.s32 %s72, 1
    %s74 = scalar_select %p71, %s72, %s73
    %p77 = pneg %p71
    %p78 = scmp.eq.s32.totalorder %s12, 3
    %p79 = por %p77, %p78
    %p80 = scmp.ne.s32.totalorder %s72, %s75
    %p81 = scmp.eq.s32.totalorder %s12, 0
    %p82 = por %p80, %p81
    %p83 = scmp.ne.s32.totalorder %s72, %s75
    %p84 = scmp.eq.s32.totalorder %s17, 3
    %p85 = por %p83, %p84
    %p86 = scmp.ne.s32.totalorder %s75, %s76
    %p87 = scmp.eq.s32.totalorder %s17, 0
    %p88 = por %p86, %p87
    %p89 = scmp.ne.s32.totalorder %s75, %s76
    %p90 = scmp.eq.s32.totalorder %s18, 3
    %p91 = por %p89, %p90
    %p93 = scmp.ne.s32.totalorder %s76, %s92
    %p94 = scmp.eq.s32.totalorder %s18, 0
    %p95 = por %p93, %p94
    %s96 = sadd.s32 %s20, 1
    %s97 = smul.u32 %s96, 8
    %p98 = scmp.lt.s32.totalorder %s97, 14
    %s99 = scalar_select %p98, %s97, 14
    %s100 = sadd.s32 %s27, 1
    %s101 = smul.u32 %s100, 8
    %p102 = scmp.lt.s32.totalorder %s101, 14
    %s103 = scalar_select %p102, %s101, 14
    %s104 = ssub.s32 %s19, %s31
    %s105 = ssub.s32 %s99, %s103
    %s106 = sor.u32 %s104, %s105
    %p107 = scmp.eq.s32.totalorder %s106, 0
    %s109 = sadd.s32 %s108, 1
    %s110 = scalar_select %p107, %s108, %s109
    %p113 = pneg %p107
    %p114 = scmp.eq.s32.totalorder %s12, 3
    %p115 = por %p113, %p114
    %p116 = scmp.ne.s32.totalorder %s108, %s111
    %p117 = scmp.eq.s32.totalorder %s12, 0
    %p118 = por %p116, %p117
    %p119 = scmp.ne.s32.totalorder %s108, %s111
    %p120 = scmp.eq.s32.totalorder %s17, 3
    %p121 = por %p119, %p120
    %p122 = scmp.ne.s32.totalorder %s111, %s112
    %p123 = scmp.eq.s32.totalorder %s17, 0
    %p124 = por %p122, %p123
    %p125 = scmp.ne.s32.totalorder %s111, %s112
    %p126 = scmp.eq.s32.totalorder %s18, 3
    %p127 = por %p125, %p126
    %p129 = scmp.ne.s32.totalorder %s112, %s128
    %p130 = scmp.eq.s32.totalorder %s18, 0
    %p131 = por %p129, %p130
    %s133 = sadd.s32 %s132, 1
    %p136 = scmp.eq.s32.totalorder %s12, 3
    %p137 = scmp.ne.s32.totalorder %s132, %s134
    %p138 = scmp.eq.s32.totalorder %s12, 0
    %p139 = por %p137, %p138
    %p140 = scmp.ne.s32.totalorder %s132, %s134
    %p141 = scmp.eq.s32.totalorder %s17, 3
    %p142 = por %p140, %p141
    %p143 = scmp.ne.s32.totalorder %s134, %s135
    %p144 = scmp.eq.s32.totalorder %s17, 0
    %p145 = por %p143, %p144
    %p146 = scmp.ne.s32.totalorder %s134, %s135
    %p147 = scmp.eq.s32.totalorder %s18, 3
    %p148 = por %p146, %p147
    %p150 = scmp.ne.s32.totalorder %s135, %s149
    %p151 = scmp.eq.s32.totalorder %s18, 0
    %p152 = por %p150, %p151
    %s153 = ssub.s32 %s19, %s31
    %s154 = ssub.s32 %s20, %s27
    %s155 = sor.u32 %s153, %s154
    %p156 = scmp.eq.s32.totalorder %s155, 0
    %s158 = sadd.s32 %s157, 1
    %s159 = scalar_select %p156, %s157, %s158
    %p162 = pneg %p156
    %p163 = scmp.eq.s32.totalorder %s12, 3
    %p164 = por %p162, %p163
    %p165 = scmp.ne.s32.totalorder %s157, %s160
    %p166 = scmp.eq.s32.totalorder %s12, 0
    %p167 = por %p165, %p166
    %p168 = scmp.ne.s32.totalorder %s157, %s160
    %p169 = scmp.eq.s32.totalorder %s17, 3
    %p170 = por %p168, %p169
    %p171 = scmp.ne.s32.totalorder %s160, %s161
    %p172 = scmp.eq.s32.totalorder %s17, 0
    %p173 = por %p171, %p172
    %p174 = scmp.ne.s32.totalorder %s160, %s161
    %p175 = scmp.eq.s32.totalorder %s18, 3
    %p176 = por %p174, %p175
    %p178 = scmp.ne.s32.totalorder %s161, %s177
    %p179 = scmp.eq.s32.totalorder %s18, 0
    %p180 = por %p178, %p179
    %s181 = smul.u32 %s19, 2
    %s182 = sadd.s32 %s181, %s20
    %s183 = smul.u32 %s31, 2
    %s184 = sadd.s32 %s183, %s27
    %s185 = ssub.s32 %s182, %s184
    %p186 = scmp.eq.s32.totalorder %s185, 0
    %s188 = sadd.s32 %s187, 1
    %s189 = scalar_select %p186, %s187, %s188
    %p192 = pneg %p186
    %p193 = scmp.eq.s32.totalorder %s12, 3
    %p194 = por %p192, %p193
    %p195 = scmp.ne.s32.totalorder %s187, %s190
    %p196 = scmp.eq.s32.totalorder %s12, 0
    %p197 = por %p195, %p196
    %p198 = scmp.ne.s32.totalorder %s187, %s190
    %p199 = scmp.eq.s32.totalorder %s17, 3
    %p200 = por %p198, %p199
    %p201 = scmp.ne.s32.totalorder %s190, %s191
    %p202 = scmp.eq.s32.totalorder %s17, 0
    %p203 = por %p201, %p202
    %p204 = scmp.ne.s32.totalorder %s190, %s191
    %p205 = scmp.eq.s32.totalorder %s18, 3
    %p206 = por %p204, %p205
    %p208 = scmp.ne.s32.totalorder %s191, %s207
    %p209 = scmp.eq.s32.totalorder %s18, 0
    %p210 = por %p208, %p209
    %p211 = scmp.le.s32.totalorder 1, %s12
    %p212 = scmp.lt.s32.totalorder %s12, 5
    %p213 = pnand %p211, %p212
    %p214 = pneg %p213
    // Predicated region
    $region9: #{resnet_block_forward.3} parent=5 // pred_check
      _
    $region10: #{resnet_block_forward.3} parent=5 // pred_check_branch
      %216 = sbr.rel (%p213) target = $region12
    $region11: #{resnet_block_forward.3} parent=5 // pred_region
      %s217 = ssub.s32 %s12, 1
      // Predicated region
      $region13: #{resnet_block_forward.3} parent=11 // pred_check
        %p218 = pneg %p145
      $region14: #{resnet_block_forward.3} parent=11 // pred_check_branch
        %220 = sbr.rel (%p218) target = $region16
      $region15: #{resnet_block_forward.3} parent=11 // pred_region
        _
      $region16: #{resnet_block_forward.3} parent=11 // pred_fallthru
        _
    $region12: #{resnet_block_forward.3} parent=5 // pred_fallthru
      _
    %p221 = scmp.lt.s32.totalorder %s12, 4
    // Predicated region
    $region17: #{resnet_block_forward.3} parent=5 // pred_check
      %p222 = pneg %p221
    $region18: #{resnet_block_forward.3} parent=5 // pred_check_branch
      %224 = sbr.rel (%p222) target = $region20
    $region19: #{resnet_block_forward.3} parent=5 // pred_region
      // Predicated region
      $region21: #{resnet_block_forward.3} parent=19 // pred_check
        %p225 = pneg %p54
      $region22: #{resnet_block_forward.3} parent=19 // pred_check_branch
        %227 = sbr.rel (%p225) target = $region24
      $region23: #{resnet_block_forward.3} parent=19 // pred_region
        %s228 = smul.u32 %s20, 8
        %s229 = ssub.s32 %s228, 1
        %p230 = scmp.gt.s32.totalorder %s229, 1
        %s231 = scalar_select %p230, %s229, 1
        %p232 = scmp.lt.s32.totalorder %s19, 1
        %s233 = scalar_select %p232, %s19, 1
        %p234 = scmp.lt.s32.totalorder %s231, 15
        %s235 = scalar_select %p234, %s231, 15
        %s236 = smul.addr %s235, 2
        %s237 = smul.addr %s233, 32
        %s238 = sadd.s32 %s236, %s237
        %s239 = smul.addr %s238, 8
        %s240 = scalar_lea.vmem %s0, %s239
        %s241 = smul.u32 %s20, 8
        %s242 = ssub.s32 %s241, 1
        %p243 = scmp.gt.s32.totalorder %s242, 1
        %s244 = scalar_select %p243, %s242, 1
      $region24: #{resnet_block_forward.3} parent=19 // pred_fallthru
        _
      // Predicated region
      $region25: #{resnet_block_forward.3} parent=19 // pred_check
        %p245 = pneg %p82
      $region26: #{resnet_block_forward.3} parent=19 // pred_check_branch
        %247 = sbr.rel (%p245) target = $region28
      $region27: #{resnet_block_forward.3} parent=19 // pred_region
        %s248 = smul.u32 8, %s20
        %p249 = scmp.lt.s32.totalorder %s19, 1
        %s250 = scalar_select %p249, %s19, 1
        %p251 = scmp.lt.s32.totalorder %s248, 15
        %s252 = scalar_select %p251, %s248, 15
        %s253 = smul.addr %s252, 2
        %s254 = smul.addr %s250, 32
        %s255 = sadd.s32 %s253, %s254
        %s256 = smul.addr %s255, 8
        %s257 = scalar_lea.vmem %s1, %s256
        %s258 = smul.u32 8, %s20
      $region28: #{resnet_block_forward.3} parent=19 // pred_fallthru
        _
      // Predicated region
      $region29: #{resnet_block_forward.3} parent=19 // pred_check
        %p259 = pneg %p118
      $region30: #{resnet_block_forward.3} parent=19 // pred_check_branch
        %261 = sbr.rel (%p259) target = $region32
      $region31: #{resnet_block_forward.3} parent=19 // pred_region
        %s262 = sadd.s32 %s20, 1
        %s263 = smul.u32 %s262, 8
        %p264 = scmp.lt.s32.totalorder %s263, 14
        %s265 = scalar_select %p264, %s263, 14
        %p266 = scmp.lt.s32.totalorder %s19, 1
        %s267 = scalar_select %p266, %s19, 1
        %p268 = scmp.lt.s32.totalorder %s265, 15
        %s269 = scalar_select %p268, %s265, 15
        %s270 = smul.addr %s269, 2
        %s271 = smul.addr %s267, 32
        %s272 = sadd.s32 %s270, %s271
        %s273 = smul.addr %s272, 8
        %s274 = scalar_lea.vmem %s2, %s273
        %s275 = sadd.s32 %s20, 1
        %s276 = smul.u32 %s275, 8
        %p277 = scmp.lt.s32.totalorder %s276, 14
        %s278 = scalar_select %p277, %s276, 14
      $region32: #{resnet_block_forward.3} parent=19 // pred_fallthru
        _
    $region20: #{resnet_block_forward.3} parent=5 // pred_fallthru
      _
    %p279 = scmp.le.s32.totalorder 1, %s12
    %p280 = scmp.lt.s32.totalorder %s12, 5
    %p281 = pnand %p279, %p280
    %p282 = pneg %p281
    // Predicated region
    $region33: #{resnet_block_forward.3} parent=5 // pred_check
      _
    $region34: #{resnet_block_forward.3} parent=5 // pred_check_branch
      %284 = sbr.rel (%p281) target = $region36
    $region35: #{resnet_block_forward.3} parent=5 // pred_region
      %s285 = ssub.s32 %s12, 1
      %s286 = smul.u32 %s22, 8
      %s287 = ssub.s32 %s286, 1
      %p288 = scmp.gt.s32.totalorder %s287, 1
      %s289 = scalar_select %p288, %s287, 1
      %p290 = scmp.lt.s32.totalorder %s21, 1
      %s291 = scalar_select %p290, %s21, 1
      %p292 = scmp.lt.s32.totalorder %s289, 15
      %s293 = scalar_select %p292, %s289, 15
      %s294 = smul.addr %s293, 2
      %s295 = smul.addr %s291, 32
      %s296 = sadd.s32 %s294, %s295
      %s297 = smul.addr %s296, 8
      %s298 = scalar_lea.vmem %s0, %s297
      %p299 = pneg %p60
      %p300 = pneg %p57
      %s301 = smul.u32 8, %s22
      %p302 = scmp.lt.s32.totalorder %s21, 1
      %s303 = scalar_select %p302, %s21, 1
      %p304 = scmp.lt.s32.totalorder %s301, 15
      %s305 = scalar_select %p304, %s301, 15
      %s306 = smul.addr %s305, 2
      %s307 = smul.addr %s303, 32
      %s308 = sadd.s32 %s306, %s307
      %s309 = smul.addr %s308, 8
      %s310 = scalar_lea.vmem %s1, %s309
      %p311 = pneg %p88
      %p312 = pneg %p85
      %s313 = sadd.s32 %s22, 1
      %s314 = smul.u32 %s313, 8
      %p315 = scmp.lt.s32.totalorder %s314, 14
      %s316 = scalar_select %p315, %s314, 14
      %p317 = scmp.lt.s32.totalorder %s21, 1
      %s318 = scalar_select %p317, %s21, 1
      %p319 = scmp.lt.s32.totalorder %s316, 15
      %s320 = scalar_select %p319, %s316, 15
      %s321 = smul.addr %s320, 2
      %s322 = smul.addr %s318, 32
      %s323 = sadd.s32 %s321, %s322
      %s324 = smul.addr %s323, 8
      %s325 = scalar_lea.vmem %s2, %s324
      %p326 = pneg %p124
      %p327 = pneg %p121
      %p328 = pneg %p145
      %p329 = pneg %p142
      %p330 = pneg %p173
      %p331 = pneg %p170
      %s332 = smul.u32 8, %s22
      %p333 = scmp.lt.s32.totalorder %s21, 1
      %s334 = scalar_select %p333, %s21, 1
      %p335 = scmp.lt.s32.totalorder %s332, 15
      %s336 = scalar_select %p335, %s332, 15
      %s337 = smul.addr %s336, 2
      %s338 = smul.addr %s334, 32
      %s339 = sadd.s32 %s337, %s338
      %s340 = smul.addr %s339, 4
      %s341 = scalar_lea.vmem %s4, %s340
      %p342 = pneg %p203
      %p343 = pneg %p200
      %s344 = smul.u32 %s21, 2
      %s345 = sadd.s32 %s344, %s22
      %p346 = scmp.lt.s32.totalorder %s345, 3
      %s347 = scalar_select %p346, %s345, 3
      %s348 = smul.addr %s347, 2
      %s349 = scalar_lea.vmem %s5, %s348
      %s350 = smul.u32 %s22, 8
      %s351 = ssub.s32 %s350, 1
      %p352 = scmp.gt.s32.totalorder %s351, 1
      %s353 = scalar_select %p352, %s351, 1
      %p354 = scmp.lt.s32.totalorder %s21, 1
      %s355 = scalar_select %p354, %s21, 1
      %p356 = scmp.lt.s32.totalorder %s353, 15
      %s357 = scalar_select %p356, %s353, 15
      %s358 = smul.addr %s357, 2
      %s359 = smul.addr %s355, 32
      %s360 = sadd.s32 %s358, %s359
      %s361 = smul.addr %s360, 8
      %s362 = scalar_lea.vmem %s0, %s361
      %s363 = smul.u32 %s22, 8
      %s364 = ssub.s32 %s363, 1
      %p365 = scmp.gt.s32.totalorder %s364, 1
      %s366 = scalar_select %p365, %s364, 1
      %s367 = smul.u32 8, %s22
      %p368 = scmp.lt.s32.totalorder %s21, 1
      %s369 = scalar_select %p368, %s21, 1
      %p370 = scmp.lt.s32.totalorder %s367, 15
      %s371 = scalar_select %p370, %s367, 15
      %s372 = smul.addr %s371, 2
      %s373 = smul.addr %s369, 32
      %s374 = sadd.s32 %s372, %s373
      %s375 = smul.addr %s374, 8
      %s376 = scalar_lea.vmem %s1, %s375
      %s377 = smul.u32 8, %s22
      %s378 = sadd.s32 %s22, 1
      %s379 = smul.u32 %s378, 8
      %p380 = scmp.lt.s32.totalorder %s379, 14
      %s381 = scalar_select %p380, %s379, 14
      %p382 = scmp.lt.s32.totalorder %s21, 1
      %s383 = scalar_select %p382, %s21, 1
      %p384 = scmp.lt.s32.totalorder %s381, 15
      %s385 = scalar_select %p384, %s381, 15
      %s386 = smul.addr %s385, 2
      %s387 = smul.addr %s383, 32
      %s388 = sadd.s32 %s386, %s387
      %s389 = smul.addr %s388, 8
      %s390 = scalar_lea.vmem %s2, %s389
      %s391 = sadd.s32 %s22, 1
      %s392 = smul.u32 %s391, 8
      %p393 = scmp.lt.s32.totalorder %s392, 14
      %s394 = scalar_select %p393, %s392, 14
      %s395 = smul.u32 8, %s22
      %p396 = scmp.lt.s32.totalorder %s21, 1
      %s397 = scalar_select %p396, %s21, 1
      %p398 = scmp.lt.s32.totalorder %s395, 15
      %s399 = scalar_select %p398, %s395, 15
      %s400 = smul.addr %s399, 2
      %s401 = smul.addr %s397, 32
      %s402 = sadd.s32 %s400, %s401
      %s403 = smul.addr %s402, 4
      %s404 = scalar_lea.vmem %s4, %s403
      %s405 = smul.u32 8, %s22
      %s406 = smul.u32 %s21, 2
      %s407 = sadd.s32 %s406, %s22
      %p408 = scmp.lt.s32.totalorder %s407, 3
      %s409 = scalar_select %p408, %s407, 3
      %s410 = smul.addr %s409, 2
      %s411 = scalar_lea.vmem %s5, %s410
      %s412 = smul.u32 %s21, 2
      %s413 = sadd.s32 %s412, %s22
      %v415 = vld [vmem:[%s362] sm:$0xff]
      %v416 = vld [vmem:[%s362 + $0x8] sm:$0xff]
      %v417 = vld [vmem:[%s376] sm:$0xff]
      %v418 = vld [vmem:[%s376 + $0x8] sm:$0xff]
      %v419 = vld [vmem:[%s376 + $0x10] sm:$0xff]
      %v420 = vld [vmem:[%s376 + $0x18] sm:$0xff]
      %v421 = vld [vmem:[%s376 + $0x20] sm:$0xff]
      %v422 = vld [vmem:[%s376 + $0x28] sm:$0xff]
      %v423 = vld [vmem:[%s376 + $0x30] sm:$0xff]
      %v424 = vld [vmem:[%s376 + $0x38] sm:$0xff]
      %v425 = vld [vmem:[%s376 + $0x40] sm:$0xff]
      %v426 = vld [vmem:[%s376 + $0x48] sm:$0xff]
      %v427 = vld [vmem:[%s376 + $0x50] sm:$0xff]
      %v428 = vld [vmem:[%s376 + $0x58] sm:$0xff]
      %v429 = vld [vmem:[%s376 + $0x60] sm:$0xff]
      %v430 = vld [vmem:[%s376 + $0x68] sm:$0xff]
      %v431 = vld [vmem:[%s376 + $0x70] sm:$0xff]
      %v432 = vld [vmem:[%s376 + $0x78] sm:$0xff]
      %v433 = vld [vmem:[%s390] sm:$0xff]
      %v434 = vld [vmem:[%s390 + $0x8] sm:$0xff]
      %v435 = vpack.c.bf16 %v416, %v415
      %v436 = vpack.c.bf16 %v418, %v417
      %v437 = vpack.c.bf16 %v420, %v419
      %v438 = vpack.c.bf16 %v422, %v421
      %v439 = vpack.c.bf16 %v424, %v423
      %v440 = vpack.c.bf16 %v426, %v425
      %v441 = vpack.c.bf16 %v428, %v427
      %v442 = vpack.c.bf16 %v430, %v429
      %v443 = vpack.c.bf16 %v432, %v431
      %v444 = vpack.c.bf16 %v434, %v433
      %v446 = vshrl.u32 %v435, 16
      %v449 = vshrl.u32 %v436, 16
      %v452 = vshrl.u32 %v437, 16
      %v455 = vshrl.u32 %v438, 16
      %v458 = vshrl.u32 %v439, 16
      %v461 = vshrl.u32 %v440, 16
      %v464 = vshrl.u32 %v441, 16
      %v467 = vshrl.u32 %v442, 16
      %v470 = vshrl.u32 %v443, 16
      %v473 = vshrl.u32 %v444, 16
      %v485 = vrot.slane %v446, 7
      %v486 = vshll.u32 %v435, 16
      %v488 = vor.u32 %v485, %v486
      %v489 = vrot.slane %v449, 7
      %v490 = vshll.u32 %v436, 16
      %v492 = vor.u32 %v489, %v490
      %v493 = vrot.slane %v452, 7
      %v494 = vshll.u32 %v437, 16
      %v496 = vor.u32 %v493, %v494
      %v497 = vrot.slane %v455, 7
      %v498 = vshll.u32 %v438, 16
      %v500 = vor.u32 %v497, %v498
      %v501 = vrot.slane %v458, 7
      %v502 = vshll.u32 %v439, 16
      %v504 = vor.u32 %v501, %v502
      %v505 = vrot.slane %v461, 7
      %v506 = vshll.u32 %v440, 16
      %v508 = vor.u32 %v505, %v506
      %v509 = vrot.slane %v464, 7
      %v510 = vshll.u32 %v441, 16
      %v512 = vor.u32 %v509, %v510
      %v513 = vrot.slane %v467, 7
      %v514 = vshll.u32 %v442, 16
      %v516 = vor.u32 %v513, %v514
      %v517 = vrot.slane %v470, 7
      %v518 = vshll.u32 %v443, 16
      %v520 = vor.u32 %v517, %v518
      %v521 = vrot.slane %v473, 7
      %v522 = vshll.u32 %v444, 16
      %v524 = vor.u32 %v521, %v522
      %vm535 = vcmask 1040384
      %vm536 = vsmask.f32 256
      %vm537 = vmand %vm535, %vm536
      %v538 = vsel %vm537, %v446, %v488
      %v539 = vsel %vm537, %v449, %v492
      %v540 = vsel %vm537, %v452, %v496
      %v541 = vsel %vm537, %v455, %v500
      %v542 = vsel %vm537, %v458, %v504
      %v543 = vsel %vm537, %v461, %v508
      %v544 = vsel %vm537, %v464, %v512
      %v545 = vsel %vm537, %v467, %v516
      %v546 = vsel %vm537, %v470, %v520
      %v547 = vsel %vm537, %v473, %v524
      %v548 = vrot.slane %v486, 1
      %v549 = vor.u32 %v446, %v548
      %v550 = vrot.slane %v490, 1
      %v551 = vor.u32 %v449, %v550
      %v552 = vrot.slane %v494, 1
      %v553 = vor.u32 %v452, %v552
      %v554 = vrot.slane %v498, 1
      %v555 = vor.u32 %v455, %v554
      %v556 = vrot.slane %v502, 1
      %v557 = vor.u32 %v458, %v556
      %v558 = vrot.slane %v506, 1
      %v559 = vor.u32 %v461, %v558
      %v560 = vrot.slane %v510, 1
      %v561 = vor.u32 %v464, %v560
      %v562 = vrot.slane %v514, 1
      %v563 = vor.u32 %v467, %v562
      %v564 = vrot.slane %v518, 1
      %v565 = vor.u32 %v470, %v564
      %v566 = vrot.slane %v522, 1
      %v567 = vor.u32 %v473, %v566
      %vm588 = vcmask 1047552
      %vm589 = vsmask.f32 7424
      %vm590 = vmand %vm588, %vm589
      %v591 = vsel %vm590, %v549, %v486
      %v592 = vsel %vm590, %v551, %v490
      %v593 = vsel %vm590, %v553, %v494
      %v594 = vsel %vm590, %v555, %v498
      %v595 = vsel %vm590, %v557, %v502
      %v596 = vsel %vm590, %v559, %v506
      %v597 = vsel %vm590, %v561, %v510
      %v598 = vsel %vm590, %v563, %v514
      %v599 = vsel %vm590, %v565, %v518
      %v600 = vsel %vm590, %v567, %v522
      %v601 = vld [vmem:[%s3] sm:$0xf]
      %v602 = vld [vmem:[%s3 + $0x4] sm:$0xf]
      %v603 = vld [vmem:[%s3 + $0x8] sm:$0xf]
      %v604 = vld [vmem:[%s3 + $0xc] sm:$0xf]
      %v605 = vld [vmem:[%s3 + $0x10] sm:$0xf]
      %v606 = vld [vmem:[%s3 + $0x14] sm:$0xf]
      %v607 = vld [vmem:[%s3 + $0x18] sm:$0xf]
      %v608 = vld [vmem:[%s3 + $0x1c] sm:$0xf]
      %v609 = vld [vmem:[%s3 + $0x20] sm:$0xf]
      %v610 = vld [vmem:[%s3 + $0x24] sm:$0xf]
      %v611 = vld [vmem:[%s3 + $0x28] sm:$0xf]
      %v612 = vld [vmem:[%s3 + $0x2c] sm:$0xf]
      %v613 = vld [vmem:[%s3 + $0x30] sm:$0xf]
      %v614 = vld [vmem:[%s3 + $0x34] sm:$0xf]
      %v615 = vld [vmem:[%s3 + $0x38] sm:$0xf]
      %v616 = vld [vmem:[%s3 + $0x3c] sm:$0xf]
      %v617 = vld [vmem:[%s3 + $0x40] sm:$0xf]
      %v618 = vld [vmem:[%s3 + $0x44] sm:$0xf]
      %v619 = vld [vmem:[%s3 + $0x48] sm:$0xf]
      %v620 = vld [vmem:[%s3 + $0x4c] sm:$0xf]
      %v621 = vld [vmem:[%s3 + $0x50] sm:$0xf]
      %v622 = vld [vmem:[%s3 + $0x54] sm:$0xf]
      %v623 = vld [vmem:[%s3 + $0x58] sm:$0xf]
      %v624 = vld [vmem:[%s3 + $0x5c] sm:$0xf]
      %v625 = vld [vmem:[%s3 + $0x60] sm:$0xf]
      %v626 = vld [vmem:[%s3 + $0x64] sm:$0xf]
      %v627 = vld [vmem:[%s3 + $0x68] sm:$0xf]
      %v628 = vld [vmem:[%s3 + $0x6c] sm:$0xf]
      %v629 = vld [vmem:[%s3 + $0x70] sm:$0xf]
      %v630 = vld [vmem:[%s3 + $0x74] sm:$0xf]
      %v631 = vld [vmem:[%s3 + $0x78] sm:$0xf]
      %v632 = vld [vmem:[%s3 + $0x7c] sm:$0xf]
      %s633 = scalar_lea.vmem %s3, 128
      %v634 = vld [vmem:[%s633] sm:$0xf]
      %v635 = vld [vmem:[%s633 + $0x4] sm:$0xf]
      %v636 = vld [vmem:[%s633 + $0x8] sm:$0xf]
      %v637 = vld [vmem:[%s633 + $0xc] sm:$0xf]
      %v638 = vld [vmem:[%s633 + $0x10] sm:$0xf]
      %v639 = vld [vmem:[%s633 + $0x14] sm:$0xf]
      %v640 = vld [vmem:[%s633 + $0x18] sm:$0xf]
      %v641 = vld [vmem:[%s633 + $0x1c] sm:$0xf]
      %v642 = vld [vmem:[%s633 + $0x20] sm:$0xf]
      %v643 = vld [vmem:[%s633 + $0x24] sm:$0xf]
      %v644 = vld [vmem:[%s633 + $0x28] sm:$0xf]
      %v645 = vld [vmem:[%s633 + $0x2c] sm:$0xf]
      %v646 = vld [vmem:[%s633 + $0x30] sm:$0xf]
      %v647 = vld [vmem:[%s633 + $0x34] sm:$0xf]
      %v648 = vld [vmem:[%s633 + $0x38] sm:$0xf]
      %v649 = vld [vmem:[%s633 + $0x3c] sm:$0xf]
      %v650 = vld [vmem:[%s633 + $0x40] sm:$0xf]
      %v651 = vld [vmem:[%s633 + $0x44] sm:$0xf]
      %v652 = vld [vmem:[%s633 + $0x48] sm:$0xf]
      %v653 = vld [vmem:[%s633 + $0x4c] sm:$0xf]
      %v654 = vld [vmem:[%s633 + $0x50] sm:$0xf]
      %v655 = vld [vmem:[%s633 + $0x54] sm:$0xf]
      %v656 = vld [vmem:[%s633 + $0x58] sm:$0xf]
      %v657 = vld [vmem:[%s633 + $0x5c] sm:$0xf]
      %v658 = vld [vmem:[%s633 + $0x60] sm:$0xf]
      %v659 = vld [vmem:[%s633 + $0x64] sm:$0xf]
      %v660 = vld [vmem:[%s633 + $0x68] sm:$0xf]
      %v661 = vld [vmem:[%s633 + $0x6c] sm:$0xf]
      %v662 = vld [vmem:[%s633 + $0x70] sm:$0xf]
      %v663 = vld [vmem:[%s633 + $0x74] sm:$0xf]
      %v664 = vld [vmem:[%s633 + $0x78] sm:$0xf]
      %v665 = vld [vmem:[%s633 + $0x7c] sm:$0xf]
      %v698 = vunpack.c.l.b16 %v634
      %v699 = vunpack.c.l.b16 %v635
      %v700 = vunpack.c.l.b16 %v636
      %v701 = vunpack.c.l.b16 %v637
      %v702 = vunpack.c.l.b16 %v638
      %v703 = vunpack.c.l.b16 %v639
      %v704 = vunpack.c.l.b16 %v640
      %v705 = vunpack.c.l.b16 %v641
      %v706 = vunpack.c.l.b16 %v642
      %v707 = vunpack.c.l.b16 %v643
      %v708 = vunpack.c.l.b16 %v644
      %v709 = vunpack.c.l.b16 %v645
      %v710 = vunpack.c.l.b16 %v646
      %v711 = vunpack.c.l.b16 %v647
      %v712 = vunpack.c.l.b16 %v648
      %v713 = vunpack.c.l.b16 %v649
      %v714 = vunpack.c.l.b16 %v650
      %v715 = vunpack.c.l.b16 %v651
      %v716 = vunpack.c.l.b16 %v652
      %v717 = vunpack.c.l.b16 %v653
      %v718 = vunpack.c.l.b16 %v654
      %v719 = vunpack.c.l.b16 %v655
      %v720 = vunpack.c.l.b16 %v656
      %v721 = vunpack.c.l.b16 %v657
      %v722 = vunpack.c.l.b16 %v658
      %v723 = vunpack.c.l.b16 %v659
      %v724 = vunpack.c.l.b16 %v660
      %v725 = vunpack.c.l.b16 %v661
      %v726 = vunpack.c.l.b16 %v662
      %v727 = vunpack.c.l.b16 %v663
      %v728 = vunpack.c.l.b16 %v664
      %v729 = vunpack.c.l.b16 %v665
      %v730 = vpack.c.b16 %v699, %v698
      %v731 = vpack.c.b16 %v701, %v700
      %v732 = vpack.c.b16 %v703, %v702
      %v733 = vpack.c.b16 %v705, %v704
      %v734 = vpack.c.b16 %v707, %v706
      %v735 = vpack.c.b16 %v709, %v708
      %v736 = vpack.c.b16 %v711, %v710
      %v737 = vpack.c.b16 %v713, %v712
      %v738 = vpack.c.b16 %v715, %v714
      %v739 = vpack.c.b16 %v717, %v716
      %v740 = vpack.c.b16 %v719, %v718
      %v741 = vpack.c.b16 %v721, %v720
      %v742 = vpack.c.b16 %v723, %v722
      %v743 = vpack.c.b16 %v725, %v724
      %v744 = vpack.c.b16 %v727, %v726
      %v745 = vpack.c.b16 %v729, %v728
      %762 = vmatprep.subr.bf16.mxu0 0
      %763 = vmatpush1.bf16.msra.mxu0 %v730
      %764 = vmatprep.subr.bf16.mxu0 0
      %765 = vmatpush1.bf16.msra.mxu0 %v731
      %766 = vmatprep.subr.bf16.mxu0 0
      %767 = vmatpush1.bf16.msra.mxu0 %v732
      %768 = vmatprep.subr.bf16.mxu0 0
      %769 = vmatpush1.bf16.msra.mxu0 %v733
      %770 = vmatprep.subr.bf16.mxu0 0
      %771 = vmatpush1.bf16.msra.mxu0 %v734
      %772 = vmatprep.subr.bf16.mxu0 0
      %773 = vmatpush1.bf16.msra.mxu0 %v735
      %774 = vmatprep.subr.bf16.mxu0 0
      %775 = vmatpush1.bf16.msra.mxu0 %v736
      %776 = vmatprep.subr.bf16.mxu0 0
      %777 = vmatpush1.bf16.msra.mxu0 %v737
      %778 = vmatprep.subr.bf16.mxu0 0
      %779 = vmatpush1.bf16.msra.mxu0 %v738
      %780 = vmatprep.subr.bf16.mxu0 0
      %781 = vmatpush1.bf16.msra.mxu0 %v739
      %782 = vmatprep.subr.bf16.mxu0 0
      %783 = vmatpush1.bf16.msra.mxu0 %v740
      %784 = vmatprep.subr.bf16.mxu0 0
      %785 = vmatpush1.bf16.msra.mxu0 %v741
      %786 = vmatprep.subr.bf16.mxu0 0
      %787 = vmatpush1.bf16.msra.mxu0 %v742
      %788 = vmatprep.subr.bf16.mxu0 0
      %789 = vmatpush1.bf16.msra.mxu0 %v743
      %790 = vmatprep.subr.bf16.mxu0 0
      %791 = vmatpush1.bf16.msra.mxu0 %v744
      %792 = vmatprep.subr.bf16.mxu0 0
      %793 = vmatpush1.bf16.msra.mxu0 %v745
      %794 = vmatprep.mubr.bf16.mxu0 %v539
      %795 = vmatmul.mubr.bf16.gmra.mrb[0].mxu0 %v591
      %v796 = vpop.f32.mrb[0].mxu0
      %v797 = vadd.f32 0.0, %v796
      %v798 = vpop.f32.mrb[0].mxu0
      %v799 = vpop.f32.mrb[0].mxu0
      %v800 = vadd.f32 0.0, %v799
      %v801 = vpop.f32.mrb[0].mxu0
      %802 = vmatprep.mubr.bf16.mxu0 %v540
      %803 = vmatmul.mubr.bf16.gmra.mrb[0].mxu0 %v592
      %v804 = vpop.f32.mrb[0].mxu0
      %v805 = vadd.f32 0.0, %v804
      %v806 = vpop.f32.mrb[0].mxu0
      %v807 = vpop.f32.mrb[0].mxu0
      %v808 = vadd.f32 0.0, %v807
      %v809 = vpop.f32.mrb[0].mxu0
      %810 = vmatprep.mubr.bf16.mxu0 %v541
      %811 = vmatmul.mubr.bf16.gmra.mrb[0].mxu0 %v593
      %v812 = vpop.f32.mrb[0].mxu0
      %v813 = vadd.f32 0.0, %v812
      %v814 = vpop.f32.mrb[0].mxu0
      %v815 = vpop.f32.mrb[0].mxu0
      %v816 = vadd.f32 0.0, %v815
      %v817 = vpop.f32.mrb[0].mxu0
      %818 = vmatprep.mubr.bf16.mxu0 %v542
      %819 = vmatmul.mubr.bf16.gmra.mrb[0].mxu0 %v594
      %v820 = vpop.f32.mrb[0].mxu0
      %v821 = vadd.f32 0.0, %v820
      %v822 = vpop.f32.mrb[0].mxu0
      %v823 = vpop.f32.mrb[0].mxu0
      %v824 = vadd.f32 0.0, %v823
      %v825 = vpop.f32.mrb[0].mxu0
      %826 = vmatprep.mubr.bf16.mxu0 %v543
      %827 = vmatmul.mubr.bf16.gmra.mrb[0].mxu0 %v595
      %v828 = vpop.f32.mrb[0].mxu0
      %v829 = vadd.f32 0.0, %v828
      %v830 = vpop.f32.mrb[0].mxu0
      %v831 = vpop.f32.mrb[0].mxu0
      %v832 = vadd.f32 0.0, %v831
      %v833 = vpop.f32.mrb[0].mxu0
      %834 = vmatprep.mubr.bf16.mxu0 %v544
      %835 = vmatmul.mubr.bf16.gmra.mrb[0].mxu0 %v596
      %v836 = vpop.f32.mrb[0].mxu0
      %v837 = vadd.f32 0.0, %v836
      %v838 = vpop.f32.mrb[0].mxu0
      %v839 = vpop.f32.mrb[0].mxu0
      %v840 = vadd.f32 0.0, %v839
      %v841 = vpop.f32.mrb[0].mxu0
      %842 = vmatprep.mubr.bf16.mxu0 %v545
      %843 = vmatmul.mubr.bf16.gmra.mrb[0].mxu0 %v597
      %v844 = vpop.f32.mrb[0].mxu0
      %v845 = vadd.f32 0.0, %v844
      %v846 = vpop.f32.mrb[0].mxu0
      %v847 = vpop.f32.mrb[0].mxu0
      %v848 = vadd.f32 0.0, %v847
      %v849 = vpop.f32.mrb[0].mxu0
      %850 = vmatprep.mubr.bf16.mxu0 %v546
      %851 = vmatmul.mubr.bf16.gmra.mrb[0].mxu0 %v598
      %v852 = vpop.f32.mrb[0].mxu0
      %v853 = vadd.f32 0.0, %v852
      %v854 = vpop.f32.mrb[0].mxu0
      %v855 = vpop.f32.mrb[0].mxu0
      %v856 = vadd.f32 0.0, %v855
      %v857 = vpop.f32.mrb[0].mxu0
      %858 = vdwg.mxu0
      %v891 = vunpack.c.l.b16 %v601
      %v892 = vunpack.c.l.b16 %v602
      %v893 = vunpack.c.l.b16 %v603
      %v894 = vunpack.c.l.b16 %v604
      %v895 = vunpack.c.l.b16 %v605
      %v896 = vunpack.c.l.b16 %v606
      %v897 = vunpack.c.l.b16 %v607
      %v898 = vunpack.c.l.b16 %v608
      %v899 = vunpack.c.l.b16 %v609
      %v900 = vunpack.c.l.b16 %v610
      %v901 = vunpack.c.l.b16 %v611
      %v902 = vunpack.c.l.b16 %v612
      %v903 = vunpack.c.l.b16 %v613
      %v904 = vunpack.c.l.b16 %v614
      %v905 = vunpack.c.l.b16 %v615
      %v906 = vunpack.c.l.b16 %v616
      %v907 = vunpack.c.l.b16 %v617
      %v908 = vunpack.c.l.b16 %v618
      %v909 = vunpack.c.l.b16 %v619
      %v910 = vunpack.c.l.b16 %v620
      %v911 = vunpack.c.l.b16 %v621
      %v912 = vunpack.c.l.b16 %v622
      %v913 = vunpack.c.l.b16 %v623
      %v914 = vunpack.c.l.b16 %v624
      %v915 = vunpack.c.l.b16 %v625
      %v916 = vunpack.c.l.b16 %v626
      %v917 = vunpack.c.l.b16 %v627
      %v918 = vunpack.c.l.b16 %v628
      %v919 = vunpack.c.l.b16 %v629
      %v920 = vunpack.c.l.b16 %v630
      %v921 = vunpack.c.l.b16 %v631
      %v922 = vunpack.c.l.b16 %v632
      %v923 = vpack.c.b16 %v892, %v891
      %v924 = vpack.c.b16 %v894, %v893
      %v925 = vpack.c.b16 %v896, %v895
      %v926 = vpack.c.b16 %v898, %v897
      %v927 = vpack.c.b16 %v900, %v899
      %v928 = vpack.c.b16 %v902, %v901
      %v929 = vpack.c.b16 %v904, %v903
      %v930 = vpack.c.b16 %v906, %v905
      %v931 = vpack.c.b16 %v908, %v907
      %v932 = vpack.c.b16 %v910, %v909
      %v933 = vpack.c.b16 %v912, %v911
      %v934 = vpack.c.b16 %v914, %v913
      %v935 = vpack.c.b16 %v916, %v915
      %v936 = vpack.c.b16 %v918, %v917
      %v937 = vpack.c.b16 %v920, %v919
      %v938 = vpack.c.b16 %v922, %v921
      %955 = vmatprep.subr.bf16.mxu0 0
      %956 = vmatpush1.bf16.msra.mxu0 %v923
      %957 = vmatprep.subr.bf16.mxu0 0
      %958 = vmatpush1.bf16.msra.mxu0 %v924
      %959 = vmatprep.subr.bf16.mxu0 0
      %960 = vmatpush1.bf16.msra.mxu0 %v925
      %961 = vmatprep.subr.bf16.mxu0 0
      %962 = vmatpush1.bf16.msra.mxu0 %v926
      %963 = vmatprep.subr.bf16.mxu0 0
      %964 = vmatpush1.bf16.msra.mxu0 %v927
      %965 = vmatprep.subr.bf16.mxu0 0
      %966 = vmatpush1.bf16.msra.mxu0 %v928
      %967 = vmatprep.subr.bf16.mxu0 0
      %968 = vmatpush1.bf16.msra.mxu0 %v929
      %969 = vmatprep.subr.bf16.mxu0 0
      %970 = vmatpush1.bf16.msra.mxu0 %v930
      %971 = vmatprep.subr.bf16.mxu0 0
      %972 = vmatpush1.bf16.msra.mxu0 %v931
      %973 = vmatprep.subr.bf16.mxu0 0
      %974 = vmatpush1.bf16.msra.mxu0 %v932
      %975 = vmatprep.subr.bf16.mxu0 0
      %976 = vmatpush1.bf16.msra.mxu0 %v933
      %977 = vmatprep.subr.bf16.mxu0 0
      %978 = vmatpush1.bf16.msra.mxu0 %v934
      %979 = vmatprep.subr.bf16.mxu0 0
      %980 = vmatpush1.bf16.msra.mxu0 %v935
      %981 = vmatprep.subr.bf16.mxu0 0
      %982 = vmatpush1.bf16.msra.mxu0 %v936
      %983 = vmatprep.subr.bf16.mxu0 0
      %984 = vmatpush1.bf16.msra.mxu0 %v937
      %985 = vmatprep.subr.bf16.mxu0 0
      %986 = vmatpush1.bf16.msra.mxu0 %v938
      %987 = vmatprep.mubr.bf16.mxu0 %v435
      %988 = vmatmul.mubr.bf16.gmra.mrb[0].mxu0 %v538
      %v989 = vpop.f32.mrb[0].mxu0
      %v990 = vadd.f32 %v797, %v989
      %v991 = vpop.f32.mrb[0].mxu0
      %v992 = vpop.f32.mrb[0].mxu0
      %v993 = vadd.f32 %v800, %v992
      %v994 = vpop.f32.mrb[0].mxu0
      %995 = vmatprep.mubr.bf16.mxu0 %v436
      %996 = vmatmul.mubr.bf16.gmra.mrb[0].mxu0 %v539
      %v997 = vpop.f32.mrb[0].mxu0
      %v998 = vadd.f32 %v805, %v997
      %v999 = vpop.f32.mrb[0].mxu0
      %v1000 = vpop.f32.mrb[0].mxu0
      %v1001 = vadd.f32 %v808, %v1000
      %v1002 = vpop.f32.mrb[0].mxu0
      %1003 = vmatprep.mubr.bf16.mxu0 %v437
      %1004 = vmatmul.mubr.bf16.gmra.mrb[0].mxu0 %v540
      %v1005 = vpop.f32.mrb[0].mxu0
      %v1006 = vadd.f32 %v813, %v1005
      %v1007 = vpop.f32.mrb[0].mxu0
      %v1008 = vpop.f32.mrb[0].mxu0
      %v1009 = vadd.f32 %v816, %v1008
      %v1010 = vpop.f32.mrb[0].mxu0
      %1011 = vmatprep.mubr.bf16.mxu0 %v438
      %1012 = vmatmul.mubr.bf16.gmra.mrb[0].mxu0 %v541
      %v1013 = vpop.f32.mrb[0].mxu0
      %v1014 = vadd.f32 %v821, %v1013
      %v1015 = vpop.f32.mrb[0].mxu0
      %v1016 = vpop.f32.mrb[0].mxu0
      %v1017 = vadd.f32 %v824, %v1016
      %v1018 = vpop.f32.mrb[0].mxu0
      %1019 = vmatprep.mubr.bf16.mxu0 %v439
      %1020 = vmatmul.mubr.bf16.gmra.mrb[0].mxu0 %v542
      %v1021 = vpop.f32.mrb[0].mxu0
      %v1022 = vadd.f32 %v829, %v1021
      %v1023 = vpop.f32.mrb[0].mxu0
      %v1024 = vpop.f32.mrb[0].mxu0
      %v1025 = vadd.f32 %v832, %v1024
      %v1026 = vpop.f32.mrb[0].mxu0
      %1027 = vmatprep.mubr.bf16.mxu0 %v440
      %1028 = vmatmul.mubr.bf16.gmra.mrb[0].mxu0 %v543
      %v1029 = vpop.f32.mrb[0].mxu0
      %v1030 = vadd.f32 %v837, %v1029
      %v1031 = vpop.f32.mrb[0].mxu0
      %v1032 = vpop.f32.mrb[0].mxu0
      %v1033 = vadd.f32 %v840, %v1032
      %v1034 = vpop.f32.mrb[0].mxu0
      %1035 = vmatprep.mubr.bf16.mxu0 %v441
      %1036 = vmatmul.mubr.bf16.gmra.mrb[0].mxu0 %v544
      %v1037 = vpop.f32.mrb[0].mxu0
      %v1038 = vadd.f32 %v845, %v1037
      %v1039 = vpop.f32.mrb[0].mxu0
      %v1040 = vpop.f32.mrb[0].mxu0
      %v1041 = vadd.f32 %v848, %v1040
      %v1042 = vpop.f32.mrb[0].mxu0
      %1043 = vmatprep.mubr.bf16.mxu0 %v442
      %1044 = vmatmul.mubr.bf16.gmra.mrb[0].mxu0 %v545
      %v1045 = vpop.f32.mrb[0].mxu0
      %v1046 = vadd.f32 %v853, %v1045
      %v1047 = vpop.f32.mrb[0].mxu0
      %v1048 = vpop.f32.mrb[0].mxu0
      %v1049 = vadd.f32 %v856, %v1048
      %v1050 = vpop.f32.mrb[0].mxu0
      %1051 = vdwg.mxu0
      %s1052 = scalar_lea.vmem %s3, 256
      %v1053 = vld [vmem:[%s1052] sm:$0xf]
      %v1054 = vld [vmem:[%s1052 + $0x4] sm:$0xf]
      %v1055 = vld [vmem:[%s1052 + $0x8] sm:$0xf]
      %v1056 = vld [vmem:[%s1052 + $0xc] sm:$0xf]
      %v1057 = vld [vmem:[%s1052 + $0x10] sm:$0xf]
      %v1058 = vld [vmem:[%s1052 + $0x14] sm:$0xf]
      %v1059 = vld [vmem:[%s1052 + $0x18] sm:$0xf]
      %v1060 = vld [vmem:[%s1052 + $0x1c] sm:$0xf]
      %v1061 = vld [vmem:[%s1052 + $0x20] sm:$0xf]
      %v1062 = vld [vmem:[%s1052 + $0x24] sm:$0xf]
      %v1063 = vld [vmem:[%s1052 + $0x28] sm:$0xf]
      %v1064 = vld [vmem:[%s1052 + $0x2c] sm:$0xf]
      %v1065 = vld [vmem:[%s1052 + $0x30] sm:$0xf]
      %v1066 = vld [vmem:[%s1052 + $0x34] sm:$0xf]
      %v1067 = vld [vmem:[%s1052 + $0x38] sm:$0xf]
      %v1068 = vld [vmem:[%s1052 + $0x3c] sm:$0xf]
      %v1069 = vld [vmem:[%s1052 + $0x40] sm:$0xf]
      %v1070 = vld [vmem:[%s1052 + $0x44] sm:$0xf]
      %v1071 = vld [vmem:[%s1052 + $0x48] sm:$0xf]
      %v1072 = vld [vmem:[%s1052 + $0x4c] sm:$0xf]
      %v1073 = vld [vmem:[%s1052 + $0x50] sm:$0xf]
      %v1074 = vld [vmem:[%s1052 + $0x54] sm:$0xf]
      %v1075 = vld [vmem:[%s1052 + $0x58] sm:$0xf]
      %v1076 = vld [vmem:[%s1052 + $0x5c] sm:$0xf]
      %v1077 = vld [vmem:[%s1052 + $0x60] sm:$0xf]
      %v1078 = vld [vmem:[%s1052 + $0x64] sm:$0xf]
      %v1079 = vld [vmem:[%s1052 + $0x68] sm:$0xf]
      %v1080 = vld [vmem:[%s1052 + $0x6c] sm:$0xf]
      %v1081 = vld [vmem:[%s1052 + $0x70] sm:$0xf]
      %v1082 = vld [vmem:[%s1052 + $0x74] sm:$0xf]
      %v1083 = vld [vmem:[%s1052 + $0x78] sm:$0xf]
      %v1084 = vld [vmem:[%s1052 + $0x7c] sm:$0xf]
      %v1117 = vunpack.c.l.b16 %v1053
      %v1118 = vunpack.c.l.b16 %v1054
      %v1119 = vunpack.c.l.b16 %v1055
      %v1120 = vunpack.c.l.b16 %v1056
      %v1121 = vunpack.c.l.b16 %v1057
      %v1122 = vunpack.c.l.b16 %v1058
      %v1123 = vunpack.c.l.b16 %v1059
      %v1124 = vunpack.c.l.b16 %v1060
      %v1125 = vunpack.c.l.b16 %v1061
      %v1126 = vunpack.c.l.b16 %v1062
      %v1127 = vunpack.c.l.b16 %v1063
      %v1128 = vunpack.c.l.b16 %v1064
      %v1129 = vunpack.c.l.b16 %v1065
      %v1130 = vunpack.c.l.b16 %v1066
      %v1131 = vunpack.c.l.b16 %v1067
      %v1132 = vunpack.c.l.b16 %v1068
      %v1133 = vunpack.c.l.b16 %v1069
      %v1134 = vunpack.c.l.b16 %v1070
      %v1135 = vunpack.c.l.b16 %v1071
      %v1136 = vunpack.c.l.b16 %v1072
      %v1137 = vunpack.c.l.b16 %v1073
      %v1138 = vunpack.c.l.b16 %v1074
      %v1139 = vunpack.c.l.b16 %v1075
      %v1140 = vunpack.c.l.b16 %v1076
      %v1141 = vunpack.c.l.b16 %v1077
      %v1142 = vunpack.c.l.b16 %v1078
      %v1143 = vunpack.c.l.b16 %v1079
      %v1144 = vunpack.c.l.b16 %v1080
      %v1145 = vunpack.c.l.b16 %v1081
      %v1146 = vunpack.c.l.b16 %v1082
      %v1147 = vunpack.c.l.b16 %v1083
      %v1148 = vunpack.c.l.b16 %v1084
      %v1149 = vpack.c.b16 %v1118, %v1117
      %v1150 = vpack.c.b16 %v1120, %v1119
      %v1151 = vpack.c.b16 %v1122, %v1121
      %v1152 = vpack.c.b16 %v1124, %v1123
      %v1153 = vpack.c.b16 %v1126, %v1125
      %v1154 = vpack.c.b16 %v1128, %v1127
      %v1155 = vpack.c.b16 %v1130, %v1129
      %v1156 = vpack.c.b16 %v1132, %v1131
      %v1157 = vpack.c.b16 %v1134, %v1133
      %v1158 = vpack.c.b16 %v1136, %v1135
      %v1159 = vpack.c.b16 %v1138, %v1137
      %v1160 = vpack.c.b16 %v1140, %v1139
      %v1161 = vpack.c.b16 %v1142, %v1141
      %v1162 = vpack.c.b16 %v1144, %v1143
      %v1163 = vpack.c.b16 %v1146, %v1145
      %v1164 = vpack.c.b16 %v1148, %v1147
      %1181 = vmatprep.subr.bf16.mxu0 0
      %1182 = vmatpush1.bf16.msra.mxu0 %v1149
      %1183 = vmatprep.subr.bf16.mxu0 0
      %1184 = vmatpush1.bf16.msra.mxu0 %v1150
      %1185 = vmatprep.subr.bf16.mxu0 0
      %1186 = vmatpush1.bf16.msra.mxu0 %v1151
      %1187 = vmatprep.subr.bf16.mxu0 0
      %1188 = vmatpush1.bf16.msra.mxu0 %v1152
      %1189 = vmatprep.subr.bf16.mxu0 0
      %1190 = vmatpush1.bf16.msra.mxu0 %v1153
      %1191 = vmatprep.subr.bf16.mxu0 0
      %1192 = vmatpush1.bf16.msra.mxu0 %v1154
      %1193 = vmatprep.subr.bf16.mxu0 0
      %1194 = vmatpush1.bf16.msra.mxu0 %v1155
      %1195 = vmatprep.subr.bf16.mxu0 0
      %1196 = vmatpush1.bf16.msra.mxu0 %v1156
      %1197 = vmatprep.subr.bf16.mxu0 0
      %1198 = vmatpush1.bf16.msra.mxu0 %v1157
      %1199 = vmatprep.subr.bf16.mxu0 0
      %1200 = vmatpush1.bf16.msra.mxu0 %v1158
      %1201 = vmatprep.subr.bf16.mxu0 0
      %1202 = vmatpush1.bf16.msra.mxu0 %v1159
      %1203 = vmatprep.subr.bf16.mxu0 0
      %1204 = vmatpush1.bf16.msra.mxu0 %v1160
      %1205 = vmatprep.subr.bf16.mxu0 0
      %1206 = vmatpush1.bf16.msra.mxu0 %v1161
      %1207 = vmatprep.subr.bf16.mxu0 0
      %1208 = vmatpush1.bf16.msra.mxu0 %v1162
      %1209 = vmatprep.subr.bf16.mxu0 0
      %1210 = vmatpush1.bf16.msra.mxu0 %v1163
      %1211 = vmatprep.subr.bf16.mxu0 0
      %1212 = vmatpush1.bf16.msra.mxu0 %v1164
      %1213 = vmatprep.mubr.bf16.mxu0 %v592
      %1214 = vmatmul.mubr.bf16.gmra.mrb[0].mxu0 %v436
      %v1215 = vpop.f32.mrb[0].mxu0
      %v1216 = vadd.f32 0.0, %v1215
      %v1217 = vpop.f32.mrb[0].mxu0
      %v1218 = vpop.f32.mrb[0].mxu0
      %v1219 = vadd.f32 0.0, %v1218
      %v1220 = vpop.f32.mrb[0].mxu0
      %1221 = vmatprep.mubr.bf16.mxu0 %v593
      %1222 = vmatmul.mubr.bf16.gmra.mrb[0].mxu0 %v437
      %v1223 = vpop.f32.mrb[0].mxu0
      %v1224 = vadd.f32 0.0, %v1223
      %v1225 = vpop.f32.mrb[0].mxu0
      %v1226 = vpop.f32.mrb[0].mxu0
      %v1227 = vadd.f32 0.0, %v1226
      %v1228 = vpop.f32.mrb[0].mxu0
      %1229 = vmatprep.mubr.bf16.mxu0 %v594
      %1230 = vmatmul.mubr.bf16.gmra.mrb[0].mxu0 %v438
      %v1231 = vpop.f32.mrb[0].mxu0
      %v1232 = vadd.f32 0.0, %v1231
      %v1233 = vpop.f32.mrb[0].mxu0
      %v1234 = vpop.f32.mrb[0].mxu0
      %v1235 = vadd.f32 0.0, %v1234
      %v1236 = vpop.f32.mrb[0].mxu0
      %1237 = vmatprep.mubr.bf16.mxu0 %v595
      %1238 = vmatmul.mubr.bf16.gmra.mrb[0].mxu0 %v439
      %v1239 = vpop.f32.mrb[0].mxu0
      %v1240 = vadd.f32 0.0, %v1239
      %v1241 = vpop.f32.mrb[0].mxu0
      %v1242 = vpop.f32.mrb[0].mxu0
      %v1243 = vadd.f32 0.0, %v1242
      %v1244 = vpop.f32.mrb[0].mxu0
      %1245 = vmatprep.mubr.bf16.mxu0 %v596
      %1246 = vmatmul.mubr.bf16.gmra.mrb[0].mxu0 %v440
      %v1247 = vpop.f32.mrb[0].mxu0
      %v1248 = vadd.f32 0.0, %v1247
      %v1249 = vpop.f32.mrb[0].mxu0
      %v1250 = vpop.f32.mrb[0].mxu0
      %v1251 = vadd.f32 0.0, %v1250
      %v1252 = vpop.f32.mrb[0].mxu0
      %1253 = vmatprep.mubr.bf16.mxu0 %v597
      %1254 = vmatmul.mubr.bf16.gmra.mrb[0].mxu0 %v441
      %v1255 = vpop.f32.mrb[0].mxu0
      %v1256 = vadd.f32 0.0, %v1255
      %v1257 = vpop.f32.mrb[0].mxu0
      %v1258 = vpop.f32.mrb[0].mxu0
      %v1259 = vadd.f32 0.0, %v1258
      %v1260 = vpop.f32.mrb[0].mxu0
      %1261 = vmatprep.mubr.bf16.mxu0 %v598
      %1262 = vmatmul.mubr.bf16.gmra.mrb[0].mxu0 %v442
      %v1263 = vpop.f32.mrb[0].mxu0
      %v1264 = vadd.f32 0.0, %v1263
      %v1265 = vpop.f32.mrb[0].mxu0
      %v1266 = vpop.f32.mrb[0].mxu0
      %v1267 = vadd.f32 0.0, %v1266
      %v1268 = vpop.f32.mrb[0].mxu0
      %1269 = vmatprep.mubr.bf16.mxu0 %v599
      %1270 = vmatmul.mubr.bf16.gmra.mrb[0].mxu0 %v443
      %v1271 = vpop.f32.mrb[0].mxu0
      %v1272 = vadd.f32 0.0, %v1271
      %v1273 = vpop.f32.mrb[0].mxu0
      %v1274 = vpop.f32.mrb[0].mxu0
      %v1275 = vadd.f32 0.0, %v1274
      %v1276 = vpop.f32.mrb[0].mxu0
      %1277 = vdwg.mxu0
      %v1278 = vadd.f32 %v990, %v1216
      %v1279 = vadd.f32 %v993, %v1219
      %v1280 = vadd.f32 %v998, %v1224
      %v1281 = vadd.f32 %v1001, %v1227
      %v1282 = vadd.f32 %v1006, %v1232
      %v1283 = vadd.f32 %v1009, %v1235
      %v1284 = vadd.f32 %v1014, %v1240
      %v1285 = vadd.f32 %v1017, %v1243
      %v1286 = vadd.f32 %v1022, %v1248
      %v1287 = vadd.f32 %v1025, %v1251
      %v1288 = vadd.f32 %v1030, %v1256
      %v1289 = vadd.f32 %v1033, %v1259
      %v1290 = vadd.f32 %v1038, %v1264
      %v1291 = vadd.f32 %v1041, %v1267
      %v1292 = vadd.f32 %v1046, %v1272
      %v1293 = vadd.f32 %v1049, %v1275
      %s1294 = scalar_lea.vmem %s3, 384
      %v1295 = vld [vmem:[%s1294] sm:$0xf]
      %v1296 = vld [vmem:[%s1294 + $0x4] sm:$0xf]
      %v1297 = vld [vmem:[%s1294 + $0x8] sm:$0xf]
      %v1298 = vld [vmem:[%s1294 + $0xc] sm:$0xf]
      %v1299 = vld [vmem:[%s1294 + $0x10] sm:$0xf]
      %v1300 = vld [vmem:[%s1294 + $0x14] sm:$0xf]
      %v1301 = vld [vmem:[%s1294 + $0x18] sm:$0xf]
      %v1302 = vld [vmem:[%s1294 + $0x1c] sm:$0xf]
      %v1303 = vld [vmem:[%s1294 + $0x20] sm:$0xf]
      %v1304 = vld [vmem:[%s1294 + $0x24] sm:$0xf]
      %v1305 = vld [vmem:[%s1294 + $0x28] sm:$0xf]
      %v1306 = vld [vmem:[%s1294 + $0x2c] sm:$0xf]
      %v1307 = vld [vmem:[%s1294 + $0x30] sm:$0xf]
      %v1308 = vld [vmem:[%s1294 + $0x34] sm:$0xf]
      %v1309 = vld [vmem:[%s1294 + $0x38] sm:$0xf]
      %v1310 = vld [vmem:[%s1294 + $0x3c] sm:$0xf]
      %v1311 = vld [vmem:[%s1294 + $0x40] sm:$0xf]
      %v1312 = vld [vmem:[%s1294 + $0x44] sm:$0xf]
      %v1313 = vld [vmem:[%s1294 + $0x48] sm:$0xf]
      %v1314 = vld [vmem:[%s1294 + $0x4c] sm:$0xf]
      %v1315 = vld [vmem:[%s1294 + $0x50] sm:$0xf]
      %v1316 = vld [vmem:[%s1294 + $0x54] sm:$0xf]
      %v1317 = vld [vmem:[%s1294 + $0x58] sm:$0xf]
      %v1318 = vld [vmem:[%s1294 + $0x5c] sm:$0xf]
      %v1319 = vld [vmem:[%s1294 + $0x60] sm:$0xf]
      %v1320 = vld [vmem:[%s1294 + $0x64] sm:$0xf]
      %v1321 = vld [vmem:[%s1294 + $0x68] sm:$0xf]
      %v1322 = vld [vmem:[%s1294 + $0x6c] sm:$0xf]
      %v1323 = vld [vmem:[%s1294 + $0x70] sm:$0xf]
      %v1324 = vld [vmem:[%s1294 + $0x74] sm:$0xf]
      %v1325 = vld [vmem:[%s1294 + $0x78] sm:$0xf]
      %v1326 = vld [vmem:[%s1294 + $0x7c] sm:$0xf]
      %v1359 = vunpack.c.l.b16 %v1295
      %v1360 = vunpack.c.l.b16 %v1296
      %v1361 = vunpack.c.l.b16 %v1297
      %v1362 = vunpack.c.l.b16 %v1298
      %v1363 = vunpack.c.l.b16 %v1299
      %v1364 = vunpack.c.l.b16 %v1300
      %v1365 = vunpack.c.l.b16 %v1301
      %v1366 = vunpack.c.l.b16 %v1302
      %v1367 = vunpack.c.l.b16 %v1303
      %v1368 = vunpack.c.l.b16 %v1304
      %v1369 = vunpack.c.l.b16 %v1305
      %v1370 = vunpack.c.l.b16 %v1306
      %v1371 = vunpack.c.l.b16 %v1307
      %v1372 = vunpack.c.l.b16 %v1308
      %v1373 = vunpack.c.l.b16 %v1309
      %v1374 = vunpack.c.l.b16 %v1310
      %v1375 = vunpack.c.l.b16 %v1311
      %v1376 = vunpack.c.l.b16 %v1312
      %v1377 = vunpack.c.l.b16 %v1313
      %v1378 = vunpack.c.l.b16 %v1314
      %v1379 = vunpack.c.l.b16 %v1315
      %v1380 = vunpack.c.l.b16 %v1316
      %v1381 = vunpack.c.l.b16 %v1317
      %v1382 = vunpack.c.l.b16 %v1318
      %v1383 = vunpack.c.l.b16 %v1319
      %v1384 = vunpack.c.l.b16 %v1320
      %v1385 = vunpack.c.l.b16 %v1321
      %v1386 = vunpack.c.l.b16 %v1322
      %v1387 = vunpack.c.l.b16 %v1323
      %v1388 = vunpack.c.l.b16 %v1324
      %v1389 = vunpack.c.l.b16 %v1325
      %v1390 = vunpack.c.l.b16 %v1326
      %v1391 = vpack.c.b16 %v1360, %v1359
      %v1392 = vpack.c.b16 %v1362, %v1361
      %v1393 = vpack.c.b16 %v1364, %v1363
      %v1394 = vpack.c.b16 %v1366, %v1365
      %v1395 = vpack.c.b16 %v1368, %v1367
      %v1396 = vpack.c.b16 %v1370, %v1369
      %v1397 = vpack.c.b16 %v1372, %v1371
      %v1398 = vpack.c.b16 %v1374, %v1373
      %v1399 = vpack.c.b16 %v1376, %v1375
      %v1400 = vpack.c.b16 %v1378, %v1377
      %v1401 = vpack.c.b16 %v1380, %v1379
      %v1402 = vpack.c.b16 %v1382, %v1381
      %v1403 = vpack.c.b16 %v1384, %v1383
      %v1404 = vpack.c.b16 %v1386, %v1385
      %v1405 = vpack.c.b16 %v1388, %v1387
      %v1406 = vpack.c.b16 %v1390, %v1389
      %1423 = vmatprep.subr.bf16.mxu0 0
      %1424 = vmatpush1.bf16.msra.mxu0 %v1391
      %1425 = vmatprep.subr.bf16.mxu0 0
      %1426 = vmatpush1.bf16.msra.mxu0 %v1392
      %1427 = vmatprep.subr.bf16.mxu0 0
      %1428 = vmatpush1.bf16.msra.mxu0 %v1393
      %1429 = vmatprep.subr.bf16.mxu0 0
      %1430 = vmatpush1.bf16.msra.mxu0 %v1394
      %1431 = vmatprep.subr.bf16.mxu0 0
      %1432 = vmatpush1.bf16.msra.mxu0 %v1395
      %1433 = vmatprep.subr.bf16.mxu0 0
      %1434 = vmatpush1.bf16.msra.mxu0 %v1396
      %1435 = vmatprep.subr.bf16.mxu0 0
      %1436 = vmatpush1.bf16.msra.mxu0 %v1397
      %1437 = vmatprep.subr.bf16.mxu0 0
      %1438 = vmatpush1.bf16.msra.mxu0 %v1398
      %1439 = vmatprep.subr.bf16.mxu0 0
      %1440 = vmatpush1.bf16.msra.mxu0 %v1399
      %1441 = vmatprep.subr.bf16.mxu0 0
      %1442 = vmatpush1.bf16.msra.mxu0 %v1400
      %1443 = vmatprep.subr.bf16.mxu0 0
      %1444 = vmatpush1.bf16.msra.mxu0 %v1401
      %1445 = vmatprep.subr.bf16.mxu0 0
      %1446 = vmatpush1.bf16.msra.mxu0 %v1402
      %1447 = vmatprep.subr.bf16.mxu0 0
      %1448 = vmatpush1.bf16.msra.mxu0 %v1403
      %1449 = vmatprep.subr.bf16.mxu0 0
      %1450 = vmatpush1.bf16.msra.mxu0 %v1404
      %1451 = vmatprep.subr.bf16.mxu0 0
      %1452 = vmatpush1.bf16.msra.mxu0 %v1405
      %1453 = vmatprep.subr.bf16.mxu0 0
      %1454 = vmatpush1.bf16.msra.mxu0 %v1406
      %1455 = vmatprep.mubr.bf16.mxu0 %v437
      %1456 = vmatmul.mubr.bf16.gmra.mrb[0].mxu0 %v540
      %v1457 = vpop.f32.mrb[0].mxu0
      %v1458 = vadd.f32 0.0, %v1457
      %v1459 = vpop.f32.mrb[0].mxu0
      %v1460 = vpop.f32.mrb[0].mxu0
      %v1461 = vadd.f32 0.0, %v1460
      %v1462 = vpop.f32.mrb[0].mxu0
      %1463 = vmatprep.mubr.bf16.mxu0 %v438
      %1464 = vmatmul.mubr.bf16.gmra.mrb[0].mxu0 %v541
      %v1465 = vpop.f32.mrb[0].mxu0
      %v1466 = vadd.f32 0.0, %v1465
      %v1467 = vpop.f32.mrb[0].mxu0
      %v1468 = vpop.f32.mrb[0].mxu0
      %v1469 = vadd.f32 0.0, %v1468
      %v1470 = vpop.f32.mrb[0].mxu0
      %1471 = vmatprep.mubr.bf16.mxu0 %v439
      %1472 = vmatmul.mubr.bf16.gmra.mrb[0].mxu0 %v542
      %v1473 = vpop.f32.mrb[0].mxu0
      %v1474 = vadd.f32 0.0, %v1473
      %v1475 = vpop.f32.mrb[0].mxu0
      %v1476 = vpop.f32.mrb[0].mxu0
      %v1477 = vadd.f32 0.0, %v1476
      %v1478 = vpop.f32.mrb[0].mxu0
      %1479 = vmatprep.mubr.bf16.mxu0 %v440
      %1480 = vmatmul.mubr.bf16.gmra.mrb[0].mxu0 %v543
      %v1481 = vpop.f32.mrb[0].mxu0
      %v1482 = vadd.f32 0.0, %v1481
      %v1483 = vpop.f32.mrb[0].mxu0
      %v1484 = vpop.f32.mrb[0].mxu0
      %v1485 = vadd.f32 0.0, %v1484
      %v1486 = vpop.f32.mrb[0].mxu0
      %1487 = vmatprep.mubr.bf16.mxu0 %v441
      %1488 = vmatmul.mubr.bf16.gmra.mrb[0].mxu0 %v544
      %v1489 = vpop.f32.mrb[0].mxu0
      %v1490 = vadd.f32 0.0, %v1489
      %v1491 = vpop.f32.mrb[0].mxu0
      %v1492 = vpop.f32.mrb[0].mxu0
      %v1493 = vadd.f32 0.0, %v1492
      %v1494 = vpop.f32.mrb[0].mxu0
      %1495 = vmatprep.mubr.bf16.mxu0 %v442
      %1496 = vmatmul.mubr.bf16.gmra.mrb[0].mxu0 %v545
      %v1497 = vpop.f32.mrb[0].mxu0
      %v1498 = vadd.f32 0.0, %v1497
      %v1499 = vpop.f32.mrb[0].mxu0
      %v1500 = vpop.f32.mrb[0].mxu0
      %v1501 = vadd.f32 0.0, %v1500
      %v1502 = vpop.f32.mrb[0].mxu0
      %1503 = vmatprep.mubr.bf16.mxu0 %v443
      %1504 = vmatmul.mubr.bf16.gmra.mrb[0].mxu0 %v546
      %v1505 = vpop.f32.mrb[0].mxu0
      %v1506 = vadd.f32 0.0, %v1505
      %v1507 = vpop.f32.mrb[0].mxu0
      %v1508 = vpop.f32.mrb[0].mxu0
      %v1509 = vadd.f32 0.0, %v1508
      %v1510 = vpop.f32.mrb[0].mxu0
      %1511 = vmatprep.mubr.bf16.mxu0 %v444
      %1512 = vmatmul.mubr.bf16.gmra.mrb[0].mxu0 %v547
      %v1513 = vpop.f32.mrb[0].mxu0
      %v1514 = vadd.f32 0.0, %v1513
      %v1515 = vpop.f32.mrb[0].mxu0
      %v1516 = vpop.f32.mrb[0].mxu0
      %v1517 = vadd.f32 0.0, %v1516
      %v1518 = vpop.f32.mrb[0].mxu0
      %1519 = vdwg.mxu0
      %v1520 = vadd.f32 %v1278, %v1458
      %v1521 = vadd.f32 %v1279, %v1461
      %v1522 = vadd.f32 %v1280, %v1466
      %v1523 = vadd.f32 %v1281, %v1469
      %v1524 = vadd.f32 %v1282, %v1474
      %v1525 = vadd.f32 %v1283, %v1477
      %v1526 = vadd.f32 %v1284, %v1482
      %v1527 = vadd.f32 %v1285, %v1485
      %v1528 = vadd.f32 %v1286, %v1490
      %v1529 = vadd.f32 %v1287, %v1493
      %v1530 = vadd.f32 %v1288, %v1498
      %v1531 = vadd.f32 %v1289, %v1501
      %v1532 = vadd.f32 %v1290, %v1506
      %v1533 = vadd.f32 %v1291, %v1509
      %v1534 = vadd.f32 %v1292, %v1514
      %v1535 = vadd.f32 %v1293, %v1517
      %s1536 = scalar_lea.vmem %s3, 512
      %v1537 = vld [vmem:[%s1536] sm:$0xf]
      %v1538 = vld [vmem:[%s1536 + $0x4] sm:$0xf]
      %v1539 = vld [vmem:[%s1536 + $0x8] sm:$0xf]
      %v1540 = vld [vmem:[%s1536 + $0xc] sm:$0xf]
      %v1541 = vld [vmem:[%s1536 + $0x10] sm:$0xf]
      %v1542 = vld [vmem:[%s1536 + $0x14] sm:$0xf]
      %v1543 = vld [vmem:[%s1536 + $0x18] sm:$0xf]
      %v1544 = vld [vmem:[%s1536 + $0x1c] sm:$0xf]
      %v1545 = vld [vmem:[%s1536 + $0x20] sm:$0xf]
      %v1546 = vld [vmem:[%s1536 + $0x24] sm:$0xf]
      %v1547 = vld [vmem:[%s1536 + $0x28] sm:$0xf]
      %v1548 = vld [vmem:[%s1536 + $0x2c] sm:$0xf]
      %v1549 = vld [vmem:[%s1536 + $0x30] sm:$0xf]
      %v1550 = vld [vmem:[%s1536 + $0x34] sm:$0xf]
      %v1551 = vld [vmem:[%s1536 + $0x38] sm:$0xf]
      %v1552 = vld [vmem:[%s1536 + $0x3c] sm:$0xf]
      %v1569 = vunpack.c.l.b16 %v1537
      %v1570 = vunpack.c.l.b16 %v1538
      %v1571 = vunpack.c.l.b16 %v1539
      %v1572 = vunpack.c.l.b16 %v1540
      %v1573 = vunpack.c.l.b16 %v1541
      %v1574 = vunpack.c.l.b16 %v1542
      %v1575 = vunpack.c.l.b16 %v1543
      %v1576 = vunpack.c.l.b16 %v1544
      %v1577 = vunpack.c.l.b16 %v1545
      %v1578 = vunpack.c.l.b16 %v1546
      %v1579 = vunpack.c.l.b16 %v1547
      %v1580 = vunpack.c.l.b16 %v1548
      %v1581 = vunpack.c.l.b16 %v1549
      %v1582 = vunpack.c.l.b16 %v1550
      %v1583 = vunpack.c.l.b16 %v1551
      %v1584 = vunpack.c.l.b16 %v1552
      %v1585 = vpack.c.b16 %v1570, %v1569
      %v1586 = vpack.c.b16 %v1572, %v1571
      %v1587 = vpack.c.b16 %v1574, %v1573
      %v1588 = vpack.c.b16 %v1576, %v1575
      %v1589 = vpack.c.b16 %v1578, %v1577
      %v1590 = vpack.c.b16 %v1580, %v1579
      %v1591 = vpack.c.b16 %v1582, %v1581
      %v1592 = vpack.c.b16 %v1584, %v1583
      %1601 = vmatprep.subr.bf16.mxu0 0
      %1602 = vmatpush1.bf16.msra.mxu0 %v1585
      %1603 = vmatprep.subr.bf16.mxu0 0
      %1604 = vmatpush1.bf16.msra.mxu0 %v1586
      %1605 = vmatprep.subr.bf16.mxu0 0
      %1606 = vmatpush1.bf16.msra.mxu0 %v1587
      %1607 = vmatprep.subr.bf16.mxu0 0
      %1608 = vmatpush1.bf16.msra.mxu0 %v1588
      %1609 = vmatprep.subr.bf16.mxu0 0
      %1610 = vmatpush1.bf16.msra.mxu0 %v1589
      %1611 = vmatprep.subr.bf16.mxu0 0
      %1612 = vmatpush1.bf16.msra.mxu0 %v1590
      %1613 = vmatprep.subr.bf16.mxu0 0
      %1614 = vmatpush1.bf16.msra.mxu0 %v1591
      %1615 = vmatprep.subr.bf16.mxu0 0
      %1616 = vmatpush1.bf16.msra.mxu0 %v1592
      %1617 = vmatprep.subr.bf16.mxu0 0
      %1618 = vmatpush1.bf16.msra.mxu0 0
      %1619 = vmatprep.subr.bf16.mxu0 0
      %1620 = vmatpush1.bf16.msra.mxu0 0
      %1621 = vmatprep.subr.bf16.mxu0 0
      %1622 = vmatpush1.bf16.msra.mxu0 0
      %1623 = vmatprep.subr.bf16.mxu0 0
      %1624 = vmatpush1.bf16.msra.mxu0 0
      %1625 = vmatprep.subr.bf16.mxu0 0
      %1626 = vmatpush1.bf16.msra.mxu0 0
      %1627 = vmatprep.subr.bf16.mxu0 0
      %1628 = vmatpush1.bf16.msra.mxu0 0
      %1629 = vmatprep.subr.bf16.mxu0 0
      %1630 = vmatpush1.bf16.msra.mxu0 0
      %1631 = vmatprep.subr.bf16.mxu0 0
      %1632 = vmatpush1.bf16.msra.mxu0 0
      %1633 = vmatprep.mubr.bf16.mxu0 0
      %1634 = vmatmul.mubr.bf16.gmra.mrb[0].mxu0 %v593
      %v1635 = vpop.f32.mrb[0].mxu0
      %v1636 = vadd.f32 0.0, %v1635
      %v1637 = vpop.f32.mrb[0].mxu0
      %v1638 = vpop.f32.mrb[0].mxu0
      %v1639 = vadd.f32 0.0, %v1638
      %v1640 = vpop.f32.mrb[0].mxu0
      %1641 = vmatprep.mubr.bf16.mxu0 0
      %1642 = vmatmul.mubr.bf16.gmra.mrb[0].mxu0 %v594
      %v1643 = vpop.f32.mrb[0].mxu0
      %v1644 = vadd.f32 0.0, %v1643
      %v1645 = vpop.f32.mrb[0].mxu0
      %v1646 = vpop.f32.mrb[0].mxu0
      %v1647 = vadd.f32 0.0, %v1646
      %v1648 = vpop.f32.mrb[0].mxu0
      %1649 = vmatprep.mubr.bf16.mxu0 0
      %1650 = vmatmul.mubr.bf16.gmra.mrb[0].mxu0 %v595
      %v1651 = vpop.f32.mrb[0].mxu0
      %v1652 = vadd.f32 0.0, %v1651
      %v1653 = vpop.f32.mrb[0].mxu0
      %v1654 = vpop.f32.mrb[0].mxu0
      %v1655 = vadd.f32 0.0, %v1654
      %v1656 = vpop.f32.mrb[0].mxu0
      %1657 = vmatprep.mubr.bf16.mxu0 0
      %1658 = vmatmul.mubr.bf16.gmra.mrb[0].mxu0 %v596
      %v1659 = vpop.f32.mrb[0].mxu0
      %v1660 = vadd.f32 0.0, %v1659
      %v1661 = vpop.f32.mrb[0].mxu0
      %v1662 = vpop.f32.mrb[0].mxu0
      %v1663 = vadd.f32 0.0, %v1662
      %v1664 = vpop.f32.mrb[0].mxu0
      %1665 = vmatprep.mubr.bf16.mxu0 0
      %1666 = vmatmul.mubr.bf16.gmra.mrb[0].mxu0 %v597
      %v1667 = vpop.f32.mrb[0].mxu0
      %v1668 = vadd.f32 0.0, %v1667
      %v1669 = vpop.f32.mrb[0].mxu0
      %v1670 = vpop.f32.mrb[0].mxu0
      %v1671 = vadd.f32 0.0, %v1670
      %v1672 = vpop.f32.mrb[0].mxu0
      %1673 = vmatprep.mubr.bf16.mxu0 0
      %1674 = vmatmul.mubr.bf16.gmra.mrb[0].mxu0 %v598
      %v1675 = vpop.f32.mrb[0].mxu0
      %v1676 = vadd.f32 0.0, %v1675
      %v1677 = vpop.f32.mrb[0].mxu0
      %v1678 = vpop.f32.mrb[0].mxu0
      %v1679 = vadd.f32 0.0, %v1678
      %v1680 = vpop.f32.mrb[0].mxu0
      %1681 = vmatprep.mubr.bf16.mxu0 0
      %1682 = vmatmul.mubr.bf16.gmra.mrb[0].mxu0 %v599
      %v1683 = vpop.f32.mrb[0].mxu0
      %v1684 = vadd.f32 0.0, %v1683
      %v1685 = vpop.f32.mrb[0].mxu0
      %v1686 = vpop.f32.mrb[0].mxu0
      %v1687 = vadd.f32 0.0, %v1686
      %v1688 = vpop.f32.mrb[0].mxu0
      %1689 = vmatprep.mubr.bf16.mxu0 0
      %1690 = vmatmul.mubr.bf16.gmra.mrb[0].mxu0 %v600
      %v1691 = vpop.f32.mrb[0].mxu0
      %v1692 = vadd.f32 0.0, %v1691
      %v1693 = vpop.f32.mrb[0].mxu0
      %v1694 = vpop.f32.mrb[0].mxu0
      %v1695 = vadd.f32 0.0, %v1694
      %v1696 = vpop.f32.mrb[0].mxu0
      %1697 = vdwg.mxu0
      %v1698 = vadd.f32 %v1520, %v1636
      %v1699 = vadd.f32 %v1521, %v1639
      %v1700 = vadd.f32 %v1522, %v1644
      %v1701 = vadd.f32 %v1523, %v1647
      %v1702 = vadd.f32 %v1524, %v1652
      %v1703 = vadd.f32 %v1525, %v1655
      %v1704 = vadd.f32 %v1526, %v1660
      %v1705 = vadd.f32 %v1527, %v1663
      %v1706 = vadd.f32 %v1528, %v1668
      %v1707 = vadd.f32 %v1529, %v1671
      %v1708 = vadd.f32 %v1530, %v1676
      %v1709 = vadd.f32 %v1531, %v1679
      %v1710 = vadd.f32 %v1532, %v1684
      %v1711 = vadd.f32 %v1533, %v1687
      %v1712 = vadd.f32 %v1534, %v1692
      %v1713 = vadd.f32 %v1535, %v1695
      %v1714 = vpack.c.bf16 %v1699, %v1698
      %v1715 = vpack.c.bf16 %v1701, %v1700
      %v1716 = vpack.c.bf16 %v1703, %v1702
      %v1717 = vpack.c.bf16 %v1705, %v1704
      %v1718 = vpack.c.bf16 %v1707, %v1706
      %v1719 = vpack.c.bf16 %v1709, %v1708
      %v1720 = vpack.c.bf16 %v1711, %v1710
      %v1721 = vpack.c.bf16 %v1713, %v1712
      %v1730 = vunpack.c.l.b16 %v1714
      %v1731 = vunpack.c.h.b16 %v1714
      %v1732 = vunpack.c.l.b16 %v1715
      %v1733 = vunpack.c.h.b16 %v1715
      %v1734 = vunpack.c.l.b16 %v1716
      %v1735 = vunpack.c.h.b16 %v1716
      %v1736 = vunpack.c.l.b16 %v1717
      %v1737 = vunpack.c.h.b16 %v1717
      %v1738 = vunpack.c.l.b16 %v1718
      %v1739 = vunpack.c.h.b16 %v1718
      %v1740 = vunpack.c.l.b16 %v1719
      %v1741 = vunpack.c.h.b16 %v1719
      %v1742 = vunpack.c.l.b16 %v1720
      %v1743 = vunpack.c.h.b16 %v1720
      %v1744 = vunpack.c.l.b16 %v1721
      %v1745 = vunpack.c.h.b16 %v1721
      %v1746 = vpack.c.b16 %v1730, %v1730
      %v1747 = vpack.c.b16 %v1731, %v1731
      %v1748 = vpack.c.b16 %v1732, %v1732
      %v1749 = vpack.c.b16 %v1733, %v1733
      %v1750 = vpack.c.b16 %v1734, %v1734
      %v1751 = vpack.c.b16 %v1735, %v1735
      %v1752 = vpack.c.b16 %v1736, %v1736
      %v1753 = vpack.c.b16 %v1737, %v1737
      %v1754 = vpack.c.b16 %v1738, %v1738
      %v1755 = vpack.c.b16 %v1739, %v1739
      %v1756 = vpack.c.b16 %v1740, %v1740
      %v1757 = vpack.c.b16 %v1741, %v1741
      %v1758 = vpack.c.b16 %v1742, %v1742
      %v1759 = vpack.c.b16 %v1743, %v1743
      %v1760 = vpack.c.b16 %v1744, %v1744
      %v1761 = vpack.c.b16 %v1745, %v1745
      %1778 = vst [vmem:[%s404] sm:$0xf] %v1746
      %1779 = vst [vmem:[%s404 + $0x4] sm:$0xf] %v1747
      %1780 = vst [vmem:[%s404 + $0x8] sm:$0xf] %v1748
      %1781 = vst [vmem:[%s404 + $0xc] sm:$0xf] %v1749
      %1782 = vst [vmem:[%s404 + $0x10] sm:$0xf] %v1750
      %1783 = vst [vmem:[%s404 + $0x14] sm:$0xf] %v1751
      %1784 = vst [vmem:[%s404 + $0x18] sm:$0xf] %v1752
      %1785 = vst [vmem:[%s404 + $0x1c] sm:$0xf] %v1753
      %1786 = vst [vmem:[%s404 + $0x20] sm:$0xf] %v1754
      %1787 = vst [vmem:[%s404 + $0x24] sm:$0xf] %v1755
      %1788 = vst [vmem:[%s404 + $0x28] sm:$0xf] %v1756
      %1789 = vst [vmem:[%s404 + $0x2c] sm:$0xf] %v1757
      %1790 = vst [vmem:[%s404 + $0x30] sm:$0xf] %v1758
      %1791 = vst [vmem:[%s404 + $0x34] sm:$0xf] %v1759
      %1792 = vst [vmem:[%s404 + $0x38] sm:$0xf] %v1760
      %1793 = vst [vmem:[%s404 + $0x3c] sm:$0xf] %v1761
      %v1794 = vadd.f32 %v1698, %v1699
      %v1795 = vadd.f32 %v1794, %v1700
      %v1796 = vadd.f32 %v1795, %v1701
      %v1797 = vadd.f32 %v1796, %v1702
      %v1798 = vadd.f32 %v1797, %v1703
      %v1799 = vadd.f32 %v1798, %v1704
      %v1800 = vadd.f32 %v1799, %v1705
      %v1801 = vadd.f32 %v1800, %v1706
      %v1802 = vadd.f32 %v1801, %v1707
      %v1803 = vadd.f32 %v1802, %v1708
      %v1804 = vadd.f32 %v1803, %v1709
      %v1805 = vadd.f32 %v1804, %v1710
      %v1806 = vadd.f32 %v1805, %v1711
      %v1807 = vadd.f32 %v1806, %v1712
      %v1808 = vadd.f32 %v1807, %v1713
      %v1809 = vrot.slane %v1808, 4
      %v1810 = vadd.f32 %v1808, %v1809
      %v1811 = vrot.slane %v1810, 2
      %v1812 = vadd.f32 %v1810, %v1811
      %v1813 = vrot.slane %v1812, 1
      %v1814 = vadd.f32 %v1812, %v1813
      %v1815 = vmul.f32 %v1698, %v1698
      %v1816 = vmul.f32 %v1699, %v1699
      %v1817 = vmul.f32 %v1700, %v1700
      %v1818 = vmul.f32 %v1701, %v1701
      %v1819 = vmul.f32 %v1702, %v1702
      %v1820 = vmul.f32 %v1703, %v1703
      %v1821 = vmul.f32 %v1704, %v1704
      %v1822 = vmul.f32 %v1705, %v1705
      %v1823 = vmul.f32 %v1706, %v1706
      %v1824 = vmul.f32 %v1707, %v1707
      %v1825 = vmul.f32 %v1708, %v1708
      %v1826 = vmul.f32 %v1709, %v1709
      %v1827 = vmul.f32 %v1710, %v1710
      %v1828 = vmul.f32 %v1711, %v1711
      %v1829 = vmul.f32 %v1712, %v1712
      %v1830 = vmul.f32 %v1713, %v1713
      %v1831 = vadd.f32 %v1815, %v1816
      %v1832 = vadd.f32 %v1831, %v1817
      %v1833 = vadd.f32 %v1832, %v1818
      %v1834 = vadd.f32 %v1833, %v1819
      %v1835 = vadd.f32 %v1834, %v1820
      %v1836 = vadd.f32 %v1835, %v1821
      %v1837 = vadd.f32 %v1836, %v1822
      %v1838 = vadd.f32 %v1837, %v1823
      %v1839 = vadd.f32 %v1838, %v1824
      %v1840 = vadd.f32 %v1839, %v1825
      %v1841 = vadd.f32 %v1840, %v1826
      %v1842 = vadd.f32 %v1841, %v1827
      %v1843 = vadd.f32 %v1842, %v1828
      %v1844 = vadd.f32 %v1843, %v1829
      %v1845 = vadd.f32 %v1844, %v1830
      %v1846 = vrot.slane %v1845, 4
      %v1847 = vadd.f32 %v1845, %v1846
      %v1848 = vrot.slane %v1847, 2
      %v1849 = vadd.f32 %v1847, %v1848
      %v1850 = vrot.slane %v1849, 1
      %v1851 = vadd.f32 %v1849, %v1850
      %vm1852 = vcmask 1040384
      %v1853 = vsel %vm1852, %v1814, %v1851
      %1854 = vst [vmem:[%s411] sm:$0x3] %v1853
      %s1855 = smul.u32 8, %s22
      %p1856 = scmp.lt.s32.totalorder %s21, 1
      %s1857 = scalar_select %p1856, %s21, 1
      %p1858 = scmp.lt.s32.totalorder %s1855, 15
      %s1859 = scalar_select %p1858, %s1855, 15
      %s1860 = smul.addr %s1859, 2
      %s1861 = smul.addr %s1857, 32
      %s1862 = sadd.s32 %s1860, %s1861
      %s1863 = smul.addr %s1862, 4
      %s1864 = scalar_lea.vmem %s4, %s1863
      %s1865 = smul.u32 %s21, 2
      %s1866 = sadd.s32 %s1865, %s22
      %p1867 = scmp.lt.s32.totalorder %s1866, 3
      %s1868 = scalar_select %p1867, %s1866, 3
      %s1869 = smul.addr %s1868, 2
      %s1870 = scalar_lea.vmem %s5, %s1869
      // Predicated region
      $region37: #{resnet_block_forward.3} parent=35 // pred_check
        %p1871 = pneg %p170
      $region38: #{resnet_block_forward.3} parent=35 // pred_check_branch
        %1873 = sbr.rel (%p1871) target = $region40
      $region39: #{resnet_block_forward.3} parent=35 // pred_region
        %s1874 = smul.u32 8, %s22
      $region40: #{resnet_block_forward.3} parent=35 // pred_fallthru
        _
      // Predicated region
      $region41: #{resnet_block_forward.3} parent=35 // pred_check
        %p1875 = pneg %p200
      $region42: #{resnet_block_forward.3} parent=35 // pred_check_branch
        %1877 = sbr.rel (%p1875) target = $region44
      $region43: #{resnet_block_forward.3} parent=35 // pred_region
        %s1878 = smul.u32 %s21, 2
        %s1879 = sadd.s32 %s1878, %s22
      $region44: #{resnet_block_forward.3} parent=35 // pred_fallthru
        _
    $region36: #{resnet_block_forward.3} parent=5 // pred_fallthru
      _
    %p1880 = scmp.le.s32.totalorder 2, %s12
    // Predicated region
    $region45: #{resnet_block_forward.3} parent=5 // pred_check
      %p1881 = pneg %p1880
    $region46: #{resnet_block_forward.3} parent=5 // pred_check_branch
      %1883 = sbr.rel (%p1881) target = $region48
    $region47: #{resnet_block_forward.3} parent=5 // pred_region
      %s1884 = ssub.s32 %s12, 2
      // Predicated region
      $region49: #{resnet_block_forward.3} parent=47 // pred_check
        %p1885 = pneg %p176
      $region50: #{resnet_block_forward.3} parent=47 // pred_check_branch
        %1887 = sbr.rel (%p1885) target = $region52
      $region51: #{resnet_block_forward.3} parent=47 // pred_region
        %s1888 = smul.u32 8, %s24
        %p1889 = scmp.lt.s32.totalorder %s23, 1
        %s1890 = scalar_select %p1889, %s23, 1
        %p1891 = scmp.lt.s32.totalorder %s1888, 15
        %s1892 = scalar_select %p1891, %s1888, 15
        %s1893 = smul.addr %s1892, 2
        %s1894 = smul.addr %s1890, 32
        %s1895 = sadd.s32 %s1893, %s1894
        %s1896 = smul.addr %s1895, 4
        %s1897 = scalar_lea.vmem %s4, %s1896
      $region52: #{resnet_block_forward.3} parent=47 // pred_fallthru
        _
      // Predicated region
      $region53: #{resnet_block_forward.3} parent=47 // pred_check
        %p1898 = pneg %p206
      $region54: #{resnet_block_forward.3} parent=47 // pred_check_branch
        %1900 = sbr.rel (%p1898) target = $region56
      $region55: #{resnet_block_forward.3} parent=47 // pred_region
        %s1901 = smul.u32 %s23, 2
        %s1902 = sadd.s32 %s1901, %s24
        %p1903 = scmp.lt.s32.totalorder %s1902, 3
        %s1904 = scalar_select %p1903, %s1902, 3
        %s1905 = smul.addr %s1904, 2
        %s1906 = scalar_lea.vmem %s5, %s1905
      $region56: #{resnet_block_forward.3} parent=47 // pred_fallthru
        _
    $region48: #{resnet_block_forward.3} parent=5 // pred_fallthru
      _
  $region6: #{resnet_block_forward.3} parent=0 // loop_footer
    %s16 = sadd.s32 1, %s12
  $region7: #{resnet_block_forward.3} parent=0 // loop_footer_branch
    %11 = sbr.rel target = $region3
  $region8: #{resnet_block_forward.3} parent=0 // loop_exit
    _

</llo_original>
